<compile_context>
chip_gen: v7x
topology: tpu7x:2x2x1
jax: 0.10.0
libtpu: 0.0.40
codegen_flags: <defaults>
</compile_context>

<pallas_src>
import functools

import jax
import jax.numpy as jnp
from jax import lax
from jax.experimental import pallas as pl
from jax.experimental.pallas import tpu as pltpu


def _bert_text_embeddings_kernel(ids_ref, word_hbm, pos_ref, g_ref, b_ref,
                                 o_ref, wbuf, sems, *, tile_s, eps):
    # ids_ref : SMEM (B, S) int32            (scalar-prefetched input_ids)
    # word_hbm: HBM  (V, H)                  (full word-embedding table)
    # pos_ref : VMEM (tile_s, H)             (position rows for this seq tile)
    # g_ref/b_ref: VMEM (1, H)               (LayerNorm gamma / beta)
    # o_ref   : VMEM (tile_s, H)
    # wbuf    : VMEM (2, tile_s, H) scratch  (double-buffered gathered rows)
    # sems    : DMA semaphores (2,)          (one per slot, shared by the rows)
    s = pl.program_id(0)          # seq-tile index (outer, "parallel")
    b = pl.program_id(1)          # batch index    (inner, "arbitrary")
    n_b = pl.num_programs(1)
    base = s * tile_s
    slot = b & 1

    def start_gather(batch_idx, dst_slot):
        # Issue tile_s per-row HBM->VMEM copies; all land on sems[dst_slot].
        for r in range(tile_s):
            tok = ids_ref[batch_idx, base + r]
            pltpu.make_async_copy(
                word_hbm.at[pl.ds(tok, 1), :],
                wbuf.at[dst_slot, pl.ds(r, 1), :],
                sems.at[dst_slot],
            ).start()

    # Cold start at the beginning of each batch sweep: the current slot's
    # gather was not issued by a previous step.
    @pl.when(b == 0)
    def _():
        start_gather(0, 0)        # at b == 0, slot == 0

    # Prefetch the next batch row's gather into the other slot so its DMAs
    # overlap this step's LayerNorm / pos DMA / output writeback.
    @pl.when(b + 1 < n_b)
    def _():
        start_gather(b + 1, 1 - slot)

    # Read the current step's token ids from SMEM *before* the waits, then
    # wait on descriptors identical to the ones that were started.
    toks = [ids_ref[b, base + r] for r in range(tile_s)]
    for r in range(tile_s):
        pltpu.make_async_copy(
            word_hbm.at[pl.ds(toks[r], 1), :],
            wbuf.at[slot, pl.ds(r, 1), :],
            sems.at[slot],
        ).wait()

    y = wbuf[slot].astype(jnp.float32) + pos_ref[...].astype(jnp.float32)

    # TF-style LayerNorm (eps inside the sqrt), centered two-pass variance to
    # match the torch reference numerics; rsqrt goes to the EUP slot.
    mean = jnp.mean(y, axis=-1, keepdims=True)
    yc = y - mean
    var = jnp.mean(yc * yc, axis=-1, keepdims=True)
    yn = yc * lax.rsqrt(var + eps)

    out = g_ref[...].astype(jnp.float32) * yn + b_ref[...].astype(jnp.float32)
    # Dropout: identity in eval mode.
    o_ref[...] = out.astype(o_ref.dtype)


def _pick_row_tile(S, max_tile=256):
    """Largest sublane-friendly (multiple of 8) divisor of S that is <= max_tile."""
    assert S % 8 == 0, "sequence length must be a multiple of 8"
    best = 8
    t = 8
    while t <= min(S, max_tile):
        if S % t == 0:
            best = t
        t += 8
    return best


def bert_text_embeddings(input_ids, word_table, pos_table, gamma, beta,
                         *, eps=1e-12, tile_s=None):
    """input_ids: [B, S] int; word_table: [V, H]; pos_table: [P, H] -> [B, S, H]."""
    B, S = input_ids.shape
    V, H = word_table.shape
    P = pos_table.shape[0]
    assert S <= P, "sequence length exceeds max_position_embeddings"

    if tile_s is None:
        tile_s = _pick_row_tile(S)
    assert S % tile_s == 0
    n_s = S // tile_s
    M = B * S

    ids = input_ids.astype(jnp.int32)
    g2 = gamma.reshape(1, H)
    b2 = beta.reshape(1, H)

    kernel = functools.partial(_bert_text_embeddings_kernel,
                               tile_s=tile_s, eps=eps)

    itemsize = jnp.dtype(word_table.dtype).itemsize
    cost = pl.CostEstimate(
        flops=10 * M * H,                 # add + LN epilogue (rough)
        transcendentals=M,                # one rsqrt per row
        bytes_accessed=M * 4 + 3 * M * H * itemsize,
    )

    # Output dtype follows the embedding-table dtype (f32 tables -> f32 out,
    # matching the PyTorch module).
    out = pl.pallas_call(
        kernel,
        out_shape=jax.ShapeDtypeStruct((M, H), word_table.dtype),
        grid_spec=pltpu.PrefetchScalarGridSpec(
            num_scalar_prefetch=1,
            # Seq-tile axis outer ("parallel" -> megacore-shardable), batch
            # axis innermost ("arbitrary" -> never split across cores, so the
            # b==0 cold-start / prefetch chain is always intact, and the pos
            # tile below is re-used across the whole inner sweep).
            grid=(n_s, B),
            in_specs=[
                # Word table stays in HBM; rows are DMA-gathered in the kernel.
                pl.BlockSpec(memory_space=pl.ANY),
                # Position rows for this seq tile; block index is invariant
                # over the inner batch axis -> fetched once per seq tile.
                pl.BlockSpec((tile_s, H), lambda s, b, ids: (s, 0)),
                # LayerNorm gamma / beta (grid-invariant, tiny).
                pl.BlockSpec((1, H), lambda s, b, ids: (0, 0)),
                pl.BlockSpec((1, H), lambda s, b, ids: (0, 0)),
            ],
            out_specs=pl.BlockSpec(
                (tile_s, H), lambda s, b, ids: (b * n_s + s, 0)),
            scratch_shapes=[
                pltpu.VMEM((2, tile_s, H), word_table.dtype),  # gather dbl-buf
                pltpu.SemaphoreType.DMA((2,)),                 # one sem per slot
            ],
        ),
        compiler_params=pltpu.CompilerParams(
            dimension_semantics=("parallel", "arbitrary")),
        cost_estimate=cost,
    )(ids, word_table, pos_table, g2, b2)

    return out.reshape(B, S, H)


def _reference(input_ids, word_table, pos_table, gamma, beta, eps=1e-12):
    B, S = input_ids.shape
    we = jnp.take(word_table, input_ids, axis=0)                # [B, S, H]
    pe = jnp.take(pos_table, jnp.arange(S), axis=0)[None]       # [1, S, H]
    x = (we + pe).astype(jnp.float32)
    u = x.mean(-1, keepdims=True)
    s = ((x - u) ** 2).mean(-1, keepdims=True)
    xn = (x - u) / jnp.sqrt(s + eps)
    return gamma * xn + beta                                     # dropout = id (eval)


if __name__ == "__main__":
    # Small config consistent with BertTextEmbeddings.
    # H kept at 128 so the last dim is lane-dense (unmasked vst).
    B, S, H = 2, 32, 128
    V, P = 1000, 64   # vocab_size, max_position_embeddings

    key = jax.random.PRNGKey(0)
    k1, k2, k3 = jax.random.split(key, 3)

    word_table = jax.random.normal(k1, (V, H), dtype=jnp.float32) * 0.02
    pos_table = jax.random.normal(k2, (P, H), dtype=jnp.float32) * 0.02
    # padding_idx=0 -> row 0 zero-initialized, as in PyTorch nn.Embedding.
    word_table = word_table.at[0].set(0.0)
    pos_table = pos_table.at[0].set(0.0)

    gamma = jnp.ones((H,), dtype=jnp.float32)   # LayerNorm weight
    beta = jnp.zeros((H,), dtype=jnp.float32)   # LayerNorm bias

    input_ids = jax.random.randint(k3, (B, S), 0, V, dtype=jnp.int32)
    input_ids = input_ids.at[0, :4].set(0)      # exercise the padding id

    out = bert_text_embeddings(input_ids, word_table, pos_table, gamma, beta)
    out = jax.block_until_ready(out)

    ref = _reference(input_ids, word_table, pos_table, gamma, beta)
    assert out.shape == (B, S, H)
    assert jnp.allclose(out, ref, atol=1e-4, rtol=1e-4), "mismatch vs reference"

    print("KERNEL_OK")
</pallas_src>

<mosaic_0001>
module attributes {stable_mosaic.version = 11 : i64} {
  func.func @_bert_text_embeddings_kernel(%arg0: i32, %arg1: i32, %arg2: memref<2x32xi32, #tpu.memory_space<smem>>, %arg3: memref<1000x128xf32, #tpu.memory_space<any>>, %arg4: memref<32x128xf32, #tpu.memory_space<vmem>>, %arg5: memref<1x128xf32, #tpu.memory_space<vmem>>, %arg6: memref<1x128xf32, #tpu.memory_space<vmem>>, %arg7: memref<32x128xf32, #tpu.memory_space<vmem>>, %arg8: memref<2x32x128xf32, #tpu.memory_space<vmem>>, %arg9: memref<2x!tpu.dma_semaphore, #tpu.memory_space<semaphore_mem>>) attributes {dimension_semantics = [#tpu.dimension_semantics<parallel>, #tpu.dimension_semantics<arbitrary>], iteration_bounds = array<i64: 1, 2>, scalar_prefetch = 1 : i64, scratch_operands = 2 : i64, tpu.core_type = #tpu.core_type<tc>, window_params = [{}, {transform_indices = @transform_1, window_bounds = array<i64: 32, 128>}, {pipeline_mode = #tpu.pipeline_mode<synchronous>, transform_indices = @transform_2, window_bounds = array<i64: 1, 128>}, {pipeline_mode = #tpu.pipeline_mode<synchronous>, transform_indices = @transform_3, window_bounds = array<i64: 1, 128>}, {transform_indices = @transform_4, window_bounds = array<i64: 32, 128>}]} {
    %c32_i32 = arith.constant 32 : i32
    %0 = arith.muli %arg0, %c32_i32 : i32
    %c1_i32 = arith.constant 1 : i32
    %1 = arith.andi %arg1, %c1_i32 : i32
    %c0_i32 = arith.constant 0 : i32
    %2 = arith.cmpi eq, %arg1, %c0_i32 : i32
    %3 = arith.extui %2 : i1 to i32
    %c0_i32_0 = arith.constant 0 : i32
    %4 = arith.cmpi ne, %3, %c0_i32_0 : i32
    scf.if %4 {
      %c0_i32_115 = arith.constant 0 : i32
      %325 = arith.addi %0, %c0_i32_115 : i32
      %c0_116 = arith.constant 0 : index
      %326 = arith.index_cast %325 : i32 to index
      %327 = memref.load %arg2[%c0_116, %326] : memref<2x32xi32, #tpu.memory_space<smem>>
      %c0_i32_117 = arith.constant 0 : i32
      %c0_i32_118 = arith.constant 0 : i32
      %c0_i32_119 = arith.constant 0 : i32
      %328 = tpu.memref_slice %arg3[%327, %c0_i32_119] : memref<1000x128xf32, #tpu.memory_space<any>> -> memref<1x128xf32, #tpu.memory_space<any>>
      %c0_i32_120 = arith.constant 0 : i32
      %c0_i32_121 = arith.constant 0 : i32
      %329 = tpu.memref_slice %arg8[%c0_i32_117, %c0_i32_120, %c0_i32_121] : memref<2x32x128xf32, #tpu.memory_space<vmem>> -> memref<1x1x128xf32, #tpu.memory_space<vmem>>
      %330 = tpu.memref_squeeze %329 : memref<1x1x128xf32, #tpu.memory_space<vmem>> -> memref<1x128xf32, #tpu.memory_space<vmem>>
      %331 = tpu.memref_slice %arg9[%c0_i32_118] : memref<2x!tpu.dma_semaphore, #tpu.memory_space<semaphore_mem>> -> memref<1x!tpu.dma_semaphore, #tpu.memory_space<semaphore_mem>>
      %332 = tpu.memref_squeeze %331 : memref<1x!tpu.dma_semaphore, #tpu.memory_space<semaphore_mem>> -> memref<!tpu.dma_semaphore, #tpu.memory_space<semaphore_mem>>
      tpu.enqueue_dma source(%328 : memref<1x128xf32, #tpu.memory_space<any>>) target(%330 : memref<1x128xf32, #tpu.memory_space<vmem>>) target_semaphore(%332 : memref<!tpu.dma_semaphore, #tpu.memory_space<semaphore_mem>>)
      %c1_i32_122 = arith.constant 1 : i32
      %333 = arith.addi %0, %c1_i32_122 : i32
      %c0_123 = arith.constant 0 : index
      %334 = arith.index_cast %333 : i32 to index
      %335 = memref.load %arg2[%c0_123, %334] : memref<2x32xi32, #tpu.memory_space<smem>>
      %c0_i32_124 = arith.constant 0 : i32
      %c0_i32_125 = arith.constant 0 : i32
      %c0_i32_126 = arith.constant 0 : i32
      %336 = tpu.memref_slice %arg3[%335, %c0_i32_126] : memref<1000x128xf32, #tpu.memory_space<any>> -> memref<1x128xf32, #tpu.memory_space<any>>
      %c1_i32_127 = arith.constant 1 : i32
      %c0_i32_128 = arith.constant 0 : i32
      %337 = tpu.memref_slice %arg8[%c0_i32_124, %c1_i32_127, %c0_i32_128] : memref<2x32x128xf32, #tpu.memory_space<vmem>> -> memref<1x1x128xf32, #tpu.memory_space<vmem>>
      %338 = tpu.memref_squeeze %337 : memref<1x1x128xf32, #tpu.memory_space<vmem>> -> memref<1x128xf32, #tpu.memory_space<vmem>>
      %339 = tpu.memref_slice %arg9[%c0_i32_125] : memref<2x!tpu.dma_semaphore, #tpu.memory_space<semaphore_mem>> -> memref<1x!tpu.dma_semaphore, #tpu.memory_space<semaphore_mem>>
      %340 = tpu.memref_squeeze %339 : memref<1x!tpu.dma_semaphore, #tpu.memory_space<semaphore_mem>> -> memref<!tpu.dma_semaphore, #tpu.memory_space<semaphore_mem>>
      tpu.enqueue_dma source(%336 : memref<1x128xf32, #tpu.memory_space<any>>) target(%338 : memref<1x128xf32, #tpu.memory_space<vmem>>) target_semaphore(%340 : memref<!tpu.dma_semaphore, #tpu.memory_space<semaphore_mem>>)
      %c2_i32_129 = arith.constant 2 : i32
      %341 = arith.addi %0, %c2_i32_129 : i32
      %c0_130 = arith.constant 0 : index
      %342 = arith.index_cast %341 : i32 to index
      %343 = memref.load %arg2[%c0_130, %342] : memref<2x32xi32, #tpu.memory_space<smem>>
      %c0_i32_131 = arith.constant 0 : i32
      %c0_i32_132 = arith.constant 0 : i32
      %c0_i32_133 = arith.constant 0 : i32
      %344 = tpu.memref_slice %arg3[%343, %c0_i32_133] : memref<1000x128xf32, #tpu.memory_space<any>> -> memref<1x128xf32, #tpu.memory_space<any>>
      %c2_i32_134 = arith.constant 2 : i32
      %c0_i32_135 = arith.constant 0 : i32
      %345 = tpu.memref_slice %arg8[%c0_i32_131, %c2_i32_134, %c0_i32_135] : memref<2x32x128xf32, #tpu.memory_space<vmem>> -> memref<1x1x128xf32, #tpu.memory_space<vmem>>
      %346 = tpu.memref_squeeze %345 : memref<1x1x128xf32, #tpu.memory_space<vmem>> -> memref<1x128xf32, #tpu.memory_space<vmem>>
      %347 = tpu.memref_slice %arg9[%c0_i32_132] : memref<2x!tpu.dma_semaphore, #tpu.memory_space<semaphore_mem>> -> memref<1x!tpu.dma_semaphore, #tpu.memory_space<semaphore_mem>>
      %348 = tpu.memref_squeeze %347 : memref<1x!tpu.dma_semaphore, #tpu.memory_space<semaphore_mem>> -> memref<!tpu.dma_semaphore, #tpu.memory_space<semaphore_mem>>
      tpu.enqueue_dma source(%344 : memref<1x128xf32, #tpu.memory_space<any>>) target(%346 : memref<1x128xf32, #tpu.memory_space<vmem>>) target_semaphore(%348 : memref<!tpu.dma_semaphore, #tpu.memory_space<semaphore_mem>>)
      %c3_i32_136 = arith.constant 3 : i32
      %349 = arith.addi %0, %c3_i32_136 : i32
      %c0_137 = arith.constant 0 : index
      %350 = arith.index_cast %349 : i32 to index
      %351 = memref.load %arg2[%c0_137, %350] : memref<2x32xi32, #tpu.memory_space<smem>>
      %c0_i32_138 = arith.constant 0 : i32
      %c0_i32_139 = arith.constant 0 : i32
      %c0_i32_140 = arith.constant 0 : i32
      %352 = tpu.memref_slice %arg3[%351, %c0_i32_140] : memref<1000x128xf32, #tpu.memory_space<any>> -> memref<1x128xf32, #tpu.memory_space<any>>
      %c3_i32_141 = arith.constant 3 : i32
      %c0_i32_142 = arith.constant 0 : i32
      %353 = tpu.memref_slice %arg8[%c0_i32_138, %c3_i32_141, %c0_i32_142] : memref<2x32x128xf32, #tpu.memory_space<vmem>> -> memref<1x1x128xf32, #tpu.memory_space<vmem>>
      %354 = tpu.memref_squeeze %353 : memref<1x1x128xf32, #tpu.memory_space<vmem>> -> memref<1x128xf32, #tpu.memory_space<vmem>>
      %355 = tpu.memref_slice %arg9[%c0_i32_139] : memref<2x!tpu.dma_semaphore, #tpu.memory_space<semaphore_mem>> -> memref<1x!tpu.dma_semaphore, #tpu.memory_space<semaphore_mem>>
      %356 = tpu.memref_squeeze %355 : memref<1x!tpu.dma_semaphore, #tpu.memory_space<semaphore_mem>> -> memref<!tpu.dma_semaphore, #tpu.memory_space<semaphore_mem>>
      tpu.enqueue_dma source(%352 : memref<1x128xf32, #tpu.memory_space<any>>) target(%354 : memref<1x128xf32, #tpu.memory_space<vmem>>) target_semaphore(%356 : memref<!tpu.dma_semaphore, #tpu.memory_space<semaphore_mem>>)
      %c4_i32_143 = arith.constant 4 : i32
      %357 = arith.addi %0, %c4_i32_143 : i32
      %c0_144 = arith.constant 0 : index
      %358 = arith.index_cast %357 : i32 to index
      %359 = memref.load %arg2[%c0_144, %358] : memref<2x32xi32, #tpu.memory_space<smem>>
      %c0_i32_145 = arith.constant 0 : i32
      %c0_i32_146 = arith.constant 0 : i32
      %c0_i32_147 = arith.constant 0 : i32
      %360 = tpu.memref_slice %arg3[%359, %c0_i32_147] : memref<1000x128xf32, #tpu.memory_space<any>> -> memref<1x128xf32, #tpu.memory_space<any>>
      %c4_i32_148 = arith.constant 4 : i32
      %c0_i32_149 = arith.constant 0 : i32
      %361 = tpu.memref_slice %arg8[%c0_i32_145, %c4_i32_148, %c0_i32_149] : memref<2x32x128xf32, #tpu.memory_space<vmem>> -> memref<1x1x128xf32, #tpu.memory_space<vmem>>
      %362 = tpu.memref_squeeze %361 : memref<1x1x128xf32, #tpu.memory_space<vmem>> -> memref<1x128xf32, #tpu.memory_space<vmem>>
      %363 = tpu.memref_slice %arg9[%c0_i32_146] : memref<2x!tpu.dma_semaphore, #tpu.memory_space<semaphore_mem>> -> memref<1x!tpu.dma_semaphore, #tpu.memory_space<semaphore_mem>>
      %364 = tpu.memref_squeeze %363 : memref<1x!tpu.dma_semaphore, #tpu.memory_space<semaphore_mem>> -> memref<!tpu.dma_semaphore, #tpu.memory_space<semaphore_mem>>
      tpu.enqueue_dma source(%360 : memref<1x128xf32, #tpu.memory_space<any>>) target(%362 : memref<1x128xf32, #tpu.memory_space<vmem>>) target_semaphore(%364 : memref<!tpu.dma_semaphore, #tpu.memory_space<semaphore_mem>>)
      %c5_i32_150 = arith.constant 5 : i32
      %365 = arith.addi %0, %c5_i32_150 : i32
      %c0_151 = arith.constant 0 : index
      %366 = arith.index_cast %365 : i32 to index
      %367 = memref.load %arg2[%c0_151, %366] : memref<2x32xi32, #tpu.memory_space<smem>>
      %c0_i32_152 = arith.constant 0 : i32
      %c0_i32_153 = arith.constant 0 : i32
      %c0_i32_154 = arith.constant 0 : i32
      %368 = tpu.memref_slice %arg3[%367, %c0_i32_154] : memref<1000x128xf32, #tpu.memory_space<any>> -> memref<1x128xf32, #tpu.memory_space<any>>
      %c5_i32_155 = arith.constant 5 : i32
      %c0_i32_156 = arith.constant 0 : i32
      %369 = tpu.memref_slice %arg8[%c0_i32_152, %c5_i32_155, %c0_i32_156] : memref<2x32x128xf32, #tpu.memory_space<vmem>> -> memref<1x1x128xf32, #tpu.memory_space<vmem>>
      %370 = tpu.memref_squeeze %369 : memref<1x1x128xf32, #tpu.memory_space<vmem>> -> memref<1x128xf32, #tpu.memory_space<vmem>>
      %371 = tpu.memref_slice %arg9[%c0_i32_153] : memref<2x!tpu.dma_semaphore, #tpu.memory_space<semaphore_mem>> -> memref<1x!tpu.dma_semaphore, #tpu.memory_space<semaphore_mem>>
      %372 = tpu.memref_squeeze %371 : memref<1x!tpu.dma_semaphore, #tpu.memory_space<semaphore_mem>> -> memref<!tpu.dma_semaphore, #tpu.memory_space<semaphore_mem>>
      tpu.enqueue_dma source(%368 : memref<1x128xf32, #tpu.memory_space<any>>) target(%370 : memref<1x128xf32, #tpu.memory_space<vmem>>) target_semaphore(%372 : memref<!tpu.dma_semaphore, #tpu.memory_space<semaphore_mem>>)
      %c6_i32_157 = arith.constant 6 : i32
      %373 = arith.addi %0, %c6_i32_157 : i32
      %c0_158 = arith.constant 0 : index
      %374 = arith.index_cast %373 : i32 to index
      %375 = memref.load %arg2[%c0_158, %374] : memref<2x32xi32, #tpu.memory_space<smem>>
      %c0_i32_159 = arith.constant 0 : i32
      %c0_i32_160 = arith.constant 0 : i32
      %c0_i32_161 = arith.constant 0 : i32
      %376 = tpu.memref_slice %arg3[%375, %c0_i32_161] : memref<1000x128xf32, #tpu.memory_space<any>> -> memref<1x128xf32, #tpu.memory_space<any>>
      %c6_i32_162 = arith.constant 6 : i32
      %c0_i32_163 = arith.constant 0 : i32
      %377 = tpu.memref_slice %arg8[%c0_i32_159, %c6_i32_162, %c0_i32_163] : memref<2x32x128xf32, #tpu.memory_space<vmem>> -> memref<1x1x128xf32, #tpu.memory_space<vmem>>
      %378 = tpu.memref_squeeze %377 : memref<1x1x128xf32, #tpu.memory_space<vmem>> -> memref<1x128xf32, #tpu.memory_space<vmem>>
      %379 = tpu.memref_slice %arg9[%c0_i32_160] : memref<2x!tpu.dma_semaphore, #tpu.memory_space<semaphore_mem>> -> memref<1x!tpu.dma_semaphore, #tpu.memory_space<semaphore_mem>>
      %380 = tpu.memref_squeeze %379 : memref<1x!tpu.dma_semaphore, #tpu.memory_space<semaphore_mem>> -> memref<!tpu.dma_semaphore, #tpu.memory_space<semaphore_mem>>
      tpu.enqueue_dma source(%376 : memref<1x128xf32, #tpu.memory_space<any>>) target(%378 : memref<1x128xf32, #tpu.memory_space<vmem>>) target_semaphore(%380 : memref<!tpu.dma_semaphore, #tpu.memory_space<semaphore_mem>>)
      %c7_i32_164 = arith.constant 7 : i32
      %381 = arith.addi %0, %c7_i32_164 : i32
      %c0_165 = arith.constant 0 : index
      %382 = arith.index_cast %381 : i32 to index
      %383 = memref.load %arg2[%c0_165, %382] : memref<2x32xi32, #tpu.memory_space<smem>>
      %c0_i32_166 = arith.constant 0 : i32
      %c0_i32_167 = arith.constant 0 : i32
      %c0_i32_168 = arith.constant 0 : i32
      %384 = tpu.memref_slice %arg3[%383, %c0_i32_168] : memref<1000x128xf32, #tpu.memory_space<any>> -> memref<1x128xf32, #tpu.memory_space<any>>
      %c7_i32_169 = arith.constant 7 : i32
      %c0_i32_170 = arith.constant 0 : i32
      %385 = tpu.memref_slice %arg8[%c0_i32_166, %c7_i32_169, %c0_i32_170] : memref<2x32x128xf32, #tpu.memory_space<vmem>> -> memref<1x1x128xf32, #tpu.memory_space<vmem>>
      %386 = tpu.memref_squeeze %385 : memref<1x1x128xf32, #tpu.memory_space<vmem>> -> memref<1x128xf32, #tpu.memory_space<vmem>>
      %387 = tpu.memref_slice %arg9[%c0_i32_167] : memref<2x!tpu.dma_semaphore, #tpu.memory_space<semaphore_mem>> -> memref<1x!tpu.dma_semaphore, #tpu.memory_space<semaphore_mem>>
      %388 = tpu.memref_squeeze %387 : memref<1x!tpu.dma_semaphore, #tpu.memory_space<semaphore_mem>> -> memref<!tpu.dma_semaphore, #tpu.memory_space<semaphore_mem>>
      tpu.enqueue_dma source(%384 : memref<1x128xf32, #tpu.memory_space<any>>) target(%386 : memref<1x128xf32, #tpu.memory_space<vmem>>) target_semaphore(%388 : memref<!tpu.dma_semaphore, #tpu.memory_space<semaphore_mem>>)
      %c8_i32_171 = arith.constant 8 : i32
      %389 = arith.addi %0, %c8_i32_171 : i32
      %c0_172 = arith.constant 0 : index
      %390 = arith.index_cast %389 : i32 to index
      %391 = memref.load %arg2[%c0_172, %390] : memref<2x32xi32, #tpu.memory_space<smem>>
      %c0_i32_173 = arith.constant 0 : i32
      %c0_i32_174 = arith.constant 0 : i32
      %c0_i32_175 = arith.constant 0 : i32
      %392 = tpu.memref_slice %arg3[%391, %c0_i32_175] : memref<1000x128xf32, #tpu.memory_space<any>> -> memref<1x128xf32, #tpu.memory_space<any>>
      %c8_i32_176 = arith.constant 8 : i32
      %c0_i32_177 = arith.constant 0 : i32
      %393 = tpu.memref_slice %arg8[%c0_i32_173, %c8_i32_176, %c0_i32_177] : memref<2x32x128xf32, #tpu.memory_space<vmem>> -> memref<1x1x128xf32, #tpu.memory_space<vmem>>
      %394 = tpu.memref_squeeze %393 : memref<1x1x128xf32, #tpu.memory_space<vmem>> -> memref<1x128xf32, #tpu.memory_space<vmem>>
      %395 = tpu.memref_slice %arg9[%c0_i32_174] : memref<2x!tpu.dma_semaphore, #tpu.memory_space<semaphore_mem>> -> memref<1x!tpu.dma_semaphore, #tpu.memory_space<semaphore_mem>>
      %396 = tpu.memref_squeeze %395 : memref<1x!tpu.dma_semaphore, #tpu.memory_space<semaphore_mem>> -> memref<!tpu.dma_semaphore, #tpu.memory_space<semaphore_mem>>
      tpu.enqueue_dma source(%392 : memref<1x128xf32, #tpu.memory_space<any>>) target(%394 : memref<1x128xf32, #tpu.memory_space<vmem>>) target_semaphore(%396 : memref<!tpu.dma_semaphore, #tpu.memory_space<semaphore_mem>>)
      %c9_i32_178 = arith.constant 9 : i32
      %397 = arith.addi %0, %c9_i32_178 : i32
      %c0_179 = arith.constant 0 : index
      %398 = arith.index_cast %397 : i32 to index
      %399 = memref.load %arg2[%c0_179, %398] : memref<2x32xi32, #tpu.memory_space<smem>>
      %c0_i32_180 = arith.constant 0 : i32
      %c0_i32_181 = arith.constant 0 : i32
      %c0_i32_182 = arith.constant 0 : i32
      %400 = tpu.memref_slice %arg3[%399, %c0_i32_182] : memref<1000x128xf32, #tpu.memory_space<any>> -> memref<1x128xf32, #tpu.memory_space<any>>
      %c9_i32_183 = arith.constant 9 : i32
      %c0_i32_184 = arith.constant 0 : i32
      %401 = tpu.memref_slice %arg8[%c0_i32_180, %c9_i32_183, %c0_i32_184] : memref<2x32x128xf32, #tpu.memory_space<vmem>> -> memref<1x1x128xf32, #tpu.memory_space<vmem>>
      %402 = tpu.memref_squeeze %401 : memref<1x1x128xf32, #tpu.memory_space<vmem>> -> memref<1x128xf32, #tpu.memory_space<vmem>>
      %403 = tpu.memref_slice %arg9[%c0_i32_181] : memref<2x!tpu.dma_semaphore, #tpu.memory_space<semaphore_mem>> -> memref<1x!tpu.dma_semaphore, #tpu.memory_space<semaphore_mem>>
      %404 = tpu.memref_squeeze %403 : memref<1x!tpu.dma_semaphore, #tpu.memory_space<semaphore_mem>> -> memref<!tpu.dma_semaphore, #tpu.memory_space<semaphore_mem>>
      tpu.enqueue_dma source(%400 : memref<1x128xf32, #tpu.memory_space<any>>) target(%402 : memref<1x128xf32, #tpu.memory_space<vmem>>) target_semaphore(%404 : memref<!tpu.dma_semaphore, #tpu.memory_space<semaphore_mem>>)
      %c10_i32_185 = arith.constant 10 : i32
      %405 = arith.addi %0, %c10_i32_185 : i32
      %c0_186 = arith.constant 0 : index
      %406 = arith.index_cast %405 : i32 to index
      %407 = memref.load %arg2[%c0_186, %406] : memref<2x32xi32, #tpu.memory_space<smem>>
      %c0_i32_187 = arith.constant 0 : i32
      %c0_i32_188 = arith.constant 0 : i32
      %c0_i32_189 = arith.constant 0 : i32
      %408 = tpu.memref_slice %arg3[%407, %c0_i32_189] : memref<1000x128xf32, #tpu.memory_space<any>> -> memref<1x128xf32, #tpu.memory_space<any>>
      %c10_i32_190 = arith.constant 10 : i32
      %c0_i32_191 = arith.constant 0 : i32
      %409 = tpu.memref_slice %arg8[%c0_i32_187, %c10_i32_190, %c0_i32_191] : memref<2x32x128xf32, #tpu.memory_space<vmem>> -> memref<1x1x128xf32, #tpu.memory_space<vmem>>
      %410 = tpu.memref_squeeze %409 : memref<1x1x128xf32, #tpu.memory_space<vmem>> -> memref<1x128xf32, #tpu.memory_space<vmem>>
      %411 = tpu.memref_slice %arg9[%c0_i32_188] : memref<2x!tpu.dma_semaphore, #tpu.memory_space<semaphore_mem>> -> memref<1x!tpu.dma_semaphore, #tpu.memory_space<semaphore_mem>>
      %412 = tpu.memref_squeeze %411 : memref<1x!tpu.dma_semaphore, #tpu.memory_space<semaphore_mem>> -> memref<!tpu.dma_semaphore, #tpu.memory_space<semaphore_mem>>
      tpu.enqueue_dma source(%408 : memref<1x128xf32, #tpu.memory_space<any>>) target(%410 : memref<1x128xf32, #tpu.memory_space<vmem>>) target_semaphore(%412 : memref<!tpu.dma_semaphore, #tpu.memory_space<semaphore_mem>>)
      %c11_i32_192 = arith.constant 11 : i32
      %413 = arith.addi %0, %c11_i32_192 : i32
      %c0_193 = arith.constant 0 : index
      %414 = arith.index_cast %413 : i32 to index
      %415 = memref.load %arg2[%c0_193, %414] : memref<2x32xi32, #tpu.memory_space<smem>>
      %c0_i32_194 = arith.constant 0 : i32
      %c0_i32_195 = arith.constant 0 : i32
      %c0_i32_196 = arith.constant 0 : i32
      %416 = tpu.memref_slice %arg3[%415, %c0_i32_196] : memref<1000x128xf32, #tpu.memory_space<any>> -> memref<1x128xf32, #tpu.memory_space<any>>
      %c11_i32_197 = arith.constant 11 : i32
      %c0_i32_198 = arith.constant 0 : i32
      %417 = tpu.memref_slice %arg8[%c0_i32_194, %c11_i32_197, %c0_i32_198] : memref<2x32x128xf32, #tpu.memory_space<vmem>> -> memref<1x1x128xf32, #tpu.memory_space<vmem>>
      %418 = tpu.memref_squeeze %417 : memref<1x1x128xf32, #tpu.memory_space<vmem>> -> memref<1x128xf32, #tpu.memory_space<vmem>>
      %419 = tpu.memref_slice %arg9[%c0_i32_195] : memref<2x!tpu.dma_semaphore, #tpu.memory_space<semaphore_mem>> -> memref<1x!tpu.dma_semaphore, #tpu.memory_space<semaphore_mem>>
      %420 = tpu.memref_squeeze %419 : memref<1x!tpu.dma_semaphore, #tpu.memory_space<semaphore_mem>> -> memref<!tpu.dma_semaphore, #tpu.memory_space<semaphore_mem>>
      tpu.enqueue_dma source(%416 : memref<1x128xf32, #tpu.memory_space<any>>) target(%418 : memref<1x128xf32, #tpu.memory_space<vmem>>) target_semaphore(%420 : memref<!tpu.dma_semaphore, #tpu.memory_space<semaphore_mem>>)
      %c12_i32_199 = arith.constant 12 : i32
      %421 = arith.addi %0, %c12_i32_199 : i32
      %c0_200 = arith.constant 0 : index
      %422 = arith.index_cast %421 : i32 to index
      %423 = memref.load %arg2[%c0_200, %422] : memref<2x32xi32, #tpu.memory_space<smem>>
      %c0_i32_201 = arith.constant 0 : i32
      %c0_i32_202 = arith.constant 0 : i32
      %c0_i32_203 = arith.constant 0 : i32
      %424 = tpu.memref_slice %arg3[%423, %c0_i32_203] : memref<1000x128xf32, #tpu.memory_space<any>> -> memref<1x128xf32, #tpu.memory_space<any>>
      %c12_i32_204 = arith.constant 12 : i32
      %c0_i32_205 = arith.constant 0 : i32
      %425 = tpu.memref_slice %arg8[%c0_i32_201, %c12_i32_204, %c0_i32_205] : memref<2x32x128xf32, #tpu.memory_space<vmem>> -> memref<1x1x128xf32, #tpu.memory_space<vmem>>
      %426 = tpu.memref_squeeze %425 : memref<1x1x128xf32, #tpu.memory_space<vmem>> -> memref<1x128xf32, #tpu.memory_space<vmem>>
      %427 = tpu.memref_slice %arg9[%c0_i32_202] : memref<2x!tpu.dma_semaphore, #tpu.memory_space<semaphore_mem>> -> memref<1x!tpu.dma_semaphore, #tpu.memory_space<semaphore_mem>>
      %428 = tpu.memref_squeeze %427 : memref<1x!tpu.dma_semaphore, #tpu.memory_space<semaphore_mem>> -> memref<!tpu.dma_semaphore, #tpu.memory_space<semaphore_mem>>
      tpu.enqueue_dma source(%424 : memref<1x128xf32, #tpu.memory_space<any>>) target(%426 : memref<1x128xf32, #tpu.memory_space<vmem>>) target_semaphore(%428 : memref<!tpu.dma_semaphore, #tpu.memory_space<semaphore_mem>>)
      %c13_i32_206 = arith.constant 13 : i32
      %429 = arith.addi %0, %c13_i32_206 : i32
      %c0_207 = arith.constant 0 : index
      %430 = arith.index_cast %429 : i32 to index
      %431 = memref.load %arg2[%c0_207, %430] : memref<2x32xi32, #tpu.memory_space<smem>>
      %c0_i32_208 = arith.constant 0 : i32
      %c0_i32_209 = arith.constant 0 : i32
      %c0_i32_210 = arith.constant 0 : i32
      %432 = tpu.memref_slice %arg3[%431, %c0_i32_210] : memref<1000x128xf32, #tpu.memory_space<any>> -> memref<1x128xf32, #tpu.memory_space<any>>
      %c13_i32_211 = arith.constant 13 : i32
      %c0_i32_212 = arith.constant 0 : i32
      %433 = tpu.memref_slice %arg8[%c0_i32_208, %c13_i32_211, %c0_i32_212] : memref<2x32x128xf32, #tpu.memory_space<vmem>> -> memref<1x1x128xf32, #tpu.memory_space<vmem>>
      %434 = tpu.memref_squeeze %433 : memref<1x1x128xf32, #tpu.memory_space<vmem>> -> memref<1x128xf32, #tpu.memory_space<vmem>>
      %435 = tpu.memref_slice %arg9[%c0_i32_209] : memref<2x!tpu.dma_semaphore, #tpu.memory_space<semaphore_mem>> -> memref<1x!tpu.dma_semaphore, #tpu.memory_space<semaphore_mem>>
      %436 = tpu.memref_squeeze %435 : memref<1x!tpu.dma_semaphore, #tpu.memory_space<semaphore_mem>> -> memref<!tpu.dma_semaphore, #tpu.memory_space<semaphore_mem>>
      tpu.enqueue_dma source(%432 : memref<1x128xf32, #tpu.memory_space<any>>) target(%434 : memref<1x128xf32, #tpu.memory_space<vmem>>) target_semaphore(%436 : memref<!tpu.dma_semaphore, #tpu.memory_space<semaphore_mem>>)
      %c14_i32_213 = arith.constant 14 : i32
      %437 = arith.addi %0, %c14_i32_213 : i32
      %c0_214 = arith.constant 0 : index
      %438 = arith.index_cast %437 : i32 to index
      %439 = memref.load %arg2[%c0_214, %438] : memref<2x32xi32, #tpu.memory_space<smem>>
      %c0_i32_215 = arith.constant 0 : i32
      %c0_i32_216 = arith.constant 0 : i32
      %c0_i32_217 = arith.constant 0 : i32
      %440 = tpu.memref_slice %arg3[%439, %c0_i32_217] : memref<1000x128xf32, #tpu.memory_space<any>> -> memref<1x128xf32, #tpu.memory_space<any>>
      %c14_i32_218 = arith.constant 14 : i32
      %c0_i32_219 = arith.constant 0 : i32
      %441 = tpu.memref_slice %arg8[%c0_i32_215, %c14_i32_218, %c0_i32_219] : memref<2x32x128xf32, #tpu.memory_space<vmem>> -> memref<1x1x128xf32, #tpu.memory_space<vmem>>
      %442 = tpu.memref_squeeze %441 : memref<1x1x128xf32, #tpu.memory_space<vmem>> -> memref<1x128xf32, #tpu.memory_space<vmem>>
      %443 = tpu.memref_slice %arg9[%c0_i32_216] : memref<2x!tpu.dma_semaphore, #tpu.memory_space<semaphore_mem>> -> memref<1x!tpu.dma_semaphore, #tpu.memory_space<semaphore_mem>>
      %444 = tpu.memref_squeeze %443 : memref<1x!tpu.dma_semaphore, #tpu.memory_space<semaphore_mem>> -> memref<!tpu.dma_semaphore, #tpu.memory_space<semaphore_mem>>
      tpu.enqueue_dma source(%440 : memref<1x128xf32, #tpu.memory_space<any>>) target(%442 : memref<1x128xf32, #tpu.memory_space<vmem>>) target_semaphore(%444 : memref<!tpu.dma_semaphore, #tpu.memory_space<semaphore_mem>>)
      %c15_i32_220 = arith.constant 15 : i32
      %445 = arith.addi %0, %c15_i32_220 : i32
      %c0_221 = arith.constant 0 : index
      %446 = arith.index_cast %445 : i32 to index
      %447 = memref.load %arg2[%c0_221, %446] : memref<2x32xi32, #tpu.memory_space<smem>>
      %c0_i32_222 = arith.constant 0 : i32
      %c0_i32_223 = arith.constant 0 : i32
      %c0_i32_224 = arith.constant 0 : i32
      %448 = tpu.memref_slice %arg3[%447, %c0_i32_224] : memref<1000x128xf32, #tpu.memory_space<any>> -> memref<1x128xf32, #tpu.memory_space<any>>
      %c15_i32_225 = arith.constant 15 : i32
      %c0_i32_226 = arith.constant 0 : i32
      %449 = tpu.memref_slice %arg8[%c0_i32_222, %c15_i32_225, %c0_i32_226] : memref<2x32x128xf32, #tpu.memory_space<vmem>> -> memref<1x1x128xf32, #tpu.memory_space<vmem>>
      %450 = tpu.memref_squeeze %449 : memref<1x1x128xf32, #tpu.memory_space<vmem>> -> memref<1x128xf32, #tpu.memory_space<vmem>>
      %451 = tpu.memref_slice %arg9[%c0_i32_223] : memref<2x!tpu.dma_semaphore, #tpu.memory_space<semaphore_mem>> -> memref<1x!tpu.dma_semaphore, #tpu.memory_space<semaphore_mem>>
      %452 = tpu.memref_squeeze %451 : memref<1x!tpu.dma_semaphore, #tpu.memory_space<semaphore_mem>> -> memref<!tpu.dma_semaphore, #tpu.memory_space<semaphore_mem>>
      tpu.enqueue_dma source(%448 : memref<1x128xf32, #tpu.memory_space<any>>) target(%450 : memref<1x128xf32, #tpu.memory_space<vmem>>) target_semaphore(%452 : memref<!tpu.dma_semaphore, #tpu.memory_space<semaphore_mem>>)
      %c16_i32_227 = arith.constant 16 : i32
      %453 = arith.addi %0, %c16_i32_227 : i32
      %c0_228 = arith.constant 0 : index
      %454 = arith.index_cast %453 : i32 to index
      %455 = memref.load %arg2[%c0_228, %454] : memref<2x32xi32, #tpu.memory_space<smem>>
      %c0_i32_229 = arith.constant 0 : i32
      %c0_i32_230 = arith.constant 0 : i32
      %c0_i32_231 = arith.constant 0 : i32
      %456 = tpu.memref_slice %arg3[%455, %c0_i32_231] : memref<1000x128xf32, #tpu.memory_space<any>> -> memref<1x128xf32, #tpu.memory_space<any>>
      %c16_i32_232 = arith.constant 16 : i32
      %c0_i32_233 = arith.constant 0 : i32
      %457 = tpu.memref_slice %arg8[%c0_i32_229, %c16_i32_232, %c0_i32_233] : memref<2x32x128xf32, #tpu.memory_space<vmem>> -> memref<1x1x128xf32, #tpu.memory_space<vmem>>
      %458 = tpu.memref_squeeze %457 : memref<1x1x128xf32, #tpu.memory_space<vmem>> -> memref<1x128xf32, #tpu.memory_space<vmem>>
      %459 = tpu.memref_slice %arg9[%c0_i32_230] : memref<2x!tpu.dma_semaphore, #tpu.memory_space<semaphore_mem>> -> memref<1x!tpu.dma_semaphore, #tpu.memory_space<semaphore_mem>>
      %460 = tpu.memref_squeeze %459 : memref<1x!tpu.dma_semaphore, #tpu.memory_space<semaphore_mem>> -> memref<!tpu.dma_semaphore, #tpu.memory_space<semaphore_mem>>
      tpu.enqueue_dma source(%456 : memref<1x128xf32, #tpu.memory_space<any>>) target(%458 : memref<1x128xf32, #tpu.memory_space<vmem>>) target_semaphore(%460 : memref<!tpu.dma_semaphore, #tpu.memory_space<semaphore_mem>>)
      %c17_i32_234 = arith.constant 17 : i32
      %461 = arith.addi %0, %c17_i32_234 : i32
      %c0_235 = arith.constant 0 : index
      %462 = arith.index_cast %461 : i32 to index
      %463 = memref.load %arg2[%c0_235, %462] : memref<2x32xi32, #tpu.memory_space<smem>>
      %c0_i32_236 = arith.constant 0 : i32
      %c0_i32_237 = arith.constant 0 : i32
      %c0_i32_238 = arith.constant 0 : i32
      %464 = tpu.memref_slice %arg3[%463, %c0_i32_238] : memref<1000x128xf32, #tpu.memory_space<any>> -> memref<1x128xf32, #tpu.memory_space<any>>
      %c17_i32_239 = arith.constant 17 : i32
      %c0_i32_240 = arith.constant 0 : i32
      %465 = tpu.memref_slice %arg8[%c0_i32_236, %c17_i32_239, %c0_i32_240] : memref<2x32x128xf32, #tpu.memory_space<vmem>> -> memref<1x1x128xf32, #tpu.memory_space<vmem>>
      %466 = tpu.memref_squeeze %465 : memref<1x1x128xf32, #tpu.memory_space<vmem>> -> memref<1x128xf32, #tpu.memory_space<vmem>>
      %467 = tpu.memref_slice %arg9[%c0_i32_237] : memref<2x!tpu.dma_semaphore, #tpu.memory_space<semaphore_mem>> -> memref<1x!tpu.dma_semaphore, #tpu.memory_space<semaphore_mem>>
      %468 = tpu.memref_squeeze %467 : memref<1x!tpu.dma_semaphore, #tpu.memory_space<semaphore_mem>> -> memref<!tpu.dma_semaphore, #tpu.memory_space<semaphore_mem>>
      tpu.enqueue_dma source(%464 : memref<1x128xf32, #tpu.memory_space<any>>) target(%466 : memref<1x128xf32, #tpu.memory_space<vmem>>) target_semaphore(%468 : memref<!tpu.dma_semaphore, #tpu.memory_space<semaphore_mem>>)
      %c18_i32_241 = arith.constant 18 : i32
      %469 = arith.addi %0, %c18_i32_241 : i32
      %c0_242 = arith.constant 0 : index
      %470 = arith.index_cast %469 : i32 to index
      %471 = memref.load %arg2[%c0_242, %470] : memref<2x32xi32, #tpu.memory_space<smem>>
      %c0_i32_243 = arith.constant 0 : i32
      %c0_i32_244 = arith.constant 0 : i32
      %c0_i32_245 = arith.constant 0 : i32
      %472 = tpu.memref_slice %arg3[%471, %c0_i32_245] : memref<1000x128xf32, #tpu.memory_space<any>> -> memref<1x128xf32, #tpu.memory_space<any>>
      %c18_i32_246 = arith.constant 18 : i32
      %c0_i32_247 = arith.constant 0 : i32
      %473 = tpu.memref_slice %arg8[%c0_i32_243, %c18_i32_246, %c0_i32_247] : memref<2x32x128xf32, #tpu.memory_space<vmem>> -> memref<1x1x128xf32, #tpu.memory_space<vmem>>
      %474 = tpu.memref_squeeze %473 : memref<1x1x128xf32, #tpu.memory_space<vmem>> -> memref<1x128xf32, #tpu.memory_space<vmem>>
      %475 = tpu.memref_slice %arg9[%c0_i32_244] : memref<2x!tpu.dma_semaphore, #tpu.memory_space<semaphore_mem>> -> memref<1x!tpu.dma_semaphore, #tpu.memory_space<semaphore_mem>>
      %476 = tpu.memref_squeeze %475 : memref<1x!tpu.dma_semaphore, #tpu.memory_space<semaphore_mem>> -> memref<!tpu.dma_semaphore, #tpu.memory_space<semaphore_mem>>
      tpu.enqueue_dma source(%472 : memref<1x128xf32, #tpu.memory_space<any>>) target(%474 : memref<1x128xf32, #tpu.memory_space<vmem>>) target_semaphore(%476 : memref<!tpu.dma_semaphore, #tpu.memory_space<semaphore_mem>>)
      %c19_i32_248 = arith.constant 19 : i32
      %477 = arith.addi %0, %c19_i32_248 : i32
      %c0_249 = arith.constant 0 : index
      %478 = arith.index_cast %477 : i32 to index
      %479 = memref.load %arg2[%c0_249, %478] : memref<2x32xi32, #tpu.memory_space<smem>>
      %c0_i32_250 = arith.constant 0 : i32
      %c0_i32_251 = arith.constant 0 : i32
      %c0_i32_252 = arith.constant 0 : i32
      %480 = tpu.memref_slice %arg3[%479, %c0_i32_252] : memref<1000x128xf32, #tpu.memory_space<any>> -> memref<1x128xf32, #tpu.memory_space<any>>
      %c19_i32_253 = arith.constant 19 : i32
      %c0_i32_254 = arith.constant 0 : i32
      %481 = tpu.memref_slice %arg8[%c0_i32_250, %c19_i32_253, %c0_i32_254] : memref<2x32x128xf32, #tpu.memory_space<vmem>> -> memref<1x1x128xf32, #tpu.memory_space<vmem>>
      %482 = tpu.memref_squeeze %481 : memref<1x1x128xf32, #tpu.memory_space<vmem>> -> memref<1x128xf32, #tpu.memory_space<vmem>>
      %483 = tpu.memref_slice %arg9[%c0_i32_251] : memref<2x!tpu.dma_semaphore, #tpu.memory_space<semaphore_mem>> -> memref<1x!tpu.dma_semaphore, #tpu.memory_space<semaphore_mem>>
      %484 = tpu.memref_squeeze %483 : memref<1x!tpu.dma_semaphore, #tpu.memory_space<semaphore_mem>> -> memref<!tpu.dma_semaphore, #tpu.memory_space<semaphore_mem>>
      tpu.enqueue_dma source(%480 : memref<1x128xf32, #tpu.memory_space<any>>) target(%482 : memref<1x128xf32, #tpu.memory_space<vmem>>) target_semaphore(%484 : memref<!tpu.dma_semaphore, #tpu.memory_space<semaphore_mem>>)
      %c20_i32_255 = arith.constant 20 : i32
      %485 = arith.addi %0, %c20_i32_255 : i32
      %c0_256 = arith.constant 0 : index
      %486 = arith.index_cast %485 : i32 to index
      %487 = memref.load %arg2[%c0_256, %486] : memref<2x32xi32, #tpu.memory_space<smem>>
      %c0_i32_257 = arith.constant 0 : i32
      %c0_i32_258 = arith.constant 0 : i32
      %c0_i32_259 = arith.constant 0 : i32
      %488 = tpu.memref_slice %arg3[%487, %c0_i32_259] : memref<1000x128xf32, #tpu.memory_space<any>> -> memref<1x128xf32, #tpu.memory_space<any>>
      %c20_i32_260 = arith.constant 20 : i32
      %c0_i32_261 = arith.constant 0 : i32
      %489 = tpu.memref_slice %arg8[%c0_i32_257, %c20_i32_260, %c0_i32_261] : memref<2x32x128xf32, #tpu.memory_space<vmem>> -> memref<1x1x128xf32, #tpu.memory_space<vmem>>
      %490 = tpu.memref_squeeze %489 : memref<1x1x128xf32, #tpu.memory_space<vmem>> -> memref<1x128xf32, #tpu.memory_space<vmem>>
      %491 = tpu.memref_slice %arg9[%c0_i32_258] : memref<2x!tpu.dma_semaphore, #tpu.memory_space<semaphore_mem>> -> memref<1x!tpu.dma_semaphore, #tpu.memory_space<semaphore_mem>>
      %492 = tpu.memref_squeeze %491 : memref<1x!tpu.dma_semaphore, #tpu.memory_space<semaphore_mem>> -> memref<!tpu.dma_semaphore, #tpu.memory_space<semaphore_mem>>
      tpu.enqueue_dma source(%488 : memref<1x128xf32, #tpu.memory_space<any>>) target(%490 : memref<1x128xf32, #tpu.memory_space<vmem>>) target_semaphore(%492 : memref<!tpu.dma_semaphore, #tpu.memory_space<semaphore_mem>>)
      %c21_i32_262 = arith.constant 21 : i32
      %493 = arith.addi %0, %c21_i32_262 : i32
      %c0_263 = arith.constant 0 : index
      %494 = arith.index_cast %493 : i32 to index
      %495 = memref.load %arg2[%c0_263, %494] : memref<2x32xi32, #tpu.memory_space<smem>>
      %c0_i32_264 = arith.constant 0 : i32
      %c0_i32_265 = arith.constant 0 : i32
      %c0_i32_266 = arith.constant 0 : i32
      %496 = tpu.memref_slice %arg3[%495, %c0_i32_266] : memref<1000x128xf32, #tpu.memory_space<any>> -> memref<1x128xf32, #tpu.memory_space<any>>
      %c21_i32_267 = arith.constant 21 : i32
      %c0_i32_268 = arith.constant 0 : i32
      %497 = tpu.memref_slice %arg8[%c0_i32_264, %c21_i32_267, %c0_i32_268] : memref<2x32x128xf32, #tpu.memory_space<vmem>> -> memref<1x1x128xf32, #tpu.memory_space<vmem>>
      %498 = tpu.memref_squeeze %497 : memref<1x1x128xf32, #tpu.memory_space<vmem>> -> memref<1x128xf32, #tpu.memory_space<vmem>>
      %499 = tpu.memref_slice %arg9[%c0_i32_265] : memref<2x!tpu.dma_semaphore, #tpu.memory_space<semaphore_mem>> -> memref<1x!tpu.dma_semaphore, #tpu.memory_space<semaphore_mem>>
      %500 = tpu.memref_squeeze %499 : memref<1x!tpu.dma_semaphore, #tpu.memory_space<semaphore_mem>> -> memref<!tpu.dma_semaphore, #tpu.memory_space<semaphore_mem>>
      tpu.enqueue_dma source(%496 : memref<1x128xf32, #tpu.memory_space<any>>) target(%498 : memref<1x128xf32, #tpu.memory_space<vmem>>) target_semaphore(%500 : memref<!tpu.dma_semaphore, #tpu.memory_space<semaphore_mem>>)
      %c22_i32_269 = arith.constant 22 : i32
      %501 = arith.addi %0, %c22_i32_269 : i32
      %c0_270 = arith.constant 0 : index
      %502 = arith.index_cast %501 : i32 to index
      %503 = memref.load %arg2[%c0_270, %502] : memref<2x32xi32, #tpu.memory_space<smem>>
      %c0_i32_271 = arith.constant 0 : i32
      %c0_i32_272 = arith.constant 0 : i32
      %c0_i32_273 = arith.constant 0 : i32
      %504 = tpu.memref_slice %arg3[%503, %c0_i32_273] : memref<1000x128xf32, #tpu.memory_space<any>> -> memref<1x128xf32, #tpu.memory_space<any>>
      %c22_i32_274 = arith.constant 22 : i32
      %c0_i32_275 = arith.constant 0 : i32
      %505 = tpu.memref_slice %arg8[%c0_i32_271, %c22_i32_274, %c0_i32_275] : memref<2x32x128xf32, #tpu.memory_space<vmem>> -> memref<1x1x128xf32, #tpu.memory_space<vmem>>
      %506 = tpu.memref_squeeze %505 : memref<1x1x128xf32, #tpu.memory_space<vmem>> -> memref<1x128xf32, #tpu.memory_space<vmem>>
      %507 = tpu.memref_slice %arg9[%c0_i32_272] : memref<2x!tpu.dma_semaphore, #tpu.memory_space<semaphore_mem>> -> memref<1x!tpu.dma_semaphore, #tpu.memory_space<semaphore_mem>>
      %508 = tpu.memref_squeeze %507 : memref<1x!tpu.dma_semaphore, #tpu.memory_space<semaphore_mem>> -> memref<!tpu.dma_semaphore, #tpu.memory_space<semaphore_mem>>
      tpu.enqueue_dma source(%504 : memref<1x128xf32, #tpu.memory_space<any>>) target(%506 : memref<1x128xf32, #tpu.memory_space<vmem>>) target_semaphore(%508 : memref<!tpu.dma_semaphore, #tpu.memory_space<semaphore_mem>>)
      %c23_i32_276 = arith.constant 23 : i32
      %509 = arith.addi %0, %c23_i32_276 : i32
      %c0_277 = arith.constant 0 : index
      %510 = arith.index_cast %509 : i32 to index
      %511 = memref.load %arg2[%c0_277, %510] : memref<2x32xi32, #tpu.memory_space<smem>>
      %c0_i32_278 = arith.constant 0 : i32
      %c0_i32_279 = arith.constant 0 : i32
      %c0_i32_280 = arith.constant 0 : i32
      %512 = tpu.memref_slice %arg3[%511, %c0_i32_280] : memref<1000x128xf32, #tpu.memory_space<any>> -> memref<1x128xf32, #tpu.memory_space<any>>
      %c23_i32_281 = arith.constant 23 : i32
      %c0_i32_282 = arith.constant 0 : i32
      %513 = tpu.memref_slice %arg8[%c0_i32_278, %c23_i32_281, %c0_i32_282] : memref<2x32x128xf32, #tpu.memory_space<vmem>> -> memref<1x1x128xf32, #tpu.memory_space<vmem>>
      %514 = tpu.memref_squeeze %513 : memref<1x1x128xf32, #tpu.memory_space<vmem>> -> memref<1x128xf32, #tpu.memory_space<vmem>>
      %515 = tpu.memref_slice %arg9[%c0_i32_279] : memref<2x!tpu.dma_semaphore, #tpu.memory_space<semaphore_mem>> -> memref<1x!tpu.dma_semaphore, #tpu.memory_space<semaphore_mem>>
      %516 = tpu.memref_squeeze %515 : memref<1x!tpu.dma_semaphore, #tpu.memory_space<semaphore_mem>> -> memref<!tpu.dma_semaphore, #tpu.memory_space<semaphore_mem>>
      tpu.enqueue_dma source(%512 : memref<1x128xf32, #tpu.memory_space<any>>) target(%514 : memref<1x128xf32, #tpu.memory_space<vmem>>) target_semaphore(%516 : memref<!tpu.dma_semaphore, #tpu.memory_space<semaphore_mem>>)
      %c24_i32_283 = arith.constant 24 : i32
      %517 = arith.addi %0, %c24_i32_283 : i32
      %c0_284 = arith.constant 0 : index
      %518 = arith.index_cast %517 : i32 to index
      %519 = memref.load %arg2[%c0_284, %518] : memref<2x32xi32, #tpu.memory_space<smem>>
      %c0_i32_285 = arith.constant 0 : i32
      %c0_i32_286 = arith.constant 0 : i32
      %c0_i32_287 = arith.constant 0 : i32
      %520 = tpu.memref_slice %arg3[%519, %c0_i32_287] : memref<1000x128xf32, #tpu.memory_space<any>> -> memref<1x128xf32, #tpu.memory_space<any>>
      %c24_i32_288 = arith.constant 24 : i32
      %c0_i32_289 = arith.constant 0 : i32
      %521 = tpu.memref_slice %arg8[%c0_i32_285, %c24_i32_288, %c0_i32_289] : memref<2x32x128xf32, #tpu.memory_space<vmem>> -> memref<1x1x128xf32, #tpu.memory_space<vmem>>
      %522 = tpu.memref_squeeze %521 : memref<1x1x128xf32, #tpu.memory_space<vmem>> -> memref<1x128xf32, #tpu.memory_space<vmem>>
      %523 = tpu.memref_slice %arg9[%c0_i32_286] : memref<2x!tpu.dma_semaphore, #tpu.memory_space<semaphore_mem>> -> memref<1x!tpu.dma_semaphore, #tpu.memory_space<semaphore_mem>>
      %524 = tpu.memref_squeeze %523 : memref<1x!tpu.dma_semaphore, #tpu.memory_space<semaphore_mem>> -> memref<!tpu.dma_semaphore, #tpu.memory_space<semaphore_mem>>
      tpu.enqueue_dma source(%520 : memref<1x128xf32, #tpu.memory_space<any>>) target(%522 : memref<1x128xf32, #tpu.memory_space<vmem>>) target_semaphore(%524 : memref<!tpu.dma_semaphore, #tpu.memory_space<semaphore_mem>>)
      %c25_i32_290 = arith.constant 25 : i32
      %525 = arith.addi %0, %c25_i32_290 : i32
      %c0_291 = arith.constant 0 : index
      %526 = arith.index_cast %525 : i32 to index
      %527 = memref.load %arg2[%c0_291, %526] : memref<2x32xi32, #tpu.memory_space<smem>>
      %c0_i32_292 = arith.constant 0 : i32
      %c0_i32_293 = arith.constant 0 : i32
      %c0_i32_294 = arith.constant 0 : i32
      %528 = tpu.memref_slice %arg3[%527, %c0_i32_294] : memref<1000x128xf32, #tpu.memory_space<any>> -> memref<1x128xf32, #tpu.memory_space<any>>
      %c25_i32_295 = arith.constant 25 : i32
      %c0_i32_296 = arith.constant 0 : i32
      %529 = tpu.memref_slice %arg8[%c0_i32_292, %c25_i32_295, %c0_i32_296] : memref<2x32x128xf32, #tpu.memory_space<vmem>> -> memref<1x1x128xf32, #tpu.memory_space<vmem>>
      %530 = tpu.memref_squeeze %529 : memref<1x1x128xf32, #tpu.memory_space<vmem>> -> memref<1x128xf32, #tpu.memory_space<vmem>>
      %531 = tpu.memref_slice %arg9[%c0_i32_293] : memref<2x!tpu.dma_semaphore, #tpu.memory_space<semaphore_mem>> -> memref<1x!tpu.dma_semaphore, #tpu.memory_space<semaphore_mem>>
      %532 = tpu.memref_squeeze %531 : memref<1x!tpu.dma_semaphore, #tpu.memory_space<semaphore_mem>> -> memref<!tpu.dma_semaphore, #tpu.memory_space<semaphore_mem>>
      tpu.enqueue_dma source(%528 : memref<1x128xf32, #tpu.memory_space<any>>) target(%530 : memref<1x128xf32, #tpu.memory_space<vmem>>) target_semaphore(%532 : memref<!tpu.dma_semaphore, #tpu.memory_space<semaphore_mem>>)
      %c26_i32_297 = arith.constant 26 : i32
      %533 = arith.addi %0, %c26_i32_297 : i32
      %c0_298 = arith.constant 0 : index
      %534 = arith.index_cast %533 : i32 to index
      %535 = memref.load %arg2[%c0_298, %534] : memref<2x32xi32, #tpu.memory_space<smem>>
      %c0_i32_299 = arith.constant 0 : i32
      %c0_i32_300 = arith.constant 0 : i32
      %c0_i32_301 = arith.constant 0 : i32
      %536 = tpu.memref_slice %arg3[%535, %c0_i32_301] : memref<1000x128xf32, #tpu.memory_space<any>> -> memref<1x128xf32, #tpu.memory_space<any>>
      %c26_i32_302 = arith.constant 26 : i32
      %c0_i32_303 = arith.constant 0 : i32
      %537 = tpu.memref_slice %arg8[%c0_i32_299, %c26_i32_302, %c0_i32_303] : memref<2x32x128xf32, #tpu.memory_space<vmem>> -> memref<1x1x128xf32, #tpu.memory_space<vmem>>
      %538 = tpu.memref_squeeze %537 : memref<1x1x128xf32, #tpu.memory_space<vmem>> -> memref<1x128xf32, #tpu.memory_space<vmem>>
      %539 = tpu.memref_slice %arg9[%c0_i32_300] : memref<2x!tpu.dma_semaphore, #tpu.memory_space<semaphore_mem>> -> memref<1x!tpu.dma_semaphore, #tpu.memory_space<semaphore_mem>>
      %540 = tpu.memref_squeeze %539 : memref<1x!tpu.dma_semaphore, #tpu.memory_space<semaphore_mem>> -> memref<!tpu.dma_semaphore, #tpu.memory_space<semaphore_mem>>
      tpu.enqueue_dma source(%536 : memref<1x128xf32, #tpu.memory_space<any>>) target(%538 : memref<1x128xf32, #tpu.memory_space<vmem>>) target_semaphore(%540 : memref<!tpu.dma_semaphore, #tpu.memory_space<semaphore_mem>>)
      %c27_i32_304 = arith.constant 27 : i32
      %541 = arith.addi %0, %c27_i32_304 : i32
      %c0_305 = arith.constant 0 : index
      %542 = arith.index_cast %541 : i32 to index
      %543 = memref.load %arg2[%c0_305, %542] : memref<2x32xi32, #tpu.memory_space<smem>>
      %c0_i32_306 = arith.constant 0 : i32
      %c0_i32_307 = arith.constant 0 : i32
      %c0_i32_308 = arith.constant 0 : i32
      %544 = tpu.memref_slice %arg3[%543, %c0_i32_308] : memref<1000x128xf32, #tpu.memory_space<any>> -> memref<1x128xf32, #tpu.memory_space<any>>
      %c27_i32_309 = arith.constant 27 : i32
      %c0_i32_310 = arith.constant 0 : i32
      %545 = tpu.memref_slice %arg8[%c0_i32_306, %c27_i32_309, %c0_i32_310] : memref<2x32x128xf32, #tpu.memory_space<vmem>> -> memref<1x1x128xf32, #tpu.memory_space<vmem>>
      %546 = tpu.memref_squeeze %545 : memref<1x1x128xf32, #tpu.memory_space<vmem>> -> memref<1x128xf32, #tpu.memory_space<vmem>>
      %547 = tpu.memref_slice %arg9[%c0_i32_307] : memref<2x!tpu.dma_semaphore, #tpu.memory_space<semaphore_mem>> -> memref<1x!tpu.dma_semaphore, #tpu.memory_space<semaphore_mem>>
      %548 = tpu.memref_squeeze %547 : memref<1x!tpu.dma_semaphore, #tpu.memory_space<semaphore_mem>> -> memref<!tpu.dma_semaphore, #tpu.memory_space<semaphore_mem>>
      tpu.enqueue_dma source(%544 : memref<1x128xf32, #tpu.memory_space<any>>) target(%546 : memref<1x128xf32, #tpu.memory_space<vmem>>) target_semaphore(%548 : memref<!tpu.dma_semaphore, #tpu.memory_space<semaphore_mem>>)
      %c28_i32_311 = arith.constant 28 : i32
      %549 = arith.addi %0, %c28_i32_311 : i32
      %c0_312 = arith.constant 0 : index
      %550 = arith.index_cast %549 : i32 to index
      %551 = memref.load %arg2[%c0_312, %550] : memref<2x32xi32, #tpu.memory_space<smem>>
      %c0_i32_313 = arith.constant 0 : i32
      %c0_i32_314 = arith.constant 0 : i32
      %c0_i32_315 = arith.constant 0 : i32
      %552 = tpu.memref_slice %arg3[%551, %c0_i32_315] : memref<1000x128xf32, #tpu.memory_space<any>> -> memref<1x128xf32, #tpu.memory_space<any>>
      %c28_i32_316 = arith.constant 28 : i32
      %c0_i32_317 = arith.constant 0 : i32
      %553 = tpu.memref_slice %arg8[%c0_i32_313, %c28_i32_316, %c0_i32_317] : memref<2x32x128xf32, #tpu.memory_space<vmem>> -> memref<1x1x128xf32, #tpu.memory_space<vmem>>
      %554 = tpu.memref_squeeze %553 : memref<1x1x128xf32, #tpu.memory_space<vmem>> -> memref<1x128xf32, #tpu.memory_space<vmem>>
      %555 = tpu.memref_slice %arg9[%c0_i32_314] : memref<2x!tpu.dma_semaphore, #tpu.memory_space<semaphore_mem>> -> memref<1x!tpu.dma_semaphore, #tpu.memory_space<semaphore_mem>>
      %556 = tpu.memref_squeeze %555 : memref<1x!tpu.dma_semaphore, #tpu.memory_space<semaphore_mem>> -> memref<!tpu.dma_semaphore, #tpu.memory_space<semaphore_mem>>
      tpu.enqueue_dma source(%552 : memref<1x128xf32, #tpu.memory_space<any>>) target(%554 : memref<1x128xf32, #tpu.memory_space<vmem>>) target_semaphore(%556 : memref<!tpu.dma_semaphore, #tpu.memory_space<semaphore_mem>>)
      %c29_i32_318 = arith.constant 29 : i32
      %557 = arith.addi %0, %c29_i32_318 : i32
      %c0_319 = arith.constant 0 : index
      %558 = arith.index_cast %557 : i32 to index
      %559 = memref.load %arg2[%c0_319, %558] : memref<2x32xi32, #tpu.memory_space<smem>>
      %c0_i32_320 = arith.constant 0 : i32
      %c0_i32_321 = arith.constant 0 : i32
      %c0_i32_322 = arith.constant 0 : i32
      %560 = tpu.memref_slice %arg3[%559, %c0_i32_322] : memref<1000x128xf32, #tpu.memory_space<any>> -> memref<1x128xf32, #tpu.memory_space<any>>
      %c29_i32_323 = arith.constant 29 : i32
      %c0_i32_324 = arith.constant 0 : i32
      %561 = tpu.memref_slice %arg8[%c0_i32_320, %c29_i32_323, %c0_i32_324] : memref<2x32x128xf32, #tpu.memory_space<vmem>> -> memref<1x1x128xf32, #tpu.memory_space<vmem>>
      %562 = tpu.memref_squeeze %561 : memref<1x1x128xf32, #tpu.memory_space<vmem>> -> memref<1x128xf32, #tpu.memory_space<vmem>>
      %563 = tpu.memref_slice %arg9[%c0_i32_321] : memref<2x!tpu.dma_semaphore, #tpu.memory_space<semaphore_mem>> -> memref<1x!tpu.dma_semaphore, #tpu.memory_space<semaphore_mem>>
      %564 = tpu.memref_squeeze %563 : memref<1x!tpu.dma_semaphore, #tpu.memory_space<semaphore_mem>> -> memref<!tpu.dma_semaphore, #tpu.memory_space<semaphore_mem>>
      tpu.enqueue_dma source(%560 : memref<1x128xf32, #tpu.memory_space<any>>) target(%562 : memref<1x128xf32, #tpu.memory_space<vmem>>) target_semaphore(%564 : memref<!tpu.dma_semaphore, #tpu.memory_space<semaphore_mem>>)
      %c30_i32_325 = arith.constant 30 : i32
      %565 = arith.addi %0, %c30_i32_325 : i32
      %c0_326 = arith.constant 0 : index
      %566 = arith.index_cast %565 : i32 to index
      %567 = memref.load %arg2[%c0_326, %566] : memref<2x32xi32, #tpu.memory_space<smem>>
      %c0_i32_327 = arith.constant 0 : i32
      %c0_i32_328 = arith.constant 0 : i32
      %c0_i32_329 = arith.constant 0 : i32
      %568 = tpu.memref_slice %arg3[%567, %c0_i32_329] : memref<1000x128xf32, #tpu.memory_space<any>> -> memref<1x128xf32, #tpu.memory_space<any>>
      %c30_i32_330 = arith.constant 30 : i32
      %c0_i32_331 = arith.constant 0 : i32
      %569 = tpu.memref_slice %arg8[%c0_i32_327, %c30_i32_330, %c0_i32_331] : memref<2x32x128xf32, #tpu.memory_space<vmem>> -> memref<1x1x128xf32, #tpu.memory_space<vmem>>
      %570 = tpu.memref_squeeze %569 : memref<1x1x128xf32, #tpu.memory_space<vmem>> -> memref<1x128xf32, #tpu.memory_space<vmem>>
      %571 = tpu.memref_slice %arg9[%c0_i32_328] : memref<2x!tpu.dma_semaphore, #tpu.memory_space<semaphore_mem>> -> memref<1x!tpu.dma_semaphore, #tpu.memory_space<semaphore_mem>>
      %572 = tpu.memref_squeeze %571 : memref<1x!tpu.dma_semaphore, #tpu.memory_space<semaphore_mem>> -> memref<!tpu.dma_semaphore, #tpu.memory_space<semaphore_mem>>
      tpu.enqueue_dma source(%568 : memref<1x128xf32, #tpu.memory_space<any>>) target(%570 : memref<1x128xf32, #tpu.memory_space<vmem>>) target_semaphore(%572 : memref<!tpu.dma_semaphore, #tpu.memory_space<semaphore_mem>>)
      %c31_i32_332 = arith.constant 31 : i32
      %573 = arith.addi %0, %c31_i32_332 : i32
      %c0_333 = arith.constant 0 : index
      %574 = arith.index_cast %573 : i32 to index
      %575 = memref.load %arg2[%c0_333, %574] : memref<2x32xi32, #tpu.memory_space<smem>>
      %c0_i32_334 = arith.constant 0 : i32
      %c0_i32_335 = arith.constant 0 : i32
      %c0_i32_336 = arith.constant 0 : i32
      %576 = tpu.memref_slice %arg3[%575, %c0_i32_336] : memref<1000x128xf32, #tpu.memory_space<any>> -> memref<1x128xf32, #tpu.memory_space<any>>
      %c31_i32_337 = arith.constant 31 : i32
      %c0_i32_338 = arith.constant 0 : i32
      %577 = tpu.memref_slice %arg8[%c0_i32_334, %c31_i32_337, %c0_i32_338] : memref<2x32x128xf32, #tpu.memory_space<vmem>> -> memref<1x1x128xf32, #tpu.memory_space<vmem>>
      %578 = tpu.memref_squeeze %577 : memref<1x1x128xf32, #tpu.memory_space<vmem>> -> memref<1x128xf32, #tpu.memory_space<vmem>>
      %579 = tpu.memref_slice %arg9[%c0_i32_335] : memref<2x!tpu.dma_semaphore, #tpu.memory_space<semaphore_mem>> -> memref<1x!tpu.dma_semaphore, #tpu.memory_space<semaphore_mem>>
      %580 = tpu.memref_squeeze %579 : memref<1x!tpu.dma_semaphore, #tpu.memory_space<semaphore_mem>> -> memref<!tpu.dma_semaphore, #tpu.memory_space<semaphore_mem>>
      tpu.enqueue_dma source(%576 : memref<1x128xf32, #tpu.memory_space<any>>) target(%578 : memref<1x128xf32, #tpu.memory_space<vmem>>) target_semaphore(%580 : memref<!tpu.dma_semaphore, #tpu.memory_space<semaphore_mem>>)
    } else {
    }
    %c1_i32_1 = arith.constant 1 : i32
    %5 = arith.addi %arg1, %c1_i32_1 : i32
    %c2_i32 = arith.constant 2 : i32
    %6 = arith.cmpi slt, %5, %c2_i32 : i32
    %7 = arith.extui %6 : i1 to i32
    %c0_i32_2 = arith.constant 0 : i32
    %8 = arith.cmpi ne, %7, %c0_i32_2 : i32
    scf.if %8 {
      %c1_i32_115 = arith.constant 1 : i32
      %325 = arith.addi %arg1, %c1_i32_115 : i32
      %c1_i32_116 = arith.constant 1 : i32
      %326 = arith.subi %c1_i32_116, %1 : i32
      %c0_i32_117 = arith.constant 0 : i32
      %327 = arith.addi %0, %c0_i32_117 : i32
      %328 = arith.index_cast %325 : i32 to index
      %329 = arith.index_cast %327 : i32 to index
      %330 = memref.load %arg2[%328, %329] : memref<2x32xi32, #tpu.memory_space<smem>>
      %c0_i32_118 = arith.constant 0 : i32
      %331 = tpu.memref_slice %arg3[%330, %c0_i32_118] : memref<1000x128xf32, #tpu.memory_space<any>> -> memref<1x128xf32, #tpu.memory_space<any>>
      %c0_i32_119 = arith.constant 0 : i32
      %c0_i32_120 = arith.constant 0 : i32
      %332 = tpu.memref_slice %arg8[%326, %c0_i32_119, %c0_i32_120] : memref<2x32x128xf32, #tpu.memory_space<vmem>> -> memref<1x1x128xf32, #tpu.memory_space<vmem>>
      %333 = tpu.memref_squeeze %332 : memref<1x1x128xf32, #tpu.memory_space<vmem>> -> memref<1x128xf32, #tpu.memory_space<vmem>>
      %334 = tpu.memref_slice %arg9[%326] : memref<2x!tpu.dma_semaphore, #tpu.memory_space<semaphore_mem>> -> memref<1x!tpu.dma_semaphore, #tpu.memory_space<semaphore_mem>>
      %335 = tpu.memref_squeeze %334 : memref<1x!tpu.dma_semaphore, #tpu.memory_space<semaphore_mem>> -> memref<!tpu.dma_semaphore, #tpu.memory_space<semaphore_mem>>
      tpu.enqueue_dma source(%331 : memref<1x128xf32, #tpu.memory_space<any>>) target(%333 : memref<1x128xf32, #tpu.memory_space<vmem>>) target_semaphore(%335 : memref<!tpu.dma_semaphore, #tpu.memory_space<semaphore_mem>>)
      %c1_i32_121 = arith.constant 1 : i32
      %336 = arith.addi %0, %c1_i32_121 : i32
      %337 = arith.index_cast %325 : i32 to index
      %338 = arith.index_cast %336 : i32 to index
      %339 = memref.load %arg2[%337, %338] : memref<2x32xi32, #tpu.memory_space<smem>>
      %c0_i32_122 = arith.constant 0 : i32
      %340 = tpu.memref_slice %arg3[%339, %c0_i32_122] : memref<1000x128xf32, #tpu.memory_space<any>> -> memref<1x128xf32, #tpu.memory_space<any>>
      %c1_i32_123 = arith.constant 1 : i32
      %c0_i32_124 = arith.constant 0 : i32
      %341 = tpu.memref_slice %arg8[%326, %c1_i32_123, %c0_i32_124] : memref<2x32x128xf32, #tpu.memory_space<vmem>> -> memref<1x1x128xf32, #tpu.memory_space<vmem>>
      %342 = tpu.memref_squeeze %341 : memref<1x1x128xf32, #tpu.memory_space<vmem>> -> memref<1x128xf32, #tpu.memory_space<vmem>>
      %343 = tpu.memref_slice %arg9[%326] : memref<2x!tpu.dma_semaphore, #tpu.memory_space<semaphore_mem>> -> memref<1x!tpu.dma_semaphore, #tpu.memory_space<semaphore_mem>>
      %344 = tpu.memref_squeeze %343 : memref<1x!tpu.dma_semaphore, #tpu.memory_space<semaphore_mem>> -> memref<!tpu.dma_semaphore, #tpu.memory_space<semaphore_mem>>
      tpu.enqueue_dma source(%340 : memref<1x128xf32, #tpu.memory_space<any>>) target(%342 : memref<1x128xf32, #tpu.memory_space<vmem>>) target_semaphore(%344 : memref<!tpu.dma_semaphore, #tpu.memory_space<semaphore_mem>>)
      %c2_i32_125 = arith.constant 2 : i32
      %345 = arith.addi %0, %c2_i32_125 : i32
      %346 = arith.index_cast %325 : i32 to index
      %347 = arith.index_cast %345 : i32 to index
      %348 = memref.load %arg2[%346, %347] : memref<2x32xi32, #tpu.memory_space<smem>>
      %c0_i32_126 = arith.constant 0 : i32
      %349 = tpu.memref_slice %arg3[%348, %c0_i32_126] : memref<1000x128xf32, #tpu.memory_space<any>> -> memref<1x128xf32, #tpu.memory_space<any>>
      %c2_i32_127 = arith.constant 2 : i32
      %c0_i32_128 = arith.constant 0 : i32
      %350 = tpu.memref_slice %arg8[%326, %c2_i32_127, %c0_i32_128] : memref<2x32x128xf32, #tpu.memory_space<vmem>> -> memref<1x1x128xf32, #tpu.memory_space<vmem>>
      %351 = tpu.memref_squeeze %350 : memref<1x1x128xf32, #tpu.memory_space<vmem>> -> memref<1x128xf32, #tpu.memory_space<vmem>>
      %352 = tpu.memref_slice %arg9[%326] : memref<2x!tpu.dma_semaphore, #tpu.memory_space<semaphore_mem>> -> memref<1x!tpu.dma_semaphore, #tpu.memory_space<semaphore_mem>>
      %353 = tpu.memref_squeeze %352 : memref<1x!tpu.dma_semaphore, #tpu.memory_space<semaphore_mem>> -> memref<!tpu.dma_semaphore, #tpu.memory_space<semaphore_mem>>
      tpu.enqueue_dma source(%349 : memref<1x128xf32, #tpu.memory_space<any>>) target(%351 : memref<1x128xf32, #tpu.memory_space<vmem>>) target_semaphore(%353 : memref<!tpu.dma_semaphore, #tpu.memory_space<semaphore_mem>>)
      %c3_i32_129 = arith.constant 3 : i32
      %354 = arith.addi %0, %c3_i32_129 : i32
      %355 = arith.index_cast %325 : i32 to index
      %356 = arith.index_cast %354 : i32 to index
      %357 = memref.load %arg2[%355, %356] : memref<2x32xi32, #tpu.memory_space<smem>>
      %c0_i32_130 = arith.constant 0 : i32
      %358 = tpu.memref_slice %arg3[%357, %c0_i32_130] : memref<1000x128xf32, #tpu.memory_space<any>> -> memref<1x128xf32, #tpu.memory_space<any>>
      %c3_i32_131 = arith.constant 3 : i32
      %c0_i32_132 = arith.constant 0 : i32
      %359 = tpu.memref_slice %arg8[%326, %c3_i32_131, %c0_i32_132] : memref<2x32x128xf32, #tpu.memory_space<vmem>> -> memref<1x1x128xf32, #tpu.memory_space<vmem>>
      %360 = tpu.memref_squeeze %359 : memref<1x1x128xf32, #tpu.memory_space<vmem>> -> memref<1x128xf32, #tpu.memory_space<vmem>>
      %361 = tpu.memref_slice %arg9[%326] : memref<2x!tpu.dma_semaphore, #tpu.memory_space<semaphore_mem>> -> memref<1x!tpu.dma_semaphore, #tpu.memory_space<semaphore_mem>>
      %362 = tpu.memref_squeeze %361 : memref<1x!tpu.dma_semaphore, #tpu.memory_space<semaphore_mem>> -> memref<!tpu.dma_semaphore, #tpu.memory_space<semaphore_mem>>
      tpu.enqueue_dma source(%358 : memref<1x128xf32, #tpu.memory_space<any>>) target(%360 : memref<1x128xf32, #tpu.memory_space<vmem>>) target_semaphore(%362 : memref<!tpu.dma_semaphore, #tpu.memory_space<semaphore_mem>>)
      %c4_i32_133 = arith.constant 4 : i32
      %363 = arith.addi %0, %c4_i32_133 : i32
      %364 = arith.index_cast %325 : i32 to index
      %365 = arith.index_cast %363 : i32 to index
      %366 = memref.load %arg2[%364, %365] : memref<2x32xi32, #tpu.memory_space<smem>>
      %c0_i32_134 = arith.constant 0 : i32
      %367 = tpu.memref_slice %arg3[%366, %c0_i32_134] : memref<1000x128xf32, #tpu.memory_space<any>> -> memref<1x128xf32, #tpu.memory_space<any>>
      %c4_i32_135 = arith.constant 4 : i32
      %c0_i32_136 = arith.constant 0 : i32
      %368 = tpu.memref_slice %arg8[%326, %c4_i32_135, %c0_i32_136] : memref<2x32x128xf32, #tpu.memory_space<vmem>> -> memref<1x1x128xf32, #tpu.memory_space<vmem>>
      %369 = tpu.memref_squeeze %368 : memref<1x1x128xf32, #tpu.memory_space<vmem>> -> memref<1x128xf32, #tpu.memory_space<vmem>>
      %370 = tpu.memref_slice %arg9[%326] : memref<2x!tpu.dma_semaphore, #tpu.memory_space<semaphore_mem>> -> memref<1x!tpu.dma_semaphore, #tpu.memory_space<semaphore_mem>>
      %371 = tpu.memref_squeeze %370 : memref<1x!tpu.dma_semaphore, #tpu.memory_space<semaphore_mem>> -> memref<!tpu.dma_semaphore, #tpu.memory_space<semaphore_mem>>
      tpu.enqueue_dma source(%367 : memref<1x128xf32, #tpu.memory_space<any>>) target(%369 : memref<1x128xf32, #tpu.memory_space<vmem>>) target_semaphore(%371 : memref<!tpu.dma_semaphore, #tpu.memory_space<semaphore_mem>>)
      %c5_i32_137 = arith.constant 5 : i32
      %372 = arith.addi %0, %c5_i32_137 : i32
      %373 = arith.index_cast %325 : i32 to index
      %374 = arith.index_cast %372 : i32 to index
      %375 = memref.load %arg2[%373, %374] : memref<2x32xi32, #tpu.memory_space<smem>>
      %c0_i32_138 = arith.constant 0 : i32
      %376 = tpu.memref_slice %arg3[%375, %c0_i32_138] : memref<1000x128xf32, #tpu.memory_space<any>> -> memref<1x128xf32, #tpu.memory_space<any>>
      %c5_i32_139 = arith.constant 5 : i32
      %c0_i32_140 = arith.constant 0 : i32
      %377 = tpu.memref_slice %arg8[%326, %c5_i32_139, %c0_i32_140] : memref<2x32x128xf32, #tpu.memory_space<vmem>> -> memref<1x1x128xf32, #tpu.memory_space<vmem>>
      %378 = tpu.memref_squeeze %377 : memref<1x1x128xf32, #tpu.memory_space<vmem>> -> memref<1x128xf32, #tpu.memory_space<vmem>>
      %379 = tpu.memref_slice %arg9[%326] : memref<2x!tpu.dma_semaphore, #tpu.memory_space<semaphore_mem>> -> memref<1x!tpu.dma_semaphore, #tpu.memory_space<semaphore_mem>>
      %380 = tpu.memref_squeeze %379 : memref<1x!tpu.dma_semaphore, #tpu.memory_space<semaphore_mem>> -> memref<!tpu.dma_semaphore, #tpu.memory_space<semaphore_mem>>
      tpu.enqueue_dma source(%376 : memref<1x128xf32, #tpu.memory_space<any>>) target(%378 : memref<1x128xf32, #tpu.memory_space<vmem>>) target_semaphore(%380 : memref<!tpu.dma_semaphore, #tpu.memory_space<semaphore_mem>>)
      %c6_i32_141 = arith.constant 6 : i32
      %381 = arith.addi %0, %c6_i32_141 : i32
      %382 = arith.index_cast %325 : i32 to index
      %383 = arith.index_cast %381 : i32 to index
      %384 = memref.load %arg2[%382, %383] : memref<2x32xi32, #tpu.memory_space<smem>>
      %c0_i32_142 = arith.constant 0 : i32
      %385 = tpu.memref_slice %arg3[%384, %c0_i32_142] : memref<1000x128xf32, #tpu.memory_space<any>> -> memref<1x128xf32, #tpu.memory_space<any>>
      %c6_i32_143 = arith.constant 6 : i32
      %c0_i32_144 = arith.constant 0 : i32
      %386 = tpu.memref_slice %arg8[%326, %c6_i32_143, %c0_i32_144] : memref<2x32x128xf32, #tpu.memory_space<vmem>> -> memref<1x1x128xf32, #tpu.memory_space<vmem>>
      %387 = tpu.memref_squeeze %386 : memref<1x1x128xf32, #tpu.memory_space<vmem>> -> memref<1x128xf32, #tpu.memory_space<vmem>>
      %388 = tpu.memref_slice %arg9[%326] : memref<2x!tpu.dma_semaphore, #tpu.memory_space<semaphore_mem>> -> memref<1x!tpu.dma_semaphore, #tpu.memory_space<semaphore_mem>>
      %389 = tpu.memref_squeeze %388 : memref<1x!tpu.dma_semaphore, #tpu.memory_space<semaphore_mem>> -> memref<!tpu.dma_semaphore, #tpu.memory_space<semaphore_mem>>
      tpu.enqueue_dma source(%385 : memref<1x128xf32, #tpu.memory_space<any>>) target(%387 : memref<1x128xf32, #tpu.memory_space<vmem>>) target_semaphore(%389 : memref<!tpu.dma_semaphore, #tpu.memory_space<semaphore_mem>>)
      %c7_i32_145 = arith.constant 7 : i32
      %390 = arith.addi %0, %c7_i32_145 : i32
      %391 = arith.index_cast %325 : i32 to index
      %392 = arith.index_cast %390 : i32 to index
      %393 = memref.load %arg2[%391, %392] : memref<2x32xi32, #tpu.memory_space<smem>>
      %c0_i32_146 = arith.constant 0 : i32
      %394 = tpu.memref_slice %arg3[%393, %c0_i32_146] : memref<1000x128xf32, #tpu.memory_space<any>> -> memref<1x128xf32, #tpu.memory_space<any>>
      %c7_i32_147 = arith.constant 7 : i32
      %c0_i32_148 = arith.constant 0 : i32
      %395 = tpu.memref_slice %arg8[%326, %c7_i32_147, %c0_i32_148] : memref<2x32x128xf32, #tpu.memory_space<vmem>> -> memref<1x1x128xf32, #tpu.memory_space<vmem>>
      %396 = tpu.memref_squeeze %395 : memref<1x1x128xf32, #tpu.memory_space<vmem>> -> memref<1x128xf32, #tpu.memory_space<vmem>>
      %397 = tpu.memref_slice %arg9[%326] : memref<2x!tpu.dma_semaphore, #tpu.memory_space<semaphore_mem>> -> memref<1x!tpu.dma_semaphore, #tpu.memory_space<semaphore_mem>>
      %398 = tpu.memref_squeeze %397 : memref<1x!tpu.dma_semaphore, #tpu.memory_space<semaphore_mem>> -> memref<!tpu.dma_semaphore, #tpu.memory_space<semaphore_mem>>
      tpu.enqueue_dma source(%394 : memref<1x128xf32, #tpu.memory_space<any>>) target(%396 : memref<1x128xf32, #tpu.memory_space<vmem>>) target_semaphore(%398 : memref<!tpu.dma_semaphore, #tpu.memory_space<semaphore_mem>>)
      %c8_i32_149 = arith.constant 8 : i32
      %399 = arith.addi %0, %c8_i32_149 : i32
      %400 = arith.index_cast %325 : i32 to index
      %401 = arith.index_cast %399 : i32 to index
      %402 = memref.load %arg2[%400, %401] : memref<2x32xi32, #tpu.memory_space<smem>>
      %c0_i32_150 = arith.constant 0 : i32
      %403 = tpu.memref_slice %arg3[%402, %c0_i32_150] : memref<1000x128xf32, #tpu.memory_space<any>> -> memref<1x128xf32, #tpu.memory_space<any>>
      %c8_i32_151 = arith.constant 8 : i32
      %c0_i32_152 = arith.constant 0 : i32
      %404 = tpu.memref_slice %arg8[%326, %c8_i32_151, %c0_i32_152] : memref<2x32x128xf32, #tpu.memory_space<vmem>> -> memref<1x1x128xf32, #tpu.memory_space<vmem>>
      %405 = tpu.memref_squeeze %404 : memref<1x1x128xf32, #tpu.memory_space<vmem>> -> memref<1x128xf32, #tpu.memory_space<vmem>>
      %406 = tpu.memref_slice %arg9[%326] : memref<2x!tpu.dma_semaphore, #tpu.memory_space<semaphore_mem>> -> memref<1x!tpu.dma_semaphore, #tpu.memory_space<semaphore_mem>>
      %407 = tpu.memref_squeeze %406 : memref<1x!tpu.dma_semaphore, #tpu.memory_space<semaphore_mem>> -> memref<!tpu.dma_semaphore, #tpu.memory_space<semaphore_mem>>
      tpu.enqueue_dma source(%403 : memref<1x128xf32, #tpu.memory_space<any>>) target(%405 : memref<1x128xf32, #tpu.memory_space<vmem>>) target_semaphore(%407 : memref<!tpu.dma_semaphore, #tpu.memory_space<semaphore_mem>>)
      %c9_i32_153 = arith.constant 9 : i32
      %408 = arith.addi %0, %c9_i32_153 : i32
      %409 = arith.index_cast %325 : i32 to index
      %410 = arith.index_cast %408 : i32 to index
      %411 = memref.load %arg2[%409, %410] : memref<2x32xi32, #tpu.memory_space<smem>>
      %c0_i32_154 = arith.constant 0 : i32
      %412 = tpu.memref_slice %arg3[%411, %c0_i32_154] : memref<1000x128xf32, #tpu.memory_space<any>> -> memref<1x128xf32, #tpu.memory_space<any>>
      %c9_i32_155 = arith.constant 9 : i32
      %c0_i32_156 = arith.constant 0 : i32
      %413 = tpu.memref_slice %arg8[%326, %c9_i32_155, %c0_i32_156] : memref<2x32x128xf32, #tpu.memory_space<vmem>> -> memref<1x1x128xf32, #tpu.memory_space<vmem>>
      %414 = tpu.memref_squeeze %413 : memref<1x1x128xf32, #tpu.memory_space<vmem>> -> memref<1x128xf32, #tpu.memory_space<vmem>>
      %415 = tpu.memref_slice %arg9[%326] : memref<2x!tpu.dma_semaphore, #tpu.memory_space<semaphore_mem>> -> memref<1x!tpu.dma_semaphore, #tpu.memory_space<semaphore_mem>>
      %416 = tpu.memref_squeeze %415 : memref<1x!tpu.dma_semaphore, #tpu.memory_space<semaphore_mem>> -> memref<!tpu.dma_semaphore, #tpu.memory_space<semaphore_mem>>
      tpu.enqueue_dma source(%412 : memref<1x128xf32, #tpu.memory_space<any>>) target(%414 : memref<1x128xf32, #tpu.memory_space<vmem>>) target_semaphore(%416 : memref<!tpu.dma_semaphore, #tpu.memory_space<semaphore_mem>>)
      %c10_i32_157 = arith.constant 10 : i32
      %417 = arith.addi %0, %c10_i32_157 : i32
      %418 = arith.index_cast %325 : i32 to index
      %419 = arith.index_cast %417 : i32 to index
      %420 = memref.load %arg2[%418, %419] : memref<2x32xi32, #tpu.memory_space<smem>>
      %c0_i32_158 = arith.constant 0 : i32
      %421 = tpu.memref_slice %arg3[%420, %c0_i32_158] : memref<1000x128xf32, #tpu.memory_space<any>> -> memref<1x128xf32, #tpu.memory_space<any>>
      %c10_i32_159 = arith.constant 10 : i32
      %c0_i32_160 = arith.constant 0 : i32
      %422 = tpu.memref_slice %arg8[%326, %c10_i32_159, %c0_i32_160] : memref<2x32x128xf32, #tpu.memory_space<vmem>> -> memref<1x1x128xf32, #tpu.memory_space<vmem>>
      %423 = tpu.memref_squeeze %422 : memref<1x1x128xf32, #tpu.memory_space<vmem>> -> memref<1x128xf32, #tpu.memory_space<vmem>>
      %424 = tpu.memref_slice %arg9[%326] : memref<2x!tpu.dma_semaphore, #tpu.memory_space<semaphore_mem>> -> memref<1x!tpu.dma_semaphore, #tpu.memory_space<semaphore_mem>>
      %425 = tpu.memref_squeeze %424 : memref<1x!tpu.dma_semaphore, #tpu.memory_space<semaphore_mem>> -> memref<!tpu.dma_semaphore, #tpu.memory_space<semaphore_mem>>
      tpu.enqueue_dma source(%421 : memref<1x128xf32, #tpu.memory_space<any>>) target(%423 : memref<1x128xf32, #tpu.memory_space<vmem>>) target_semaphore(%425 : memref<!tpu.dma_semaphore, #tpu.memory_space<semaphore_mem>>)
      %c11_i32_161 = arith.constant 11 : i32
      %426 = arith.addi %0, %c11_i32_161 : i32
      %427 = arith.index_cast %325 : i32 to index
      %428 = arith.index_cast %426 : i32 to index
      %429 = memref.load %arg2[%427, %428] : memref<2x32xi32, #tpu.memory_space<smem>>
      %c0_i32_162 = arith.constant 0 : i32
      %430 = tpu.memref_slice %arg3[%429, %c0_i32_162] : memref<1000x128xf32, #tpu.memory_space<any>> -> memref<1x128xf32, #tpu.memory_space<any>>
      %c11_i32_163 = arith.constant 11 : i32
      %c0_i32_164 = arith.constant 0 : i32
      %431 = tpu.memref_slice %arg8[%326, %c11_i32_163, %c0_i32_164] : memref<2x32x128xf32, #tpu.memory_space<vmem>> -> memref<1x1x128xf32, #tpu.memory_space<vmem>>
      %432 = tpu.memref_squeeze %431 : memref<1x1x128xf32, #tpu.memory_space<vmem>> -> memref<1x128xf32, #tpu.memory_space<vmem>>
      %433 = tpu.memref_slice %arg9[%326] : memref<2x!tpu.dma_semaphore, #tpu.memory_space<semaphore_mem>> -> memref<1x!tpu.dma_semaphore, #tpu.memory_space<semaphore_mem>>
      %434 = tpu.memref_squeeze %433 : memref<1x!tpu.dma_semaphore, #tpu.memory_space<semaphore_mem>> -> memref<!tpu.dma_semaphore, #tpu.memory_space<semaphore_mem>>
      tpu.enqueue_dma source(%430 : memref<1x128xf32, #tpu.memory_space<any>>) target(%432 : memref<1x128xf32, #tpu.memory_space<vmem>>) target_semaphore(%434 : memref<!tpu.dma_semaphore, #tpu.memory_space<semaphore_mem>>)
      %c12_i32_165 = arith.constant 12 : i32
      %435 = arith.addi %0, %c12_i32_165 : i32
      %436 = arith.index_cast %325 : i32 to index
      %437 = arith.index_cast %435 : i32 to index
      %438 = memref.load %arg2[%436, %437] : memref<2x32xi32, #tpu.memory_space<smem>>
      %c0_i32_166 = arith.constant 0 : i32
      %439 = tpu.memref_slice %arg3[%438, %c0_i32_166] : memref<1000x128xf32, #tpu.memory_space<any>> -> memref<1x128xf32, #tpu.memory_space<any>>
      %c12_i32_167 = arith.constant 12 : i32
      %c0_i32_168 = arith.constant 0 : i32
      %440 = tpu.memref_slice %arg8[%326, %c12_i32_167, %c0_i32_168] : memref<2x32x128xf32, #tpu.memory_space<vmem>> -> memref<1x1x128xf32, #tpu.memory_space<vmem>>
      %441 = tpu.memref_squeeze %440 : memref<1x1x128xf32, #tpu.memory_space<vmem>> -> memref<1x128xf32, #tpu.memory_space<vmem>>
      %442 = tpu.memref_slice %arg9[%326] : memref<2x!tpu.dma_semaphore, #tpu.memory_space<semaphore_mem>> -> memref<1x!tpu.dma_semaphore, #tpu.memory_space<semaphore_mem>>
      %443 = tpu.memref_squeeze %442 : memref<1x!tpu.dma_semaphore, #tpu.memory_space<semaphore_mem>> -> memref<!tpu.dma_semaphore, #tpu.memory_space<semaphore_mem>>
      tpu.enqueue_dma source(%439 : memref<1x128xf32, #tpu.memory_space<any>>) target(%441 : memref<1x128xf32, #tpu.memory_space<vmem>>) target_semaphore(%443 : memref<!tpu.dma_semaphore, #tpu.memory_space<semaphore_mem>>)
      %c13_i32_169 = arith.constant 13 : i32
      %444 = arith.addi %0, %c13_i32_169 : i32
      %445 = arith.index_cast %325 : i32 to index
      %446 = arith.index_cast %444 : i32 to index
      %447 = memref.load %arg2[%445, %446] : memref<2x32xi32, #tpu.memory_space<smem>>
      %c0_i32_170 = arith.constant 0 : i32
      %448 = tpu.memref_slice %arg3[%447, %c0_i32_170] : memref<1000x128xf32, #tpu.memory_space<any>> -> memref<1x128xf32, #tpu.memory_space<any>>
      %c13_i32_171 = arith.constant 13 : i32
      %c0_i32_172 = arith.constant 0 : i32
      %449 = tpu.memref_slice %arg8[%326, %c13_i32_171, %c0_i32_172] : memref<2x32x128xf32, #tpu.memory_space<vmem>> -> memref<1x1x128xf32, #tpu.memory_space<vmem>>
      %450 = tpu.memref_squeeze %449 : memref<1x1x128xf32, #tpu.memory_space<vmem>> -> memref<1x128xf32, #tpu.memory_space<vmem>>
      %451 = tpu.memref_slice %arg9[%326] : memref<2x!tpu.dma_semaphore, #tpu.memory_space<semaphore_mem>> -> memref<1x!tpu.dma_semaphore, #tpu.memory_space<semaphore_mem>>
      %452 = tpu.memref_squeeze %451 : memref<1x!tpu.dma_semaphore, #tpu.memory_space<semaphore_mem>> -> memref<!tpu.dma_semaphore, #tpu.memory_space<semaphore_mem>>
      tpu.enqueue_dma source(%448 : memref<1x128xf32, #tpu.memory_space<any>>) target(%450 : memref<1x128xf32, #tpu.memory_space<vmem>>) target_semaphore(%452 : memref<!tpu.dma_semaphore, #tpu.memory_space<semaphore_mem>>)
      %c14_i32_173 = arith.constant 14 : i32
      %453 = arith.addi %0, %c14_i32_173 : i32
      %454 = arith.index_cast %325 : i32 to index
      %455 = arith.index_cast %453 : i32 to index
      %456 = memref.load %arg2[%454, %455] : memref<2x32xi32, #tpu.memory_space<smem>>
      %c0_i32_174 = arith.constant 0 : i32
      %457 = tpu.memref_slice %arg3[%456, %c0_i32_174] : memref<1000x128xf32, #tpu.memory_space<any>> -> memref<1x128xf32, #tpu.memory_space<any>>
      %c14_i32_175 = arith.constant 14 : i32
      %c0_i32_176 = arith.constant 0 : i32
      %458 = tpu.memref_slice %arg8[%326, %c14_i32_175, %c0_i32_176] : memref<2x32x128xf32, #tpu.memory_space<vmem>> -> memref<1x1x128xf32, #tpu.memory_space<vmem>>
      %459 = tpu.memref_squeeze %458 : memref<1x1x128xf32, #tpu.memory_space<vmem>> -> memref<1x128xf32, #tpu.memory_space<vmem>>
      %460 = tpu.memref_slice %arg9[%326] : memref<2x!tpu.dma_semaphore, #tpu.memory_space<semaphore_mem>> -> memref<1x!tpu.dma_semaphore, #tpu.memory_space<semaphore_mem>>
      %461 = tpu.memref_squeeze %460 : memref<1x!tpu.dma_semaphore, #tpu.memory_space<semaphore_mem>> -> memref<!tpu.dma_semaphore, #tpu.memory_space<semaphore_mem>>
      tpu.enqueue_dma source(%457 : memref<1x128xf32, #tpu.memory_space<any>>) target(%459 : memref<1x128xf32, #tpu.memory_space<vmem>>) target_semaphore(%461 : memref<!tpu.dma_semaphore, #tpu.memory_space<semaphore_mem>>)
      %c15_i32_177 = arith.constant 15 : i32
      %462 = arith.addi %0, %c15_i32_177 : i32
      %463 = arith.index_cast %325 : i32 to index
      %464 = arith.index_cast %462 : i32 to index
      %465 = memref.load %arg2[%463, %464] : memref<2x32xi32, #tpu.memory_space<smem>>
      %c0_i32_178 = arith.constant 0 : i32
      %466 = tpu.memref_slice %arg3[%465, %c0_i32_178] : memref<1000x128xf32, #tpu.memory_space<any>> -> memref<1x128xf32, #tpu.memory_space<any>>
      %c15_i32_179 = arith.constant 15 : i32
      %c0_i32_180 = arith.constant 0 : i32
      %467 = tpu.memref_slice %arg8[%326, %c15_i32_179, %c0_i32_180] : memref<2x32x128xf32, #tpu.memory_space<vmem>> -> memref<1x1x128xf32, #tpu.memory_space<vmem>>
      %468 = tpu.memref_squeeze %467 : memref<1x1x128xf32, #tpu.memory_space<vmem>> -> memref<1x128xf32, #tpu.memory_space<vmem>>
      %469 = tpu.memref_slice %arg9[%326] : memref<2x!tpu.dma_semaphore, #tpu.memory_space<semaphore_mem>> -> memref<1x!tpu.dma_semaphore, #tpu.memory_space<semaphore_mem>>
      %470 = tpu.memref_squeeze %469 : memref<1x!tpu.dma_semaphore, #tpu.memory_space<semaphore_mem>> -> memref<!tpu.dma_semaphore, #tpu.memory_space<semaphore_mem>>
      tpu.enqueue_dma source(%466 : memref<1x128xf32, #tpu.memory_space<any>>) target(%468 : memref<1x128xf32, #tpu.memory_space<vmem>>) target_semaphore(%470 : memref<!tpu.dma_semaphore, #tpu.memory_space<semaphore_mem>>)
      %c16_i32_181 = arith.constant 16 : i32
      %471 = arith.addi %0, %c16_i32_181 : i32
      %472 = arith.index_cast %325 : i32 to index
      %473 = arith.index_cast %471 : i32 to index
      %474 = memref.load %arg2[%472, %473] : memref<2x32xi32, #tpu.memory_space<smem>>
      %c0_i32_182 = arith.constant 0 : i32
      %475 = tpu.memref_slice %arg3[%474, %c0_i32_182] : memref<1000x128xf32, #tpu.memory_space<any>> -> memref<1x128xf32, #tpu.memory_space<any>>
      %c16_i32_183 = arith.constant 16 : i32
      %c0_i32_184 = arith.constant 0 : i32
      %476 = tpu.memref_slice %arg8[%326, %c16_i32_183, %c0_i32_184] : memref<2x32x128xf32, #tpu.memory_space<vmem>> -> memref<1x1x128xf32, #tpu.memory_space<vmem>>
      %477 = tpu.memref_squeeze %476 : memref<1x1x128xf32, #tpu.memory_space<vmem>> -> memref<1x128xf32, #tpu.memory_space<vmem>>
      %478 = tpu.memref_slice %arg9[%326] : memref<2x!tpu.dma_semaphore, #tpu.memory_space<semaphore_mem>> -> memref<1x!tpu.dma_semaphore, #tpu.memory_space<semaphore_mem>>
      %479 = tpu.memref_squeeze %478 : memref<1x!tpu.dma_semaphore, #tpu.memory_space<semaphore_mem>> -> memref<!tpu.dma_semaphore, #tpu.memory_space<semaphore_mem>>
      tpu.enqueue_dma source(%475 : memref<1x128xf32, #tpu.memory_space<any>>) target(%477 : memref<1x128xf32, #tpu.memory_space<vmem>>) target_semaphore(%479 : memref<!tpu.dma_semaphore, #tpu.memory_space<semaphore_mem>>)
      %c17_i32_185 = arith.constant 17 : i32
      %480 = arith.addi %0, %c17_i32_185 : i32
      %481 = arith.index_cast %325 : i32 to index
      %482 = arith.index_cast %480 : i32 to index
      %483 = memref.load %arg2[%481, %482] : memref<2x32xi32, #tpu.memory_space<smem>>
      %c0_i32_186 = arith.constant 0 : i32
      %484 = tpu.memref_slice %arg3[%483, %c0_i32_186] : memref<1000x128xf32, #tpu.memory_space<any>> -> memref<1x128xf32, #tpu.memory_space<any>>
      %c17_i32_187 = arith.constant 17 : i32
      %c0_i32_188 = arith.constant 0 : i32
      %485 = tpu.memref_slice %arg8[%326, %c17_i32_187, %c0_i32_188] : memref<2x32x128xf32, #tpu.memory_space<vmem>> -> memref<1x1x128xf32, #tpu.memory_space<vmem>>
      %486 = tpu.memref_squeeze %485 : memref<1x1x128xf32, #tpu.memory_space<vmem>> -> memref<1x128xf32, #tpu.memory_space<vmem>>
      %487 = tpu.memref_slice %arg9[%326] : memref<2x!tpu.dma_semaphore, #tpu.memory_space<semaphore_mem>> -> memref<1x!tpu.dma_semaphore, #tpu.memory_space<semaphore_mem>>
      %488 = tpu.memref_squeeze %487 : memref<1x!tpu.dma_semaphore, #tpu.memory_space<semaphore_mem>> -> memref<!tpu.dma_semaphore, #tpu.memory_space<semaphore_mem>>
      tpu.enqueue_dma source(%484 : memref<1x128xf32, #tpu.memory_space<any>>) target(%486 : memref<1x128xf32, #tpu.memory_space<vmem>>) target_semaphore(%488 : memref<!tpu.dma_semaphore, #tpu.memory_space<semaphore_mem>>)
      %c18_i32_189 = arith.constant 18 : i32
      %489 = arith.addi %0, %c18_i32_189 : i32
      %490 = arith.index_cast %325 : i32 to index
      %491 = arith.index_cast %489 : i32 to index
      %492 = memref.load %arg2[%490, %491] : memref<2x32xi32, #tpu.memory_space<smem>>
      %c0_i32_190 = arith.constant 0 : i32
      %493 = tpu.memref_slice %arg3[%492, %c0_i32_190] : memref<1000x128xf32, #tpu.memory_space<any>> -> memref<1x128xf32, #tpu.memory_space<any>>
      %c18_i32_191 = arith.constant 18 : i32
      %c0_i32_192 = arith.constant 0 : i32
      %494 = tpu.memref_slice %arg8[%326, %c18_i32_191, %c0_i32_192] : memref<2x32x128xf32, #tpu.memory_space<vmem>> -> memref<1x1x128xf32, #tpu.memory_space<vmem>>
      %495 = tpu.memref_squeeze %494 : memref<1x1x128xf32, #tpu.memory_space<vmem>> -> memref<1x128xf32, #tpu.memory_space<vmem>>
      %496 = tpu.memref_slice %arg9[%326] : memref<2x!tpu.dma_semaphore, #tpu.memory_space<semaphore_mem>> -> memref<1x!tpu.dma_semaphore, #tpu.memory_space<semaphore_mem>>
      %497 = tpu.memref_squeeze %496 : memref<1x!tpu.dma_semaphore, #tpu.memory_space<semaphore_mem>> -> memref<!tpu.dma_semaphore, #tpu.memory_space<semaphore_mem>>
      tpu.enqueue_dma source(%493 : memref<1x128xf32, #tpu.memory_space<any>>) target(%495 : memref<1x128xf32, #tpu.memory_space<vmem>>) target_semaphore(%497 : memref<!tpu.dma_semaphore, #tpu.memory_space<semaphore_mem>>)
      %c19_i32_193 = arith.constant 19 : i32
      %498 = arith.addi %0, %c19_i32_193 : i32
      %499 = arith.index_cast %325 : i32 to index
      %500 = arith.index_cast %498 : i32 to index
      %501 = memref.load %arg2[%499, %500] : memref<2x32xi32, #tpu.memory_space<smem>>
      %c0_i32_194 = arith.constant 0 : i32
      %502 = tpu.memref_slice %arg3[%501, %c0_i32_194] : memref<1000x128xf32, #tpu.memory_space<any>> -> memref<1x128xf32, #tpu.memory_space<any>>
      %c19_i32_195 = arith.constant 19 : i32
      %c0_i32_196 = arith.constant 0 : i32
      %503 = tpu.memref_slice %arg8[%326, %c19_i32_195, %c0_i32_196] : memref<2x32x128xf32, #tpu.memory_space<vmem>> -> memref<1x1x128xf32, #tpu.memory_space<vmem>>
      %504 = tpu.memref_squeeze %503 : memref<1x1x128xf32, #tpu.memory_space<vmem>> -> memref<1x128xf32, #tpu.memory_space<vmem>>
      %505 = tpu.memref_slice %arg9[%326] : memref<2x!tpu.dma_semaphore, #tpu.memory_space<semaphore_mem>> -> memref<1x!tpu.dma_semaphore, #tpu.memory_space<semaphore_mem>>
      %506 = tpu.memref_squeeze %505 : memref<1x!tpu.dma_semaphore, #tpu.memory_space<semaphore_mem>> -> memref<!tpu.dma_semaphore, #tpu.memory_space<semaphore_mem>>
      tpu.enqueue_dma source(%502 : memref<1x128xf32, #tpu.memory_space<any>>) target(%504 : memref<1x128xf32, #tpu.memory_space<vmem>>) target_semaphore(%506 : memref<!tpu.dma_semaphore, #tpu.memory_space<semaphore_mem>>)
      %c20_i32_197 = arith.constant 20 : i32
      %507 = arith.addi %0, %c20_i32_197 : i32
      %508 = arith.index_cast %325 : i32 to index
      %509 = arith.index_cast %507 : i32 to index
      %510 = memref.load %arg2[%508, %509] : memref<2x32xi32, #tpu.memory_space<smem>>
      %c0_i32_198 = arith.constant 0 : i32
      %511 = tpu.memref_slice %arg3[%510, %c0_i32_198] : memref<1000x128xf32, #tpu.memory_space<any>> -> memref<1x128xf32, #tpu.memory_space<any>>
      %c20_i32_199 = arith.constant 20 : i32
      %c0_i32_200 = arith.constant 0 : i32
      %512 = tpu.memref_slice %arg8[%326, %c20_i32_199, %c0_i32_200] : memref<2x32x128xf32, #tpu.memory_space<vmem>> -> memref<1x1x128xf32, #tpu.memory_space<vmem>>
      %513 = tpu.memref_squeeze %512 : memref<1x1x128xf32, #tpu.memory_space<vmem>> -> memref<1x128xf32, #tpu.memory_space<vmem>>
      %514 = tpu.memref_slice %arg9[%326] : memref<2x!tpu.dma_semaphore, #tpu.memory_space<semaphore_mem>> -> memref<1x!tpu.dma_semaphore, #tpu.memory_space<semaphore_mem>>
      %515 = tpu.memref_squeeze %514 : memref<1x!tpu.dma_semaphore, #tpu.memory_space<semaphore_mem>> -> memref<!tpu.dma_semaphore, #tpu.memory_space<semaphore_mem>>
      tpu.enqueue_dma source(%511 : memref<1x128xf32, #tpu.memory_space<any>>) target(%513 : memref<1x128xf32, #tpu.memory_space<vmem>>) target_semaphore(%515 : memref<!tpu.dma_semaphore, #tpu.memory_space<semaphore_mem>>)
      %c21_i32_201 = arith.constant 21 : i32
      %516 = arith.addi %0, %c21_i32_201 : i32
      %517 = arith.index_cast %325 : i32 to index
      %518 = arith.index_cast %516 : i32 to index
      %519 = memref.load %arg2[%517, %518] : memref<2x32xi32, #tpu.memory_space<smem>>
      %c0_i32_202 = arith.constant 0 : i32
      %520 = tpu.memref_slice %arg3[%519, %c0_i32_202] : memref<1000x128xf32, #tpu.memory_space<any>> -> memref<1x128xf32, #tpu.memory_space<any>>
      %c21_i32_203 = arith.constant 21 : i32
      %c0_i32_204 = arith.constant 0 : i32
      %521 = tpu.memref_slice %arg8[%326, %c21_i32_203, %c0_i32_204] : memref<2x32x128xf32, #tpu.memory_space<vmem>> -> memref<1x1x128xf32, #tpu.memory_space<vmem>>
      %522 = tpu.memref_squeeze %521 : memref<1x1x128xf32, #tpu.memory_space<vmem>> -> memref<1x128xf32, #tpu.memory_space<vmem>>
      %523 = tpu.memref_slice %arg9[%326] : memref<2x!tpu.dma_semaphore, #tpu.memory_space<semaphore_mem>> -> memref<1x!tpu.dma_semaphore, #tpu.memory_space<semaphore_mem>>
      %524 = tpu.memref_squeeze %523 : memref<1x!tpu.dma_semaphore, #tpu.memory_space<semaphore_mem>> -> memref<!tpu.dma_semaphore, #tpu.memory_space<semaphore_mem>>
      tpu.enqueue_dma source(%520 : memref<1x128xf32, #tpu.memory_space<any>>) target(%522 : memref<1x128xf32, #tpu.memory_space<vmem>>) target_semaphore(%524 : memref<!tpu.dma_semaphore, #tpu.memory_space<semaphore_mem>>)
      %c22_i32_205 = arith.constant 22 : i32
      %525 = arith.addi %0, %c22_i32_205 : i32
      %526 = arith.index_cast %325 : i32 to index
      %527 = arith.index_cast %525 : i32 to index
      %528 = memref.load %arg2[%526, %527] : memref<2x32xi32, #tpu.memory_space<smem>>
      %c0_i32_206 = arith.constant 0 : i32
      %529 = tpu.memref_slice %arg3[%528, %c0_i32_206] : memref<1000x128xf32, #tpu.memory_space<any>> -> memref<1x128xf32, #tpu.memory_space<any>>
      %c22_i32_207 = arith.constant 22 : i32
      %c0_i32_208 = arith.constant 0 : i32
      %530 = tpu.memref_slice %arg8[%326, %c22_i32_207, %c0_i32_208] : memref<2x32x128xf32, #tpu.memory_space<vmem>> -> memref<1x1x128xf32, #tpu.memory_space<vmem>>
      %531 = tpu.memref_squeeze %530 : memref<1x1x128xf32, #tpu.memory_space<vmem>> -> memref<1x128xf32, #tpu.memory_space<vmem>>
      %532 = tpu.memref_slice %arg9[%326] : memref<2x!tpu.dma_semaphore, #tpu.memory_space<semaphore_mem>> -> memref<1x!tpu.dma_semaphore, #tpu.memory_space<semaphore_mem>>
      %533 = tpu.memref_squeeze %532 : memref<1x!tpu.dma_semaphore, #tpu.memory_space<semaphore_mem>> -> memref<!tpu.dma_semaphore, #tpu.memory_space<semaphore_mem>>
      tpu.enqueue_dma source(%529 : memref<1x128xf32, #tpu.memory_space<any>>) target(%531 : memref<1x128xf32, #tpu.memory_space<vmem>>) target_semaphore(%533 : memref<!tpu.dma_semaphore, #tpu.memory_space<semaphore_mem>>)
      %c23_i32_209 = arith.constant 23 : i32
      %534 = arith.addi %0, %c23_i32_209 : i32
      %535 = arith.index_cast %325 : i32 to index
      %536 = arith.index_cast %534 : i32 to index
      %537 = memref.load %arg2[%535, %536] : memref<2x32xi32, #tpu.memory_space<smem>>
      %c0_i32_210 = arith.constant 0 : i32
      %538 = tpu.memref_slice %arg3[%537, %c0_i32_210] : memref<1000x128xf32, #tpu.memory_space<any>> -> memref<1x128xf32, #tpu.memory_space<any>>
      %c23_i32_211 = arith.constant 23 : i32
      %c0_i32_212 = arith.constant 0 : i32
      %539 = tpu.memref_slice %arg8[%326, %c23_i32_211, %c0_i32_212] : memref<2x32x128xf32, #tpu.memory_space<vmem>> -> memref<1x1x128xf32, #tpu.memory_space<vmem>>
      %540 = tpu.memref_squeeze %539 : memref<1x1x128xf32, #tpu.memory_space<vmem>> -> memref<1x128xf32, #tpu.memory_space<vmem>>
      %541 = tpu.memref_slice %arg9[%326] : memref<2x!tpu.dma_semaphore, #tpu.memory_space<semaphore_mem>> -> memref<1x!tpu.dma_semaphore, #tpu.memory_space<semaphore_mem>>
      %542 = tpu.memref_squeeze %541 : memref<1x!tpu.dma_semaphore, #tpu.memory_space<semaphore_mem>> -> memref<!tpu.dma_semaphore, #tpu.memory_space<semaphore_mem>>
      tpu.enqueue_dma source(%538 : memref<1x128xf32, #tpu.memory_space<any>>) target(%540 : memref<1x128xf32, #tpu.memory_space<vmem>>) target_semaphore(%542 : memref<!tpu.dma_semaphore, #tpu.memory_space<semaphore_mem>>)
      %c24_i32_213 = arith.constant 24 : i32
      %543 = arith.addi %0, %c24_i32_213 : i32
      %544 = arith.index_cast %325 : i32 to index
      %545 = arith.index_cast %543 : i32 to index
      %546 = memref.load %arg2[%544, %545] : memref<2x32xi32, #tpu.memory_space<smem>>
      %c0_i32_214 = arith.constant 0 : i32
      %547 = tpu.memref_slice %arg3[%546, %c0_i32_214] : memref<1000x128xf32, #tpu.memory_space<any>> -> memref<1x128xf32, #tpu.memory_space<any>>
      %c24_i32_215 = arith.constant 24 : i32
      %c0_i32_216 = arith.constant 0 : i32
      %548 = tpu.memref_slice %arg8[%326, %c24_i32_215, %c0_i32_216] : memref<2x32x128xf32, #tpu.memory_space<vmem>> -> memref<1x1x128xf32, #tpu.memory_space<vmem>>
      %549 = tpu.memref_squeeze %548 : memref<1x1x128xf32, #tpu.memory_space<vmem>> -> memref<1x128xf32, #tpu.memory_space<vmem>>
      %550 = tpu.memref_slice %arg9[%326] : memref<2x!tpu.dma_semaphore, #tpu.memory_space<semaphore_mem>> -> memref<1x!tpu.dma_semaphore, #tpu.memory_space<semaphore_mem>>
      %551 = tpu.memref_squeeze %550 : memref<1x!tpu.dma_semaphore, #tpu.memory_space<semaphore_mem>> -> memref<!tpu.dma_semaphore, #tpu.memory_space<semaphore_mem>>
      tpu.enqueue_dma source(%547 : memref<1x128xf32, #tpu.memory_space<any>>) target(%549 : memref<1x128xf32, #tpu.memory_space<vmem>>) target_semaphore(%551 : memref<!tpu.dma_semaphore, #tpu.memory_space<semaphore_mem>>)
      %c25_i32_217 = arith.constant 25 : i32
      %552 = arith.addi %0, %c25_i32_217 : i32
      %553 = arith.index_cast %325 : i32 to index
      %554 = arith.index_cast %552 : i32 to index
      %555 = memref.load %arg2[%553, %554] : memref<2x32xi32, #tpu.memory_space<smem>>
      %c0_i32_218 = arith.constant 0 : i32
      %556 = tpu.memref_slice %arg3[%555, %c0_i32_218] : memref<1000x128xf32, #tpu.memory_space<any>> -> memref<1x128xf32, #tpu.memory_space<any>>
      %c25_i32_219 = arith.constant 25 : i32
      %c0_i32_220 = arith.constant 0 : i32
      %557 = tpu.memref_slice %arg8[%326, %c25_i32_219, %c0_i32_220] : memref<2x32x128xf32, #tpu.memory_space<vmem>> -> memref<1x1x128xf32, #tpu.memory_space<vmem>>
      %558 = tpu.memref_squeeze %557 : memref<1x1x128xf32, #tpu.memory_space<vmem>> -> memref<1x128xf32, #tpu.memory_space<vmem>>
      %559 = tpu.memref_slice %arg9[%326] : memref<2x!tpu.dma_semaphore, #tpu.memory_space<semaphore_mem>> -> memref<1x!tpu.dma_semaphore, #tpu.memory_space<semaphore_mem>>
      %560 = tpu.memref_squeeze %559 : memref<1x!tpu.dma_semaphore, #tpu.memory_space<semaphore_mem>> -> memref<!tpu.dma_semaphore, #tpu.memory_space<semaphore_mem>>
      tpu.enqueue_dma source(%556 : memref<1x128xf32, #tpu.memory_space<any>>) target(%558 : memref<1x128xf32, #tpu.memory_space<vmem>>) target_semaphore(%560 : memref<!tpu.dma_semaphore, #tpu.memory_space<semaphore_mem>>)
      %c26_i32_221 = arith.constant 26 : i32
      %561 = arith.addi %0, %c26_i32_221 : i32
      %562 = arith.index_cast %325 : i32 to index
      %563 = arith.index_cast %561 : i32 to index
      %564 = memref.load %arg2[%562, %563] : memref<2x32xi32, #tpu.memory_space<smem>>
      %c0_i32_222 = arith.constant 0 : i32
      %565 = tpu.memref_slice %arg3[%564, %c0_i32_222] : memref<1000x128xf32, #tpu.memory_space<any>> -> memref<1x128xf32, #tpu.memory_space<any>>
      %c26_i32_223 = arith.constant 26 : i32
      %c0_i32_224 = arith.constant 0 : i32
      %566 = tpu.memref_slice %arg8[%326, %c26_i32_223, %c0_i32_224] : memref<2x32x128xf32, #tpu.memory_space<vmem>> -> memref<1x1x128xf32, #tpu.memory_space<vmem>>
      %567 = tpu.memref_squeeze %566 : memref<1x1x128xf32, #tpu.memory_space<vmem>> -> memref<1x128xf32, #tpu.memory_space<vmem>>
      %568 = tpu.memref_slice %arg9[%326] : memref<2x!tpu.dma_semaphore, #tpu.memory_space<semaphore_mem>> -> memref<1x!tpu.dma_semaphore, #tpu.memory_space<semaphore_mem>>
      %569 = tpu.memref_squeeze %568 : memref<1x!tpu.dma_semaphore, #tpu.memory_space<semaphore_mem>> -> memref<!tpu.dma_semaphore, #tpu.memory_space<semaphore_mem>>
      tpu.enqueue_dma source(%565 : memref<1x128xf32, #tpu.memory_space<any>>) target(%567 : memref<1x128xf32, #tpu.memory_space<vmem>>) target_semaphore(%569 : memref<!tpu.dma_semaphore, #tpu.memory_space<semaphore_mem>>)
      %c27_i32_225 = arith.constant 27 : i32
      %570 = arith.addi %0, %c27_i32_225 : i32
      %571 = arith.index_cast %325 : i32 to index
      %572 = arith.index_cast %570 : i32 to index
      %573 = memref.load %arg2[%571, %572] : memref<2x32xi32, #tpu.memory_space<smem>>
      %c0_i32_226 = arith.constant 0 : i32
      %574 = tpu.memref_slice %arg3[%573, %c0_i32_226] : memref<1000x128xf32, #tpu.memory_space<any>> -> memref<1x128xf32, #tpu.memory_space<any>>
      %c27_i32_227 = arith.constant 27 : i32
      %c0_i32_228 = arith.constant 0 : i32
      %575 = tpu.memref_slice %arg8[%326, %c27_i32_227, %c0_i32_228] : memref<2x32x128xf32, #tpu.memory_space<vmem>> -> memref<1x1x128xf32, #tpu.memory_space<vmem>>
      %576 = tpu.memref_squeeze %575 : memref<1x1x128xf32, #tpu.memory_space<vmem>> -> memref<1x128xf32, #tpu.memory_space<vmem>>
      %577 = tpu.memref_slice %arg9[%326] : memref<2x!tpu.dma_semaphore, #tpu.memory_space<semaphore_mem>> -> memref<1x!tpu.dma_semaphore, #tpu.memory_space<semaphore_mem>>
      %578 = tpu.memref_squeeze %577 : memref<1x!tpu.dma_semaphore, #tpu.memory_space<semaphore_mem>> -> memref<!tpu.dma_semaphore, #tpu.memory_space<semaphore_mem>>
      tpu.enqueue_dma source(%574 : memref<1x128xf32, #tpu.memory_space<any>>) target(%576 : memref<1x128xf32, #tpu.memory_space<vmem>>) target_semaphore(%578 : memref<!tpu.dma_semaphore, #tpu.memory_space<semaphore_mem>>)
      %c28_i32_229 = arith.constant 28 : i32
      %579 = arith.addi %0, %c28_i32_229 : i32
      %580 = arith.index_cast %325 : i32 to index
      %581 = arith.index_cast %579 : i32 to index
      %582 = memref.load %arg2[%580, %581] : memref<2x32xi32, #tpu.memory_space<smem>>
      %c0_i32_230 = arith.constant 0 : i32
      %583 = tpu.memref_slice %arg3[%582, %c0_i32_230] : memref<1000x128xf32, #tpu.memory_space<any>> -> memref<1x128xf32, #tpu.memory_space<any>>
      %c28_i32_231 = arith.constant 28 : i32
      %c0_i32_232 = arith.constant 0 : i32
      %584 = tpu.memref_slice %arg8[%326, %c28_i32_231, %c0_i32_232] : memref<2x32x128xf32, #tpu.memory_space<vmem>> -> memref<1x1x128xf32, #tpu.memory_space<vmem>>
      %585 = tpu.memref_squeeze %584 : memref<1x1x128xf32, #tpu.memory_space<vmem>> -> memref<1x128xf32, #tpu.memory_space<vmem>>
      %586 = tpu.memref_slice %arg9[%326] : memref<2x!tpu.dma_semaphore, #tpu.memory_space<semaphore_mem>> -> memref<1x!tpu.dma_semaphore, #tpu.memory_space<semaphore_mem>>
      %587 = tpu.memref_squeeze %586 : memref<1x!tpu.dma_semaphore, #tpu.memory_space<semaphore_mem>> -> memref<!tpu.dma_semaphore, #tpu.memory_space<semaphore_mem>>
      tpu.enqueue_dma source(%583 : memref<1x128xf32, #tpu.memory_space<any>>) target(%585 : memref<1x128xf32, #tpu.memory_space<vmem>>) target_semaphore(%587 : memref<!tpu.dma_semaphore, #tpu.memory_space<semaphore_mem>>)
      %c29_i32_233 = arith.constant 29 : i32
      %588 = arith.addi %0, %c29_i32_233 : i32
      %589 = arith.index_cast %325 : i32 to index
      %590 = arith.index_cast %588 : i32 to index
      %591 = memref.load %arg2[%589, %590] : memref<2x32xi32, #tpu.memory_space<smem>>
      %c0_i32_234 = arith.constant 0 : i32
      %592 = tpu.memref_slice %arg3[%591, %c0_i32_234] : memref<1000x128xf32, #tpu.memory_space<any>> -> memref<1x128xf32, #tpu.memory_space<any>>
      %c29_i32_235 = arith.constant 29 : i32
      %c0_i32_236 = arith.constant 0 : i32
      %593 = tpu.memref_slice %arg8[%326, %c29_i32_235, %c0_i32_236] : memref<2x32x128xf32, #tpu.memory_space<vmem>> -> memref<1x1x128xf32, #tpu.memory_space<vmem>>
      %594 = tpu.memref_squeeze %593 : memref<1x1x128xf32, #tpu.memory_space<vmem>> -> memref<1x128xf32, #tpu.memory_space<vmem>>
      %595 = tpu.memref_slice %arg9[%326] : memref<2x!tpu.dma_semaphore, #tpu.memory_space<semaphore_mem>> -> memref<1x!tpu.dma_semaphore, #tpu.memory_space<semaphore_mem>>
      %596 = tpu.memref_squeeze %595 : memref<1x!tpu.dma_semaphore, #tpu.memory_space<semaphore_mem>> -> memref<!tpu.dma_semaphore, #tpu.memory_space<semaphore_mem>>
      tpu.enqueue_dma source(%592 : memref<1x128xf32, #tpu.memory_space<any>>) target(%594 : memref<1x128xf32, #tpu.memory_space<vmem>>) target_semaphore(%596 : memref<!tpu.dma_semaphore, #tpu.memory_space<semaphore_mem>>)
      %c30_i32_237 = arith.constant 30 : i32
      %597 = arith.addi %0, %c30_i32_237 : i32
      %598 = arith.index_cast %325 : i32 to index
      %599 = arith.index_cast %597 : i32 to index
      %600 = memref.load %arg2[%598, %599] : memref<2x32xi32, #tpu.memory_space<smem>>
      %c0_i32_238 = arith.constant 0 : i32
      %601 = tpu.memref_slice %arg3[%600, %c0_i32_238] : memref<1000x128xf32, #tpu.memory_space<any>> -> memref<1x128xf32, #tpu.memory_space<any>>
      %c30_i32_239 = arith.constant 30 : i32
      %c0_i32_240 = arith.constant 0 : i32
      %602 = tpu.memref_slice %arg8[%326, %c30_i32_239, %c0_i32_240] : memref<2x32x128xf32, #tpu.memory_space<vmem>> -> memref<1x1x128xf32, #tpu.memory_space<vmem>>
      %603 = tpu.memref_squeeze %602 : memref<1x1x128xf32, #tpu.memory_space<vmem>> -> memref<1x128xf32, #tpu.memory_space<vmem>>
      %604 = tpu.memref_slice %arg9[%326] : memref<2x!tpu.dma_semaphore, #tpu.memory_space<semaphore_mem>> -> memref<1x!tpu.dma_semaphore, #tpu.memory_space<semaphore_mem>>
      %605 = tpu.memref_squeeze %604 : memref<1x!tpu.dma_semaphore, #tpu.memory_space<semaphore_mem>> -> memref<!tpu.dma_semaphore, #tpu.memory_space<semaphore_mem>>
      tpu.enqueue_dma source(%601 : memref<1x128xf32, #tpu.memory_space<any>>) target(%603 : memref<1x128xf32, #tpu.memory_space<vmem>>) target_semaphore(%605 : memref<!tpu.dma_semaphore, #tpu.memory_space<semaphore_mem>>)
      %c31_i32_241 = arith.constant 31 : i32
      %606 = arith.addi %0, %c31_i32_241 : i32
      %607 = arith.index_cast %325 : i32 to index
      %608 = arith.index_cast %606 : i32 to index
      %609 = memref.load %arg2[%607, %608] : memref<2x32xi32, #tpu.memory_space<smem>>
      %c0_i32_242 = arith.constant 0 : i32
      %610 = tpu.memref_slice %arg3[%609, %c0_i32_242] : memref<1000x128xf32, #tpu.memory_space<any>> -> memref<1x128xf32, #tpu.memory_space<any>>
      %c31_i32_243 = arith.constant 31 : i32
      %c0_i32_244 = arith.constant 0 : i32
      %611 = tpu.memref_slice %arg8[%326, %c31_i32_243, %c0_i32_244] : memref<2x32x128xf32, #tpu.memory_space<vmem>> -> memref<1x1x128xf32, #tpu.memory_space<vmem>>
      %612 = tpu.memref_squeeze %611 : memref<1x1x128xf32, #tpu.memory_space<vmem>> -> memref<1x128xf32, #tpu.memory_space<vmem>>
      %613 = tpu.memref_slice %arg9[%326] : memref<2x!tpu.dma_semaphore, #tpu.memory_space<semaphore_mem>> -> memref<1x!tpu.dma_semaphore, #tpu.memory_space<semaphore_mem>>
      %614 = tpu.memref_squeeze %613 : memref<1x!tpu.dma_semaphore, #tpu.memory_space<semaphore_mem>> -> memref<!tpu.dma_semaphore, #tpu.memory_space<semaphore_mem>>
      tpu.enqueue_dma source(%610 : memref<1x128xf32, #tpu.memory_space<any>>) target(%612 : memref<1x128xf32, #tpu.memory_space<vmem>>) target_semaphore(%614 : memref<!tpu.dma_semaphore, #tpu.memory_space<semaphore_mem>>)
    } else {
    }
    %c0_i32_3 = arith.constant 0 : i32
    %9 = arith.addi %0, %c0_i32_3 : i32
    %10 = arith.index_cast %arg1 : i32 to index
    %11 = arith.index_cast %9 : i32 to index
    %12 = memref.load %arg2[%10, %11] : memref<2x32xi32, #tpu.memory_space<smem>>
    %c1_i32_4 = arith.constant 1 : i32
    %13 = arith.addi %0, %c1_i32_4 : i32
    %14 = arith.index_cast %arg1 : i32 to index
    %15 = arith.index_cast %13 : i32 to index
    %16 = memref.load %arg2[%14, %15] : memref<2x32xi32, #tpu.memory_space<smem>>
    %c2_i32_5 = arith.constant 2 : i32
    %17 = arith.addi %0, %c2_i32_5 : i32
    %18 = arith.index_cast %arg1 : i32 to index
    %19 = arith.index_cast %17 : i32 to index
    %20 = memref.load %arg2[%18, %19] : memref<2x32xi32, #tpu.memory_space<smem>>
    %c3_i32 = arith.constant 3 : i32
    %21 = arith.addi %0, %c3_i32 : i32
    %22 = arith.index_cast %arg1 : i32 to index
    %23 = arith.index_cast %21 : i32 to index
    %24 = memref.load %arg2[%22, %23] : memref<2x32xi32, #tpu.memory_space<smem>>
    %c4_i32 = arith.constant 4 : i32
    %25 = arith.addi %0, %c4_i32 : i32
    %26 = arith.index_cast %arg1 : i32 to index
    %27 = arith.index_cast %25 : i32 to index
    %28 = memref.load %arg2[%26, %27] : memref<2x32xi32, #tpu.memory_space<smem>>
    %c5_i32 = arith.constant 5 : i32
    %29 = arith.addi %0, %c5_i32 : i32
    %30 = arith.index_cast %arg1 : i32 to index
    %31 = arith.index_cast %29 : i32 to index
    %32 = memref.load %arg2[%30, %31] : memref<2x32xi32, #tpu.memory_space<smem>>
    %c6_i32 = arith.constant 6 : i32
    %33 = arith.addi %0, %c6_i32 : i32
    %34 = arith.index_cast %arg1 : i32 to index
    %35 = arith.index_cast %33 : i32 to index
    %36 = memref.load %arg2[%34, %35] : memref<2x32xi32, #tpu.memory_space<smem>>
    %c7_i32 = arith.constant 7 : i32
    %37 = arith.addi %0, %c7_i32 : i32
    %38 = arith.index_cast %arg1 : i32 to index
    %39 = arith.index_cast %37 : i32 to index
    %40 = memref.load %arg2[%38, %39] : memref<2x32xi32, #tpu.memory_space<smem>>
    %c8_i32 = arith.constant 8 : i32
    %41 = arith.addi %0, %c8_i32 : i32
    %42 = arith.index_cast %arg1 : i32 to index
    %43 = arith.index_cast %41 : i32 to index
    %44 = memref.load %arg2[%42, %43] : memref<2x32xi32, #tpu.memory_space<smem>>
    %c9_i32 = arith.constant 9 : i32
    %45 = arith.addi %0, %c9_i32 : i32
    %46 = arith.index_cast %arg1 : i32 to index
    %47 = arith.index_cast %45 : i32 to index
    %48 = memref.load %arg2[%46, %47] : memref<2x32xi32, #tpu.memory_space<smem>>
    %c10_i32 = arith.constant 10 : i32
    %49 = arith.addi %0, %c10_i32 : i32
    %50 = arith.index_cast %arg1 : i32 to index
    %51 = arith.index_cast %49 : i32 to index
    %52 = memref.load %arg2[%50, %51] : memref<2x32xi32, #tpu.memory_space<smem>>
    %c11_i32 = arith.constant 11 : i32
    %53 = arith.addi %0, %c11_i32 : i32
    %54 = arith.index_cast %arg1 : i32 to index
    %55 = arith.index_cast %53 : i32 to index
    %56 = memref.load %arg2[%54, %55] : memref<2x32xi32, #tpu.memory_space<smem>>
    %c12_i32 = arith.constant 12 : i32
    %57 = arith.addi %0, %c12_i32 : i32
    %58 = arith.index_cast %arg1 : i32 to index
    %59 = arith.index_cast %57 : i32 to index
    %60 = memref.load %arg2[%58, %59] : memref<2x32xi32, #tpu.memory_space<smem>>
    %c13_i32 = arith.constant 13 : i32
    %61 = arith.addi %0, %c13_i32 : i32
    %62 = arith.index_cast %arg1 : i32 to index
    %63 = arith.index_cast %61 : i32 to index
    %64 = memref.load %arg2[%62, %63] : memref<2x32xi32, #tpu.memory_space<smem>>
    %c14_i32 = arith.constant 14 : i32
    %65 = arith.addi %0, %c14_i32 : i32
    %66 = arith.index_cast %arg1 : i32 to index
    %67 = arith.index_cast %65 : i32 to index
    %68 = memref.load %arg2[%66, %67] : memref<2x32xi32, #tpu.memory_space<smem>>
    %c15_i32 = arith.constant 15 : i32
    %69 = arith.addi %0, %c15_i32 : i32
    %70 = arith.index_cast %arg1 : i32 to index
    %71 = arith.index_cast %69 : i32 to index
    %72 = memref.load %arg2[%70, %71] : memref<2x32xi32, #tpu.memory_space<smem>>
    %c16_i32 = arith.constant 16 : i32
    %73 = arith.addi %0, %c16_i32 : i32
    %74 = arith.index_cast %arg1 : i32 to index
    %75 = arith.index_cast %73 : i32 to index
    %76 = memref.load %arg2[%74, %75] : memref<2x32xi32, #tpu.memory_space<smem>>
    %c17_i32 = arith.constant 17 : i32
    %77 = arith.addi %0, %c17_i32 : i32
    %78 = arith.index_cast %arg1 : i32 to index
    %79 = arith.index_cast %77 : i32 to index
    %80 = memref.load %arg2[%78, %79] : memref<2x32xi32, #tpu.memory_space<smem>>
    %c18_i32 = arith.constant 18 : i32
    %81 = arith.addi %0, %c18_i32 : i32
    %82 = arith.index_cast %arg1 : i32 to index
    %83 = arith.index_cast %81 : i32 to index
    %84 = memref.load %arg2[%82, %83] : memref<2x32xi32, #tpu.memory_space<smem>>
    %c19_i32 = arith.constant 19 : i32
    %85 = arith.addi %0, %c19_i32 : i32
    %86 = arith.index_cast %arg1 : i32 to index
    %87 = arith.index_cast %85 : i32 to index
    %88 = memref.load %arg2[%86, %87] : memref<2x32xi32, #tpu.memory_space<smem>>
    %c20_i32 = arith.constant 20 : i32
    %89 = arith.addi %0, %c20_i32 : i32
    %90 = arith.index_cast %arg1 : i32 to index
    %91 = arith.index_cast %89 : i32 to index
    %92 = memref.load %arg2[%90, %91] : memref<2x32xi32, #tpu.memory_space<smem>>
    %c21_i32 = arith.constant 21 : i32
    %93 = arith.addi %0, %c21_i32 : i32
    %94 = arith.index_cast %arg1 : i32 to index
    %95 = arith.index_cast %93 : i32 to index
    %96 = memref.load %arg2[%94, %95] : memref<2x32xi32, #tpu.memory_space<smem>>
    %c22_i32 = arith.constant 22 : i32
    %97 = arith.addi %0, %c22_i32 : i32
    %98 = arith.index_cast %arg1 : i32 to index
    %99 = arith.index_cast %97 : i32 to index
    %100 = memref.load %arg2[%98, %99] : memref<2x32xi32, #tpu.memory_space<smem>>
    %c23_i32 = arith.constant 23 : i32
    %101 = arith.addi %0, %c23_i32 : i32
    %102 = arith.index_cast %arg1 : i32 to index
    %103 = arith.index_cast %101 : i32 to index
    %104 = memref.load %arg2[%102, %103] : memref<2x32xi32, #tpu.memory_space<smem>>
    %c24_i32 = arith.constant 24 : i32
    %105 = arith.addi %0, %c24_i32 : i32
    %106 = arith.index_cast %arg1 : i32 to index
    %107 = arith.index_cast %105 : i32 to index
    %108 = memref.load %arg2[%106, %107] : memref<2x32xi32, #tpu.memory_space<smem>>
    %c25_i32 = arith.constant 25 : i32
    %109 = arith.addi %0, %c25_i32 : i32
    %110 = arith.index_cast %arg1 : i32 to index
    %111 = arith.index_cast %109 : i32 to index
    %112 = memref.load %arg2[%110, %111] : memref<2x32xi32, #tpu.memory_space<smem>>
    %c26_i32 = arith.constant 26 : i32
    %113 = arith.addi %0, %c26_i32 : i32
    %114 = arith.index_cast %arg1 : i32 to index
    %115 = arith.index_cast %113 : i32 to index
    %116 = memref.load %arg2[%114, %115] : memref<2x32xi32, #tpu.memory_space<smem>>
    %c27_i32 = arith.constant 27 : i32
    %117 = arith.addi %0, %c27_i32 : i32
    %118 = arith.index_cast %arg1 : i32 to index
    %119 = arith.index_cast %117 : i32 to index
    %120 = memref.load %arg2[%118, %119] : memref<2x32xi32, #tpu.memory_space<smem>>
    %c28_i32 = arith.constant 28 : i32
    %121 = arith.addi %0, %c28_i32 : i32
    %122 = arith.index_cast %arg1 : i32 to index
    %123 = arith.index_cast %121 : i32 to index
    %124 = memref.load %arg2[%122, %123] : memref<2x32xi32, #tpu.memory_space<smem>>
    %c29_i32 = arith.constant 29 : i32
    %125 = arith.addi %0, %c29_i32 : i32
    %126 = arith.index_cast %arg1 : i32 to index
    %127 = arith.index_cast %125 : i32 to index
    %128 = memref.load %arg2[%126, %127] : memref<2x32xi32, #tpu.memory_space<smem>>
    %c30_i32 = arith.constant 30 : i32
    %129 = arith.addi %0, %c30_i32 : i32
    %130 = arith.index_cast %arg1 : i32 to index
    %131 = arith.index_cast %129 : i32 to index
    %132 = memref.load %arg2[%130, %131] : memref<2x32xi32, #tpu.memory_space<smem>>
    %c31_i32 = arith.constant 31 : i32
    %133 = arith.addi %0, %c31_i32 : i32
    %134 = arith.index_cast %arg1 : i32 to index
    %135 = arith.index_cast %133 : i32 to index
    %136 = memref.load %arg2[%134, %135] : memref<2x32xi32, #tpu.memory_space<smem>>
    %c0_i32_6 = arith.constant 0 : i32
    %137 = tpu.memref_slice %arg3[%12, %c0_i32_6] : memref<1000x128xf32, #tpu.memory_space<any>> -> memref<1x128xf32, #tpu.memory_space<any>>
    %c0_i32_7 = arith.constant 0 : i32
    %c0_i32_8 = arith.constant 0 : i32
    %138 = tpu.memref_slice %arg8[%1, %c0_i32_7, %c0_i32_8] : memref<2x32x128xf32, #tpu.memory_space<vmem>> -> memref<1x1x128xf32, #tpu.memory_space<vmem>>
    %139 = tpu.memref_squeeze %138 : memref<1x1x128xf32, #tpu.memory_space<vmem>> -> memref<1x128xf32, #tpu.memory_space<vmem>>
    %140 = tpu.memref_slice %arg9[%1] : memref<2x!tpu.dma_semaphore, #tpu.memory_space<semaphore_mem>> -> memref<1x!tpu.dma_semaphore, #tpu.memory_space<semaphore_mem>>
    %141 = tpu.memref_squeeze %140 : memref<1x!tpu.dma_semaphore, #tpu.memory_space<semaphore_mem>> -> memref<!tpu.dma_semaphore, #tpu.memory_space<semaphore_mem>>
    tpu.wait_dma2 semaphore(%141 : memref<!tpu.dma_semaphore, #tpu.memory_space<semaphore_mem>>) src(%137 : memref<1x128xf32, #tpu.memory_space<any>>) dst(%139 : memref<1x128xf32, #tpu.memory_space<vmem>>)
    %c0_i32_9 = arith.constant 0 : i32
    %142 = tpu.memref_slice %arg3[%16, %c0_i32_9] : memref<1000x128xf32, #tpu.memory_space<any>> -> memref<1x128xf32, #tpu.memory_space<any>>
    %c1_i32_10 = arith.constant 1 : i32
    %c0_i32_11 = arith.constant 0 : i32
    %143 = tpu.memref_slice %arg8[%1, %c1_i32_10, %c0_i32_11] : memref<2x32x128xf32, #tpu.memory_space<vmem>> -> memref<1x1x128xf32, #tpu.memory_space<vmem>>
    %144 = tpu.memref_squeeze %143 : memref<1x1x128xf32, #tpu.memory_space<vmem>> -> memref<1x128xf32, #tpu.memory_space<vmem>>
    %145 = tpu.memref_slice %arg9[%1] : memref<2x!tpu.dma_semaphore, #tpu.memory_space<semaphore_mem>> -> memref<1x!tpu.dma_semaphore, #tpu.memory_space<semaphore_mem>>
    %146 = tpu.memref_squeeze %145 : memref<1x!tpu.dma_semaphore, #tpu.memory_space<semaphore_mem>> -> memref<!tpu.dma_semaphore, #tpu.memory_space<semaphore_mem>>
    tpu.wait_dma2 semaphore(%146 : memref<!tpu.dma_semaphore, #tpu.memory_space<semaphore_mem>>) src(%142 : memref<1x128xf32, #tpu.memory_space<any>>) dst(%144 : memref<1x128xf32, #tpu.memory_space<vmem>>)
    %c0_i32_12 = arith.constant 0 : i32
    %147 = tpu.memref_slice %arg3[%20, %c0_i32_12] : memref<1000x128xf32, #tpu.memory_space<any>> -> memref<1x128xf32, #tpu.memory_space<any>>
    %c2_i32_13 = arith.constant 2 : i32
    %c0_i32_14 = arith.constant 0 : i32
    %148 = tpu.memref_slice %arg8[%1, %c2_i32_13, %c0_i32_14] : memref<2x32x128xf32, #tpu.memory_space<vmem>> -> memref<1x1x128xf32, #tpu.memory_space<vmem>>
    %149 = tpu.memref_squeeze %148 : memref<1x1x128xf32, #tpu.memory_space<vmem>> -> memref<1x128xf32, #tpu.memory_space<vmem>>
    %150 = tpu.memref_slice %arg9[%1] : memref<2x!tpu.dma_semaphore, #tpu.memory_space<semaphore_mem>> -> memref<1x!tpu.dma_semaphore, #tpu.memory_space<semaphore_mem>>
    %151 = tpu.memref_squeeze %150 : memref<1x!tpu.dma_semaphore, #tpu.memory_space<semaphore_mem>> -> memref<!tpu.dma_semaphore, #tpu.memory_space<semaphore_mem>>
    tpu.wait_dma2 semaphore(%151 : memref<!tpu.dma_semaphore, #tpu.memory_space<semaphore_mem>>) src(%147 : memref<1x128xf32, #tpu.memory_space<any>>) dst(%149 : memref<1x128xf32, #tpu.memory_space<vmem>>)
    %c0_i32_15 = arith.constant 0 : i32
    %152 = tpu.memref_slice %arg3[%24, %c0_i32_15] : memref<1000x128xf32, #tpu.memory_space<any>> -> memref<1x128xf32, #tpu.memory_space<any>>
    %c3_i32_16 = arith.constant 3 : i32
    %c0_i32_17 = arith.constant 0 : i32
    %153 = tpu.memref_slice %arg8[%1, %c3_i32_16, %c0_i32_17] : memref<2x32x128xf32, #tpu.memory_space<vmem>> -> memref<1x1x128xf32, #tpu.memory_space<vmem>>
    %154 = tpu.memref_squeeze %153 : memref<1x1x128xf32, #tpu.memory_space<vmem>> -> memref<1x128xf32, #tpu.memory_space<vmem>>
    %155 = tpu.memref_slice %arg9[%1] : memref<2x!tpu.dma_semaphore, #tpu.memory_space<semaphore_mem>> -> memref<1x!tpu.dma_semaphore, #tpu.memory_space<semaphore_mem>>
    %156 = tpu.memref_squeeze %155 : memref<1x!tpu.dma_semaphore, #tpu.memory_space<semaphore_mem>> -> memref<!tpu.dma_semaphore, #tpu.memory_space<semaphore_mem>>
    tpu.wait_dma2 semaphore(%156 : memref<!tpu.dma_semaphore, #tpu.memory_space<semaphore_mem>>) src(%152 : memref<1x128xf32, #tpu.memory_space<any>>) dst(%154 : memref<1x128xf32, #tpu.memory_space<vmem>>)
    %c0_i32_18 = arith.constant 0 : i32
    %157 = tpu.memref_slice %arg3[%28, %c0_i32_18] : memref<1000x128xf32, #tpu.memory_space<any>> -> memref<1x128xf32, #tpu.memory_space<any>>
    %c4_i32_19 = arith.constant 4 : i32
    %c0_i32_20 = arith.constant 0 : i32
    %158 = tpu.memref_slice %arg8[%1, %c4_i32_19, %c0_i32_20] : memref<2x32x128xf32, #tpu.memory_space<vmem>> -> memref<1x1x128xf32, #tpu.memory_space<vmem>>
    %159 = tpu.memref_squeeze %158 : memref<1x1x128xf32, #tpu.memory_space<vmem>> -> memref<1x128xf32, #tpu.memory_space<vmem>>
    %160 = tpu.memref_slice %arg9[%1] : memref<2x!tpu.dma_semaphore, #tpu.memory_space<semaphore_mem>> -> memref<1x!tpu.dma_semaphore, #tpu.memory_space<semaphore_mem>>
    %161 = tpu.memref_squeeze %160 : memref<1x!tpu.dma_semaphore, #tpu.memory_space<semaphore_mem>> -> memref<!tpu.dma_semaphore, #tpu.memory_space<semaphore_mem>>
    tpu.wait_dma2 semaphore(%161 : memref<!tpu.dma_semaphore, #tpu.memory_space<semaphore_mem>>) src(%157 : memref<1x128xf32, #tpu.memory_space<any>>) dst(%159 : memref<1x128xf32, #tpu.memory_space<vmem>>)
    %c0_i32_21 = arith.constant 0 : i32
    %162 = tpu.memref_slice %arg3[%32, %c0_i32_21] : memref<1000x128xf32, #tpu.memory_space<any>> -> memref<1x128xf32, #tpu.memory_space<any>>
    %c5_i32_22 = arith.constant 5 : i32
    %c0_i32_23 = arith.constant 0 : i32
    %163 = tpu.memref_slice %arg8[%1, %c5_i32_22, %c0_i32_23] : memref<2x32x128xf32, #tpu.memory_space<vmem>> -> memref<1x1x128xf32, #tpu.memory_space<vmem>>
    %164 = tpu.memref_squeeze %163 : memref<1x1x128xf32, #tpu.memory_space<vmem>> -> memref<1x128xf32, #tpu.memory_space<vmem>>
    %165 = tpu.memref_slice %arg9[%1] : memref<2x!tpu.dma_semaphore, #tpu.memory_space<semaphore_mem>> -> memref<1x!tpu.dma_semaphore, #tpu.memory_space<semaphore_mem>>
    %166 = tpu.memref_squeeze %165 : memref<1x!tpu.dma_semaphore, #tpu.memory_space<semaphore_mem>> -> memref<!tpu.dma_semaphore, #tpu.memory_space<semaphore_mem>>
    tpu.wait_dma2 semaphore(%166 : memref<!tpu.dma_semaphore, #tpu.memory_space<semaphore_mem>>) src(%162 : memref<1x128xf32, #tpu.memory_space<any>>) dst(%164 : memref<1x128xf32, #tpu.memory_space<vmem>>)
    %c0_i32_24 = arith.constant 0 : i32
    %167 = tpu.memref_slice %arg3[%36, %c0_i32_24] : memref<1000x128xf32, #tpu.memory_space<any>> -> memref<1x128xf32, #tpu.memory_space<any>>
    %c6_i32_25 = arith.constant 6 : i32
    %c0_i32_26 = arith.constant 0 : i32
    %168 = tpu.memref_slice %arg8[%1, %c6_i32_25, %c0_i32_26] : memref<2x32x128xf32, #tpu.memory_space<vmem>> -> memref<1x1x128xf32, #tpu.memory_space<vmem>>
    %169 = tpu.memref_squeeze %168 : memref<1x1x128xf32, #tpu.memory_space<vmem>> -> memref<1x128xf32, #tpu.memory_space<vmem>>
    %170 = tpu.memref_slice %arg9[%1] : memref<2x!tpu.dma_semaphore, #tpu.memory_space<semaphore_mem>> -> memref<1x!tpu.dma_semaphore, #tpu.memory_space<semaphore_mem>>
    %171 = tpu.memref_squeeze %170 : memref<1x!tpu.dma_semaphore, #tpu.memory_space<semaphore_mem>> -> memref<!tpu.dma_semaphore, #tpu.memory_space<semaphore_mem>>
    tpu.wait_dma2 semaphore(%171 : memref<!tpu.dma_semaphore, #tpu.memory_space<semaphore_mem>>) src(%167 : memref<1x128xf32, #tpu.memory_space<any>>) dst(%169 : memref<1x128xf32, #tpu.memory_space<vmem>>)
    %c0_i32_27 = arith.constant 0 : i32
    %172 = tpu.memref_slice %arg3[%40, %c0_i32_27] : memref<1000x128xf32, #tpu.memory_space<any>> -> memref<1x128xf32, #tpu.memory_space<any>>
    %c7_i32_28 = arith.constant 7 : i32
    %c0_i32_29 = arith.constant 0 : i32
    %173 = tpu.memref_slice %arg8[%1, %c7_i32_28, %c0_i32_29] : memref<2x32x128xf32, #tpu.memory_space<vmem>> -> memref<1x1x128xf32, #tpu.memory_space<vmem>>
    %174 = tpu.memref_squeeze %173 : memref<1x1x128xf32, #tpu.memory_space<vmem>> -> memref<1x128xf32, #tpu.memory_space<vmem>>
    %175 = tpu.memref_slice %arg9[%1] : memref<2x!tpu.dma_semaphore, #tpu.memory_space<semaphore_mem>> -> memref<1x!tpu.dma_semaphore, #tpu.memory_space<semaphore_mem>>
    %176 = tpu.memref_squeeze %175 : memref<1x!tpu.dma_semaphore, #tpu.memory_space<semaphore_mem>> -> memref<!tpu.dma_semaphore, #tpu.memory_space<semaphore_mem>>
    tpu.wait_dma2 semaphore(%176 : memref<!tpu.dma_semaphore, #tpu.memory_space<semaphore_mem>>) src(%172 : memref<1x128xf32, #tpu.memory_space<any>>) dst(%174 : memref<1x128xf32, #tpu.memory_space<vmem>>)
    %c0_i32_30 = arith.constant 0 : i32
    %177 = tpu.memref_slice %arg3[%44, %c0_i32_30] : memref<1000x128xf32, #tpu.memory_space<any>> -> memref<1x128xf32, #tpu.memory_space<any>>
    %c8_i32_31 = arith.constant 8 : i32
    %c0_i32_32 = arith.constant 0 : i32
    %178 = tpu.memref_slice %arg8[%1, %c8_i32_31, %c0_i32_32] : memref<2x32x128xf32, #tpu.memory_space<vmem>> -> memref<1x1x128xf32, #tpu.memory_space<vmem>>
    %179 = tpu.memref_squeeze %178 : memref<1x1x128xf32, #tpu.memory_space<vmem>> -> memref<1x128xf32, #tpu.memory_space<vmem>>
    %180 = tpu.memref_slice %arg9[%1] : memref<2x!tpu.dma_semaphore, #tpu.memory_space<semaphore_mem>> -> memref<1x!tpu.dma_semaphore, #tpu.memory_space<semaphore_mem>>
    %181 = tpu.memref_squeeze %180 : memref<1x!tpu.dma_semaphore, #tpu.memory_space<semaphore_mem>> -> memref<!tpu.dma_semaphore, #tpu.memory_space<semaphore_mem>>
    tpu.wait_dma2 semaphore(%181 : memref<!tpu.dma_semaphore, #tpu.memory_space<semaphore_mem>>) src(%177 : memref<1x128xf32, #tpu.memory_space<any>>) dst(%179 : memref<1x128xf32, #tpu.memory_space<vmem>>)
    %c0_i32_33 = arith.constant 0 : i32
    %182 = tpu.memref_slice %arg3[%48, %c0_i32_33] : memref<1000x128xf32, #tpu.memory_space<any>> -> memref<1x128xf32, #tpu.memory_space<any>>
    %c9_i32_34 = arith.constant 9 : i32
    %c0_i32_35 = arith.constant 0 : i32
    %183 = tpu.memref_slice %arg8[%1, %c9_i32_34, %c0_i32_35] : memref<2x32x128xf32, #tpu.memory_space<vmem>> -> memref<1x1x128xf32, #tpu.memory_space<vmem>>
    %184 = tpu.memref_squeeze %183 : memref<1x1x128xf32, #tpu.memory_space<vmem>> -> memref<1x128xf32, #tpu.memory_space<vmem>>
    %185 = tpu.memref_slice %arg9[%1] : memref<2x!tpu.dma_semaphore, #tpu.memory_space<semaphore_mem>> -> memref<1x!tpu.dma_semaphore, #tpu.memory_space<semaphore_mem>>
    %186 = tpu.memref_squeeze %185 : memref<1x!tpu.dma_semaphore, #tpu.memory_space<semaphore_mem>> -> memref<!tpu.dma_semaphore, #tpu.memory_space<semaphore_mem>>
    tpu.wait_dma2 semaphore(%186 : memref<!tpu.dma_semaphore, #tpu.memory_space<semaphore_mem>>) src(%182 : memref<1x128xf32, #tpu.memory_space<any>>) dst(%184 : memref<1x128xf32, #tpu.memory_space<vmem>>)
    %c0_i32_36 = arith.constant 0 : i32
    %187 = tpu.memref_slice %arg3[%52, %c0_i32_36] : memref<1000x128xf32, #tpu.memory_space<any>> -> memref<1x128xf32, #tpu.memory_space<any>>
    %c10_i32_37 = arith.constant 10 : i32
    %c0_i32_38 = arith.constant 0 : i32
    %188 = tpu.memref_slice %arg8[%1, %c10_i32_37, %c0_i32_38] : memref<2x32x128xf32, #tpu.memory_space<vmem>> -> memref<1x1x128xf32, #tpu.memory_space<vmem>>
    %189 = tpu.memref_squeeze %188 : memref<1x1x128xf32, #tpu.memory_space<vmem>> -> memref<1x128xf32, #tpu.memory_space<vmem>>
    %190 = tpu.memref_slice %arg9[%1] : memref<2x!tpu.dma_semaphore, #tpu.memory_space<semaphore_mem>> -> memref<1x!tpu.dma_semaphore, #tpu.memory_space<semaphore_mem>>
    %191 = tpu.memref_squeeze %190 : memref<1x!tpu.dma_semaphore, #tpu.memory_space<semaphore_mem>> -> memref<!tpu.dma_semaphore, #tpu.memory_space<semaphore_mem>>
    tpu.wait_dma2 semaphore(%191 : memref<!tpu.dma_semaphore, #tpu.memory_space<semaphore_mem>>) src(%187 : memref<1x128xf32, #tpu.memory_space<any>>) dst(%189 : memref<1x128xf32, #tpu.memory_space<vmem>>)
    %c0_i32_39 = arith.constant 0 : i32
    %192 = tpu.memref_slice %arg3[%56, %c0_i32_39] : memref<1000x128xf32, #tpu.memory_space<any>> -> memref<1x128xf32, #tpu.memory_space<any>>
    %c11_i32_40 = arith.constant 11 : i32
    %c0_i32_41 = arith.constant 0 : i32
    %193 = tpu.memref_slice %arg8[%1, %c11_i32_40, %c0_i32_41] : memref<2x32x128xf32, #tpu.memory_space<vmem>> -> memref<1x1x128xf32, #tpu.memory_space<vmem>>
    %194 = tpu.memref_squeeze %193 : memref<1x1x128xf32, #tpu.memory_space<vmem>> -> memref<1x128xf32, #tpu.memory_space<vmem>>
    %195 = tpu.memref_slice %arg9[%1] : memref<2x!tpu.dma_semaphore, #tpu.memory_space<semaphore_mem>> -> memref<1x!tpu.dma_semaphore, #tpu.memory_space<semaphore_mem>>
    %196 = tpu.memref_squeeze %195 : memref<1x!tpu.dma_semaphore, #tpu.memory_space<semaphore_mem>> -> memref<!tpu.dma_semaphore, #tpu.memory_space<semaphore_mem>>
    tpu.wait_dma2 semaphore(%196 : memref<!tpu.dma_semaphore, #tpu.memory_space<semaphore_mem>>) src(%192 : memref<1x128xf32, #tpu.memory_space<any>>) dst(%194 : memref<1x128xf32, #tpu.memory_space<vmem>>)
    %c0_i32_42 = arith.constant 0 : i32
    %197 = tpu.memref_slice %arg3[%60, %c0_i32_42] : memref<1000x128xf32, #tpu.memory_space<any>> -> memref<1x128xf32, #tpu.memory_space<any>>
    %c12_i32_43 = arith.constant 12 : i32
    %c0_i32_44 = arith.constant 0 : i32
    %198 = tpu.memref_slice %arg8[%1, %c12_i32_43, %c0_i32_44] : memref<2x32x128xf32, #tpu.memory_space<vmem>> -> memref<1x1x128xf32, #tpu.memory_space<vmem>>
    %199 = tpu.memref_squeeze %198 : memref<1x1x128xf32, #tpu.memory_space<vmem>> -> memref<1x128xf32, #tpu.memory_space<vmem>>
    %200 = tpu.memref_slice %arg9[%1] : memref<2x!tpu.dma_semaphore, #tpu.memory_space<semaphore_mem>> -> memref<1x!tpu.dma_semaphore, #tpu.memory_space<semaphore_mem>>
    %201 = tpu.memref_squeeze %200 : memref<1x!tpu.dma_semaphore, #tpu.memory_space<semaphore_mem>> -> memref<!tpu.dma_semaphore, #tpu.memory_space<semaphore_mem>>
    tpu.wait_dma2 semaphore(%201 : memref<!tpu.dma_semaphore, #tpu.memory_space<semaphore_mem>>) src(%197 : memref<1x128xf32, #tpu.memory_space<any>>) dst(%199 : memref<1x128xf32, #tpu.memory_space<vmem>>)
    %c0_i32_45 = arith.constant 0 : i32
    %202 = tpu.memref_slice %arg3[%64, %c0_i32_45] : memref<1000x128xf32, #tpu.memory_space<any>> -> memref<1x128xf32, #tpu.memory_space<any>>
    %c13_i32_46 = arith.constant 13 : i32
    %c0_i32_47 = arith.constant 0 : i32
    %203 = tpu.memref_slice %arg8[%1, %c13_i32_46, %c0_i32_47] : memref<2x32x128xf32, #tpu.memory_space<vmem>> -> memref<1x1x128xf32, #tpu.memory_space<vmem>>
    %204 = tpu.memref_squeeze %203 : memref<1x1x128xf32, #tpu.memory_space<vmem>> -> memref<1x128xf32, #tpu.memory_space<vmem>>
    %205 = tpu.memref_slice %arg9[%1] : memref<2x!tpu.dma_semaphore, #tpu.memory_space<semaphore_mem>> -> memref<1x!tpu.dma_semaphore, #tpu.memory_space<semaphore_mem>>
    %206 = tpu.memref_squeeze %205 : memref<1x!tpu.dma_semaphore, #tpu.memory_space<semaphore_mem>> -> memref<!tpu.dma_semaphore, #tpu.memory_space<semaphore_mem>>
    tpu.wait_dma2 semaphore(%206 : memref<!tpu.dma_semaphore, #tpu.memory_space<semaphore_mem>>) src(%202 : memref<1x128xf32, #tpu.memory_space<any>>) dst(%204 : memref<1x128xf32, #tpu.memory_space<vmem>>)
    %c0_i32_48 = arith.constant 0 : i32
    %207 = tpu.memref_slice %arg3[%68, %c0_i32_48] : memref<1000x128xf32, #tpu.memory_space<any>> -> memref<1x128xf32, #tpu.memory_space<any>>
    %c14_i32_49 = arith.constant 14 : i32
    %c0_i32_50 = arith.constant 0 : i32
    %208 = tpu.memref_slice %arg8[%1, %c14_i32_49, %c0_i32_50] : memref<2x32x128xf32, #tpu.memory_space<vmem>> -> memref<1x1x128xf32, #tpu.memory_space<vmem>>
    %209 = tpu.memref_squeeze %208 : memref<1x1x128xf32, #tpu.memory_space<vmem>> -> memref<1x128xf32, #tpu.memory_space<vmem>>
    %210 = tpu.memref_slice %arg9[%1] : memref<2x!tpu.dma_semaphore, #tpu.memory_space<semaphore_mem>> -> memref<1x!tpu.dma_semaphore, #tpu.memory_space<semaphore_mem>>
    %211 = tpu.memref_squeeze %210 : memref<1x!tpu.dma_semaphore, #tpu.memory_space<semaphore_mem>> -> memref<!tpu.dma_semaphore, #tpu.memory_space<semaphore_mem>>
    tpu.wait_dma2 semaphore(%211 : memref<!tpu.dma_semaphore, #tpu.memory_space<semaphore_mem>>) src(%207 : memref<1x128xf32, #tpu.memory_space<any>>) dst(%209 : memref<1x128xf32, #tpu.memory_space<vmem>>)
    %c0_i32_51 = arith.constant 0 : i32
    %212 = tpu.memref_slice %arg3[%72, %c0_i32_51] : memref<1000x128xf32, #tpu.memory_space<any>> -> memref<1x128xf32, #tpu.memory_space<any>>
    %c15_i32_52 = arith.constant 15 : i32
    %c0_i32_53 = arith.constant 0 : i32
    %213 = tpu.memref_slice %arg8[%1, %c15_i32_52, %c0_i32_53] : memref<2x32x128xf32, #tpu.memory_space<vmem>> -> memref<1x1x128xf32, #tpu.memory_space<vmem>>
    %214 = tpu.memref_squeeze %213 : memref<1x1x128xf32, #tpu.memory_space<vmem>> -> memref<1x128xf32, #tpu.memory_space<vmem>>
    %215 = tpu.memref_slice %arg9[%1] : memref<2x!tpu.dma_semaphore, #tpu.memory_space<semaphore_mem>> -> memref<1x!tpu.dma_semaphore, #tpu.memory_space<semaphore_mem>>
    %216 = tpu.memref_squeeze %215 : memref<1x!tpu.dma_semaphore, #tpu.memory_space<semaphore_mem>> -> memref<!tpu.dma_semaphore, #tpu.memory_space<semaphore_mem>>
    tpu.wait_dma2 semaphore(%216 : memref<!tpu.dma_semaphore, #tpu.memory_space<semaphore_mem>>) src(%212 : memref<1x128xf32, #tpu.memory_space<any>>) dst(%214 : memref<1x128xf32, #tpu.memory_space<vmem>>)
    %c0_i32_54 = arith.constant 0 : i32
    %217 = tpu.memref_slice %arg3[%76, %c0_i32_54] : memref<1000x128xf32, #tpu.memory_space<any>> -> memref<1x128xf32, #tpu.memory_space<any>>
    %c16_i32_55 = arith.constant 16 : i32
    %c0_i32_56 = arith.constant 0 : i32
    %218 = tpu.memref_slice %arg8[%1, %c16_i32_55, %c0_i32_56] : memref<2x32x128xf32, #tpu.memory_space<vmem>> -> memref<1x1x128xf32, #tpu.memory_space<vmem>>
    %219 = tpu.memref_squeeze %218 : memref<1x1x128xf32, #tpu.memory_space<vmem>> -> memref<1x128xf32, #tpu.memory_space<vmem>>
    %220 = tpu.memref_slice %arg9[%1] : memref<2x!tpu.dma_semaphore, #tpu.memory_space<semaphore_mem>> -> memref<1x!tpu.dma_semaphore, #tpu.memory_space<semaphore_mem>>
    %221 = tpu.memref_squeeze %220 : memref<1x!tpu.dma_semaphore, #tpu.memory_space<semaphore_mem>> -> memref<!tpu.dma_semaphore, #tpu.memory_space<semaphore_mem>>
    tpu.wait_dma2 semaphore(%221 : memref<!tpu.dma_semaphore, #tpu.memory_space<semaphore_mem>>) src(%217 : memref<1x128xf32, #tpu.memory_space<any>>) dst(%219 : memref<1x128xf32, #tpu.memory_space<vmem>>)
    %c0_i32_57 = arith.constant 0 : i32
    %222 = tpu.memref_slice %arg3[%80, %c0_i32_57] : memref<1000x128xf32, #tpu.memory_space<any>> -> memref<1x128xf32, #tpu.memory_space<any>>
    %c17_i32_58 = arith.constant 17 : i32
    %c0_i32_59 = arith.constant 0 : i32
    %223 = tpu.memref_slice %arg8[%1, %c17_i32_58, %c0_i32_59] : memref<2x32x128xf32, #tpu.memory_space<vmem>> -> memref<1x1x128xf32, #tpu.memory_space<vmem>>
    %224 = tpu.memref_squeeze %223 : memref<1x1x128xf32, #tpu.memory_space<vmem>> -> memref<1x128xf32, #tpu.memory_space<vmem>>
    %225 = tpu.memref_slice %arg9[%1] : memref<2x!tpu.dma_semaphore, #tpu.memory_space<semaphore_mem>> -> memref<1x!tpu.dma_semaphore, #tpu.memory_space<semaphore_mem>>
    %226 = tpu.memref_squeeze %225 : memref<1x!tpu.dma_semaphore, #tpu.memory_space<semaphore_mem>> -> memref<!tpu.dma_semaphore, #tpu.memory_space<semaphore_mem>>
    tpu.wait_dma2 semaphore(%226 : memref<!tpu.dma_semaphore, #tpu.memory_space<semaphore_mem>>) src(%222 : memref<1x128xf32, #tpu.memory_space<any>>) dst(%224 : memref<1x128xf32, #tpu.memory_space<vmem>>)
    %c0_i32_60 = arith.constant 0 : i32
    %227 = tpu.memref_slice %arg3[%84, %c0_i32_60] : memref<1000x128xf32, #tpu.memory_space<any>> -> memref<1x128xf32, #tpu.memory_space<any>>
    %c18_i32_61 = arith.constant 18 : i32
    %c0_i32_62 = arith.constant 0 : i32
    %228 = tpu.memref_slice %arg8[%1, %c18_i32_61, %c0_i32_62] : memref<2x32x128xf32, #tpu.memory_space<vmem>> -> memref<1x1x128xf32, #tpu.memory_space<vmem>>
    %229 = tpu.memref_squeeze %228 : memref<1x1x128xf32, #tpu.memory_space<vmem>> -> memref<1x128xf32, #tpu.memory_space<vmem>>
    %230 = tpu.memref_slice %arg9[%1] : memref<2x!tpu.dma_semaphore, #tpu.memory_space<semaphore_mem>> -> memref<1x!tpu.dma_semaphore, #tpu.memory_space<semaphore_mem>>
    %231 = tpu.memref_squeeze %230 : memref<1x!tpu.dma_semaphore, #tpu.memory_space<semaphore_mem>> -> memref<!tpu.dma_semaphore, #tpu.memory_space<semaphore_mem>>
    tpu.wait_dma2 semaphore(%231 : memref<!tpu.dma_semaphore, #tpu.memory_space<semaphore_mem>>) src(%227 : memref<1x128xf32, #tpu.memory_space<any>>) dst(%229 : memref<1x128xf32, #tpu.memory_space<vmem>>)
    %c0_i32_63 = arith.constant 0 : i32
    %232 = tpu.memref_slice %arg3[%88, %c0_i32_63] : memref<1000x128xf32, #tpu.memory_space<any>> -> memref<1x128xf32, #tpu.memory_space<any>>
    %c19_i32_64 = arith.constant 19 : i32
    %c0_i32_65 = arith.constant 0 : i32
    %233 = tpu.memref_slice %arg8[%1, %c19_i32_64, %c0_i32_65] : memref<2x32x128xf32, #tpu.memory_space<vmem>> -> memref<1x1x128xf32, #tpu.memory_space<vmem>>
    %234 = tpu.memref_squeeze %233 : memref<1x1x128xf32, #tpu.memory_space<vmem>> -> memref<1x128xf32, #tpu.memory_space<vmem>>
    %235 = tpu.memref_slice %arg9[%1] : memref<2x!tpu.dma_semaphore, #tpu.memory_space<semaphore_mem>> -> memref<1x!tpu.dma_semaphore, #tpu.memory_space<semaphore_mem>>
    %236 = tpu.memref_squeeze %235 : memref<1x!tpu.dma_semaphore, #tpu.memory_space<semaphore_mem>> -> memref<!tpu.dma_semaphore, #tpu.memory_space<semaphore_mem>>
    tpu.wait_dma2 semaphore(%236 : memref<!tpu.dma_semaphore, #tpu.memory_space<semaphore_mem>>) src(%232 : memref<1x128xf32, #tpu.memory_space<any>>) dst(%234 : memref<1x128xf32, #tpu.memory_space<vmem>>)
    %c0_i32_66 = arith.constant 0 : i32
    %237 = tpu.memref_slice %arg3[%92, %c0_i32_66] : memref<1000x128xf32, #tpu.memory_space<any>> -> memref<1x128xf32, #tpu.memory_space<any>>
    %c20_i32_67 = arith.constant 20 : i32
    %c0_i32_68 = arith.constant 0 : i32
    %238 = tpu.memref_slice %arg8[%1, %c20_i32_67, %c0_i32_68] : memref<2x32x128xf32, #tpu.memory_space<vmem>> -> memref<1x1x128xf32, #tpu.memory_space<vmem>>
    %239 = tpu.memref_squeeze %238 : memref<1x1x128xf32, #tpu.memory_space<vmem>> -> memref<1x128xf32, #tpu.memory_space<vmem>>
    %240 = tpu.memref_slice %arg9[%1] : memref<2x!tpu.dma_semaphore, #tpu.memory_space<semaphore_mem>> -> memref<1x!tpu.dma_semaphore, #tpu.memory_space<semaphore_mem>>
    %241 = tpu.memref_squeeze %240 : memref<1x!tpu.dma_semaphore, #tpu.memory_space<semaphore_mem>> -> memref<!tpu.dma_semaphore, #tpu.memory_space<semaphore_mem>>
    tpu.wait_dma2 semaphore(%241 : memref<!tpu.dma_semaphore, #tpu.memory_space<semaphore_mem>>) src(%237 : memref<1x128xf32, #tpu.memory_space<any>>) dst(%239 : memref<1x128xf32, #tpu.memory_space<vmem>>)
    %c0_i32_69 = arith.constant 0 : i32
    %242 = tpu.memref_slice %arg3[%96, %c0_i32_69] : memref<1000x128xf32, #tpu.memory_space<any>> -> memref<1x128xf32, #tpu.memory_space<any>>
    %c21_i32_70 = arith.constant 21 : i32
    %c0_i32_71 = arith.constant 0 : i32
    %243 = tpu.memref_slice %arg8[%1, %c21_i32_70, %c0_i32_71] : memref<2x32x128xf32, #tpu.memory_space<vmem>> -> memref<1x1x128xf32, #tpu.memory_space<vmem>>
    %244 = tpu.memref_squeeze %243 : memref<1x1x128xf32, #tpu.memory_space<vmem>> -> memref<1x128xf32, #tpu.memory_space<vmem>>
    %245 = tpu.memref_slice %arg9[%1] : memref<2x!tpu.dma_semaphore, #tpu.memory_space<semaphore_mem>> -> memref<1x!tpu.dma_semaphore, #tpu.memory_space<semaphore_mem>>
    %246 = tpu.memref_squeeze %245 : memref<1x!tpu.dma_semaphore, #tpu.memory_space<semaphore_mem>> -> memref<!tpu.dma_semaphore, #tpu.memory_space<semaphore_mem>>
    tpu.wait_dma2 semaphore(%246 : memref<!tpu.dma_semaphore, #tpu.memory_space<semaphore_mem>>) src(%242 : memref<1x128xf32, #tpu.memory_space<any>>) dst(%244 : memref<1x128xf32, #tpu.memory_space<vmem>>)
    %c0_i32_72 = arith.constant 0 : i32
    %247 = tpu.memref_slice %arg3[%100, %c0_i32_72] : memref<1000x128xf32, #tpu.memory_space<any>> -> memref<1x128xf32, #tpu.memory_space<any>>
    %c22_i32_73 = arith.constant 22 : i32
    %c0_i32_74 = arith.constant 0 : i32
    %248 = tpu.memref_slice %arg8[%1, %c22_i32_73, %c0_i32_74] : memref<2x32x128xf32, #tpu.memory_space<vmem>> -> memref<1x1x128xf32, #tpu.memory_space<vmem>>
    %249 = tpu.memref_squeeze %248 : memref<1x1x128xf32, #tpu.memory_space<vmem>> -> memref<1x128xf32, #tpu.memory_space<vmem>>
    %250 = tpu.memref_slice %arg9[%1] : memref<2x!tpu.dma_semaphore, #tpu.memory_space<semaphore_mem>> -> memref<1x!tpu.dma_semaphore, #tpu.memory_space<semaphore_mem>>
    %251 = tpu.memref_squeeze %250 : memref<1x!tpu.dma_semaphore, #tpu.memory_space<semaphore_mem>> -> memref<!tpu.dma_semaphore, #tpu.memory_space<semaphore_mem>>
    tpu.wait_dma2 semaphore(%251 : memref<!tpu.dma_semaphore, #tpu.memory_space<semaphore_mem>>) src(%247 : memref<1x128xf32, #tpu.memory_space<any>>) dst(%249 : memref<1x128xf32, #tpu.memory_space<vmem>>)
    %c0_i32_75 = arith.constant 0 : i32
    %252 = tpu.memref_slice %arg3[%104, %c0_i32_75] : memref<1000x128xf32, #tpu.memory_space<any>> -> memref<1x128xf32, #tpu.memory_space<any>>
    %c23_i32_76 = arith.constant 23 : i32
    %c0_i32_77 = arith.constant 0 : i32
    %253 = tpu.memref_slice %arg8[%1, %c23_i32_76, %c0_i32_77] : memref<2x32x128xf32, #tpu.memory_space<vmem>> -> memref<1x1x128xf32, #tpu.memory_space<vmem>>
    %254 = tpu.memref_squeeze %253 : memref<1x1x128xf32, #tpu.memory_space<vmem>> -> memref<1x128xf32, #tpu.memory_space<vmem>>
    %255 = tpu.memref_slice %arg9[%1] : memref<2x!tpu.dma_semaphore, #tpu.memory_space<semaphore_mem>> -> memref<1x!tpu.dma_semaphore, #tpu.memory_space<semaphore_mem>>
    %256 = tpu.memref_squeeze %255 : memref<1x!tpu.dma_semaphore, #tpu.memory_space<semaphore_mem>> -> memref<!tpu.dma_semaphore, #tpu.memory_space<semaphore_mem>>
    tpu.wait_dma2 semaphore(%256 : memref<!tpu.dma_semaphore, #tpu.memory_space<semaphore_mem>>) src(%252 : memref<1x128xf32, #tpu.memory_space<any>>) dst(%254 : memref<1x128xf32, #tpu.memory_space<vmem>>)
    %c0_i32_78 = arith.constant 0 : i32
    %257 = tpu.memref_slice %arg3[%108, %c0_i32_78] : memref<1000x128xf32, #tpu.memory_space<any>> -> memref<1x128xf32, #tpu.memory_space<any>>
    %c24_i32_79 = arith.constant 24 : i32
    %c0_i32_80 = arith.constant 0 : i32
    %258 = tpu.memref_slice %arg8[%1, %c24_i32_79, %c0_i32_80] : memref<2x32x128xf32, #tpu.memory_space<vmem>> -> memref<1x1x128xf32, #tpu.memory_space<vmem>>
    %259 = tpu.memref_squeeze %258 : memref<1x1x128xf32, #tpu.memory_space<vmem>> -> memref<1x128xf32, #tpu.memory_space<vmem>>
    %260 = tpu.memref_slice %arg9[%1] : memref<2x!tpu.dma_semaphore, #tpu.memory_space<semaphore_mem>> -> memref<1x!tpu.dma_semaphore, #tpu.memory_space<semaphore_mem>>
    %261 = tpu.memref_squeeze %260 : memref<1x!tpu.dma_semaphore, #tpu.memory_space<semaphore_mem>> -> memref<!tpu.dma_semaphore, #tpu.memory_space<semaphore_mem>>
    tpu.wait_dma2 semaphore(%261 : memref<!tpu.dma_semaphore, #tpu.memory_space<semaphore_mem>>) src(%257 : memref<1x128xf32, #tpu.memory_space<any>>) dst(%259 : memref<1x128xf32, #tpu.memory_space<vmem>>)
    %c0_i32_81 = arith.constant 0 : i32
    %262 = tpu.memref_slice %arg3[%112, %c0_i32_81] : memref<1000x128xf32, #tpu.memory_space<any>> -> memref<1x128xf32, #tpu.memory_space<any>>
    %c25_i32_82 = arith.constant 25 : i32
    %c0_i32_83 = arith.constant 0 : i32
    %263 = tpu.memref_slice %arg8[%1, %c25_i32_82, %c0_i32_83] : memref<2x32x128xf32, #tpu.memory_space<vmem>> -> memref<1x1x128xf32, #tpu.memory_space<vmem>>
    %264 = tpu.memref_squeeze %263 : memref<1x1x128xf32, #tpu.memory_space<vmem>> -> memref<1x128xf32, #tpu.memory_space<vmem>>
    %265 = tpu.memref_slice %arg9[%1] : memref<2x!tpu.dma_semaphore, #tpu.memory_space<semaphore_mem>> -> memref<1x!tpu.dma_semaphore, #tpu.memory_space<semaphore_mem>>
    %266 = tpu.memref_squeeze %265 : memref<1x!tpu.dma_semaphore, #tpu.memory_space<semaphore_mem>> -> memref<!tpu.dma_semaphore, #tpu.memory_space<semaphore_mem>>
    tpu.wait_dma2 semaphore(%266 : memref<!tpu.dma_semaphore, #tpu.memory_space<semaphore_mem>>) src(%262 : memref<1x128xf32, #tpu.memory_space<any>>) dst(%264 : memref<1x128xf32, #tpu.memory_space<vmem>>)
    %c0_i32_84 = arith.constant 0 : i32
    %267 = tpu.memref_slice %arg3[%116, %c0_i32_84] : memref<1000x128xf32, #tpu.memory_space<any>> -> memref<1x128xf32, #tpu.memory_space<any>>
    %c26_i32_85 = arith.constant 26 : i32
    %c0_i32_86 = arith.constant 0 : i32
    %268 = tpu.memref_slice %arg8[%1, %c26_i32_85, %c0_i32_86] : memref<2x32x128xf32, #tpu.memory_space<vmem>> -> memref<1x1x128xf32, #tpu.memory_space<vmem>>
    %269 = tpu.memref_squeeze %268 : memref<1x1x128xf32, #tpu.memory_space<vmem>> -> memref<1x128xf32, #tpu.memory_space<vmem>>
    %270 = tpu.memref_slice %arg9[%1] : memref<2x!tpu.dma_semaphore, #tpu.memory_space<semaphore_mem>> -> memref<1x!tpu.dma_semaphore, #tpu.memory_space<semaphore_mem>>
    %271 = tpu.memref_squeeze %270 : memref<1x!tpu.dma_semaphore, #tpu.memory_space<semaphore_mem>> -> memref<!tpu.dma_semaphore, #tpu.memory_space<semaphore_mem>>
    tpu.wait_dma2 semaphore(%271 : memref<!tpu.dma_semaphore, #tpu.memory_space<semaphore_mem>>) src(%267 : memref<1x128xf32, #tpu.memory_space<any>>) dst(%269 : memref<1x128xf32, #tpu.memory_space<vmem>>)
    %c0_i32_87 = arith.constant 0 : i32
    %272 = tpu.memref_slice %arg3[%120, %c0_i32_87] : memref<1000x128xf32, #tpu.memory_space<any>> -> memref<1x128xf32, #tpu.memory_space<any>>
    %c27_i32_88 = arith.constant 27 : i32
    %c0_i32_89 = arith.constant 0 : i32
    %273 = tpu.memref_slice %arg8[%1, %c27_i32_88, %c0_i32_89] : memref<2x32x128xf32, #tpu.memory_space<vmem>> -> memref<1x1x128xf32, #tpu.memory_space<vmem>>
    %274 = tpu.memref_squeeze %273 : memref<1x1x128xf32, #tpu.memory_space<vmem>> -> memref<1x128xf32, #tpu.memory_space<vmem>>
    %275 = tpu.memref_slice %arg9[%1] : memref<2x!tpu.dma_semaphore, #tpu.memory_space<semaphore_mem>> -> memref<1x!tpu.dma_semaphore, #tpu.memory_space<semaphore_mem>>
    %276 = tpu.memref_squeeze %275 : memref<1x!tpu.dma_semaphore, #tpu.memory_space<semaphore_mem>> -> memref<!tpu.dma_semaphore, #tpu.memory_space<semaphore_mem>>
    tpu.wait_dma2 semaphore(%276 : memref<!tpu.dma_semaphore, #tpu.memory_space<semaphore_mem>>) src(%272 : memref<1x128xf32, #tpu.memory_space<any>>) dst(%274 : memref<1x128xf32, #tpu.memory_space<vmem>>)
    %c0_i32_90 = arith.constant 0 : i32
    %277 = tpu.memref_slice %arg3[%124, %c0_i32_90] : memref<1000x128xf32, #tpu.memory_space<any>> -> memref<1x128xf32, #tpu.memory_space<any>>
    %c28_i32_91 = arith.constant 28 : i32
    %c0_i32_92 = arith.constant 0 : i32
    %278 = tpu.memref_slice %arg8[%1, %c28_i32_91, %c0_i32_92] : memref<2x32x128xf32, #tpu.memory_space<vmem>> -> memref<1x1x128xf32, #tpu.memory_space<vmem>>
    %279 = tpu.memref_squeeze %278 : memref<1x1x128xf32, #tpu.memory_space<vmem>> -> memref<1x128xf32, #tpu.memory_space<vmem>>
    %280 = tpu.memref_slice %arg9[%1] : memref<2x!tpu.dma_semaphore, #tpu.memory_space<semaphore_mem>> -> memref<1x!tpu.dma_semaphore, #tpu.memory_space<semaphore_mem>>
    %281 = tpu.memref_squeeze %280 : memref<1x!tpu.dma_semaphore, #tpu.memory_space<semaphore_mem>> -> memref<!tpu.dma_semaphore, #tpu.memory_space<semaphore_mem>>
    tpu.wait_dma2 semaphore(%281 : memref<!tpu.dma_semaphore, #tpu.memory_space<semaphore_mem>>) src(%277 : memref<1x128xf32, #tpu.memory_space<any>>) dst(%279 : memref<1x128xf32, #tpu.memory_space<vmem>>)
    %c0_i32_93 = arith.constant 0 : i32
    %282 = tpu.memref_slice %arg3[%128, %c0_i32_93] : memref<1000x128xf32, #tpu.memory_space<any>> -> memref<1x128xf32, #tpu.memory_space<any>>
    %c29_i32_94 = arith.constant 29 : i32
    %c0_i32_95 = arith.constant 0 : i32
    %283 = tpu.memref_slice %arg8[%1, %c29_i32_94, %c0_i32_95] : memref<2x32x128xf32, #tpu.memory_space<vmem>> -> memref<1x1x128xf32, #tpu.memory_space<vmem>>
    %284 = tpu.memref_squeeze %283 : memref<1x1x128xf32, #tpu.memory_space<vmem>> -> memref<1x128xf32, #tpu.memory_space<vmem>>
    %285 = tpu.memref_slice %arg9[%1] : memref<2x!tpu.dma_semaphore, #tpu.memory_space<semaphore_mem>> -> memref<1x!tpu.dma_semaphore, #tpu.memory_space<semaphore_mem>>
    %286 = tpu.memref_squeeze %285 : memref<1x!tpu.dma_semaphore, #tpu.memory_space<semaphore_mem>> -> memref<!tpu.dma_semaphore, #tpu.memory_space<semaphore_mem>>
    tpu.wait_dma2 semaphore(%286 : memref<!tpu.dma_semaphore, #tpu.memory_space<semaphore_mem>>) src(%282 : memref<1x128xf32, #tpu.memory_space<any>>) dst(%284 : memref<1x128xf32, #tpu.memory_space<vmem>>)
    %c0_i32_96 = arith.constant 0 : i32
    %287 = tpu.memref_slice %arg3[%132, %c0_i32_96] : memref<1000x128xf32, #tpu.memory_space<any>> -> memref<1x128xf32, #tpu.memory_space<any>>
    %c30_i32_97 = arith.constant 30 : i32
    %c0_i32_98 = arith.constant 0 : i32
    %288 = tpu.memref_slice %arg8[%1, %c30_i32_97, %c0_i32_98] : memref<2x32x128xf32, #tpu.memory_space<vmem>> -> memref<1x1x128xf32, #tpu.memory_space<vmem>>
    %289 = tpu.memref_squeeze %288 : memref<1x1x128xf32, #tpu.memory_space<vmem>> -> memref<1x128xf32, #tpu.memory_space<vmem>>
    %290 = tpu.memref_slice %arg9[%1] : memref<2x!tpu.dma_semaphore, #tpu.memory_space<semaphore_mem>> -> memref<1x!tpu.dma_semaphore, #tpu.memory_space<semaphore_mem>>
    %291 = tpu.memref_squeeze %290 : memref<1x!tpu.dma_semaphore, #tpu.memory_space<semaphore_mem>> -> memref<!tpu.dma_semaphore, #tpu.memory_space<semaphore_mem>>
    tpu.wait_dma2 semaphore(%291 : memref<!tpu.dma_semaphore, #tpu.memory_space<semaphore_mem>>) src(%287 : memref<1x128xf32, #tpu.memory_space<any>>) dst(%289 : memref<1x128xf32, #tpu.memory_space<vmem>>)
    %c0_i32_99 = arith.constant 0 : i32
    %292 = tpu.memref_slice %arg3[%136, %c0_i32_99] : memref<1000x128xf32, #tpu.memory_space<any>> -> memref<1x128xf32, #tpu.memory_space<any>>
    %c31_i32_100 = arith.constant 31 : i32
    %c0_i32_101 = arith.constant 0 : i32
    %293 = tpu.memref_slice %arg8[%1, %c31_i32_100, %c0_i32_101] : memref<2x32x128xf32, #tpu.memory_space<vmem>> -> memref<1x1x128xf32, #tpu.memory_space<vmem>>
    %294 = tpu.memref_squeeze %293 : memref<1x1x128xf32, #tpu.memory_space<vmem>> -> memref<1x128xf32, #tpu.memory_space<vmem>>
    %295 = tpu.memref_slice %arg9[%1] : memref<2x!tpu.dma_semaphore, #tpu.memory_space<semaphore_mem>> -> memref<1x!tpu.dma_semaphore, #tpu.memory_space<semaphore_mem>>
    %296 = tpu.memref_squeeze %295 : memref<1x!tpu.dma_semaphore, #tpu.memory_space<semaphore_mem>> -> memref<!tpu.dma_semaphore, #tpu.memory_space<semaphore_mem>>
    tpu.wait_dma2 semaphore(%296 : memref<!tpu.dma_semaphore, #tpu.memory_space<semaphore_mem>>) src(%292 : memref<1x128xf32, #tpu.memory_space<any>>) dst(%294 : memref<1x128xf32, #tpu.memory_space<vmem>>)
    %297 = arith.index_cast %1 : i32 to index
    %c0 = arith.constant 0 : index
    %c0_102 = arith.constant 0 : index
    %298 = vector.load %arg8[%297, %c0, %c0_102] : memref<2x32x128xf32, #tpu.memory_space<vmem>>, vector<1x32x128xf32>
    %299 = vector.shape_cast %298 : vector<1x32x128xf32> to vector<32x128xf32>
    %c0_103 = arith.constant 0 : index
    %c0_104 = arith.constant 0 : index
    %300 = vector.load %arg4[%c0_103, %c0_104] : memref<32x128xf32, #tpu.memory_space<vmem>>, vector<32x128xf32>
    %301 = arith.addf %299, %300 : vector<32x128xf32>
    %cst = arith.constant dense<0.000000e+00> : vector<32xf32>
    %302 = vector.multi_reduction <add>, %301, %cst [1] : vector<32x128xf32> to vector<32xf32>
    %303 = vector.shape_cast %302 : vector<32xf32> to vector<32x1xf32>
    %cst_105 = arith.constant 1.280000e+02 : f32
    %304 = vector.broadcast %cst_105 : f32 to vector<32x1xf32>
    %305 = arith.divf %303, %304 : vector<32x1xf32>
    %306 = vector.broadcast %305 : vector<32x1xf32> to vector<32x128xf32>
    %307 = arith.subf %301, %306 : vector<32x128xf32>
    %308 = arith.mulf %307, %307 : vector<32x128xf32>
    %cst_106 = arith.constant dense<0.000000e+00> : vector<32xf32>
    %309 = vector.multi_reduction <add>, %308, %cst_106 [1] : vector<32x128xf32> to vector<32xf32>
    %310 = vector.shape_cast %309 : vector<32xf32> to vector<32x1xf32>
    %cst_107 = arith.constant 1.280000e+02 : f32
    %311 = vector.broadcast %cst_107 : f32 to vector<32x1xf32>
    %312 = arith.divf %310, %311 : vector<32x1xf32>
    %cst_108 = arith.constant 9.99999996E-13 : f32
    %313 = vector.broadcast %cst_108 : f32 to vector<32x1xf32>
    %314 = arith.addf %312, %313 : vector<32x1xf32>
    %315 = math.rsqrt %314 : vector<32x1xf32>
    %316 = vector.broadcast %315 : vector<32x1xf32> to vector<32x128xf32>
    %317 = arith.mulf %307, %316 : vector<32x128xf32>
    %c0_109 = arith.constant 0 : index
    %c0_110 = arith.constant 0 : index
    %318 = vector.load %arg5[%c0_109, %c0_110] : memref<1x128xf32, #tpu.memory_space<vmem>>, vector<1x128xf32>
    %319 = vector.broadcast %318 : vector<1x128xf32> to vector<32x128xf32>
    %320 = arith.mulf %319, %317 : vector<32x128xf32>
    %c0_111 = arith.constant 0 : index
    %c0_112 = arith.constant 0 : index
    %321 = vector.load %arg6[%c0_111, %c0_112] : memref<1x128xf32, #tpu.memory_space<vmem>>, vector<1x128xf32>
    %322 = vector.broadcast %321 : vector<1x128xf32> to vector<32x128xf32>
    %323 = arith.addf %320, %322 : vector<32x128xf32>
    %c0_113 = arith.constant 0 : index
    %c0_114 = arith.constant 0 : index
    %324 = vector.load %arg7[%c0_113, %c0_114] : memref<32x128xf32, #tpu.memory_space<vmem>>, vector<32x128xf32>
    tpu.vector_store %arg7[%c0_113, %c0_114], %323 {strides = array<i32>} : memref<32x128xf32, #tpu.memory_space<vmem>>, vector<32x128xf32>,
    return
  }
  func.func @transform_1(%arg0: i32, %arg1: i32, %arg2: memref<2x32xi32, #tpu.memory_space<smem>>) -> (i32, i32) {
    %c0_i32 = arith.constant 0 : i32
    %c0_i32_0 = arith.constant 0 : i32
    return %arg0, %c0_i32 : i32, i32
  }
  func.func @transform_2(%arg0: i32, %arg1: i32, %arg2: memref<2x32xi32, #tpu.memory_space<smem>>) -> (i32, i32) {
    %c0_i32 = arith.constant 0 : i32
    %c0_i32_0 = arith.constant 0 : i32
    %c0_i32_1 = arith.constant 0 : i32
    return %c0_i32, %c0_i32_0 : i32, i32
  }
  func.func @transform_3(%arg0: i32, %arg1: i32, %arg2: memref<2x32xi32, #tpu.memory_space<smem>>) -> (i32, i32) {
    %c0_i32 = arith.constant 0 : i32
    %c0_i32_0 = arith.constant 0 : i32
    %c0_i32_1 = arith.constant 0 : i32
    return %c0_i32, %c0_i32_0 : i32, i32
  }
  func.func @transform_4(%arg0: i32, %arg1: i32, %arg2: memref<2x32xi32, #tpu.memory_space<smem>>) -> (i32, i32) {
    %c1_i32 = arith.constant 1 : i32
    %0 = arith.muli %arg1, %c1_i32 : i32
    %1 = arith.addi %0, %arg0 : i32
    %c0_i32 = arith.constant 0 : i32
    %c0_i32_0 = arith.constant 0 : i32
    return %1, %c0_i32 : i32, i32
  }
}

</mosaic_0001>

<llo_original>
// kernel: tpu_custom_call.1
$region0: #{tpu_custom_call.1}
  #allocation0 [shape = 'u32[]', space=smem, size = 0x4, offset = 0x4, fixed_abs, tag = 'smem constant byte address 0x4 - core index']
  #allocation1 [shape = 'u32[144,128]{1,0:T(1,128)}', space=vmem, size = 0x12000, scoped, tag = 'internal scratch']
  #allocation2 [shape = 'f32[2,32,128]{2,1,0:T(8,128)}', space=vmem, size = 0x8000, scoped, tag = 'scratch operand']
  #allocation3 [shape = 's32[2]{0}', space=sflag, size = 0x8, scoped, tag = 'scratch operand']
  #allocation4 [shape = 's32[1]{0}', space=sflag, size = 0x4, scoped, tag = 'scoped memory for tpu_custom_call.1']
  #allocation5 [shape = 'u8[1024]{0}', space=smem, size = 0x400, scoped, tag = 'prefetched SMEM operand 0']
  #allocation10 [shape = 's32[]', space=sflag, size = 0x4, offset = 0, fixed_abs, tag = 'sflag constant byte address 0x0 - dummy sync flag']
  #allocation11 [shape = 's32[]', space=sflag, size = 0x4, offset = 0, fixed_abs, tag = 'sflag constant byte address 0x0 - dummy sync flag']
  #allocation12 [shape = 'u32[]', space=smem, size = 0x4, offset = 0x44, fixed_abs, tag = 'smem constant byte address 0x44 - assertion arg 0']
  #allocation13 [shape = 'u32[]', space=smem, size = 0x4, offset = 0x48, fixed_abs, tag = 'smem constant byte address 0x48 - assertion arg 1']
  #allocation14 [shape = 's32[]', space=sflag, size = 0x4, offset = 0, fixed_abs, tag = 'sflag constant byte address 0x0 - dummy sync flag']
  #allocation15 [shape = 's32[]', space=sflag, size = 0x4, offset = 0, fixed_abs, tag = 'sflag constant byte address 0x0 - dummy sync flag']
  #allocation16 [shape = 's32[]', space=sflag, size = 0x4, offset = 0, fixed_abs, tag = 'sflag constant byte address 0x0 - dummy sync flag']
  #allocation17 [shape = 's32[]', space=sflag, size = 0x4, offset = 0, fixed_abs, tag = 'sflag constant byte address 0x0 - dummy sync flag']
  #allocation18 [shape = 's32[]', space=sflag, size = 0x4, offset = 0, fixed_abs, tag = 'sflag constant byte address 0x0 - dummy sync flag']
  #allocation19 [shape = 's32[]', space=sflag, size = 0x4, offset = 0, fixed_abs, tag = 'sflag constant byte address 0x0 - dummy sync flag']
  #allocation20 [shape = 's32[]', space=sflag, size = 0x4, offset = 0, fixed_abs, tag = 'sflag constant byte address 0x0 - dummy sync flag']
  #allocation21 [shape = 's32[]', space=sflag, size = 0x4, offset = 0, fixed_abs, tag = 'sflag constant byte address 0x0 - dummy sync flag']
  #allocation22 [shape = 's32[]', space=sflag, size = 0x4, offset = 0, fixed_abs, tag = 'sflag constant byte address 0x0 - dummy sync flag']
  #allocation23 [shape = 's32[]', space=sflag, size = 0x4, offset = 0, fixed_abs, tag = 'sflag constant byte address 0x0 - dummy sync flag']
  #allocation24 [shape = 's32[]', space=sflag, size = 0x4, offset = 0, fixed_abs, tag = 'sflag constant byte address 0x0 - dummy sync flag']
  #allocation25 [shape = 's32[]', space=sflag, size = 0x4, offset = 0, fixed_abs, tag = 'sflag constant byte address 0x0 - dummy sync flag']
  #allocation26 [shape = 's32[]', space=sflag, size = 0x4, offset = 0, fixed_abs, tag = 'sflag constant byte address 0x0 - dummy sync flag']
  #allocation27 [shape = 's32[]', space=sflag, size = 0x4, offset = 0, fixed_abs, tag = 'sflag constant byte address 0x0 - dummy sync flag']
  #allocation28 [shape = 's32[]', space=sflag, size = 0x4, offset = 0, fixed_abs, tag = 'sflag constant byte address 0x0 - dummy sync flag']
  #allocation29 [shape = 's32[]', space=sflag, size = 0x4, offset = 0, fixed_abs, tag = 'sflag constant byte address 0x0 - dummy sync flag']
  #allocation30 [shape = 's32[]', space=sflag, size = 0x4, offset = 0, fixed_abs, tag = 'sflag constant byte address 0x0 - dummy sync flag']
  #allocation31 [shape = 's32[]', space=sflag, size = 0x4, offset = 0, fixed_abs, tag = 'sflag constant byte address 0x0 - dummy sync flag']
  #allocation32 [shape = 's32[]', space=sflag, size = 0x4, offset = 0, fixed_abs, tag = 'sflag constant byte address 0x0 - dummy sync flag']
  #allocation33 [shape = 's32[]', space=sflag, size = 0x4, offset = 0, fixed_abs, tag = 'sflag constant byte address 0x0 - dummy sync flag']
  #allocation34 [shape = 's32[]', space=sflag, size = 0x4, offset = 0, fixed_abs, tag = 'sflag constant byte address 0x0 - dummy sync flag']
  #allocation35 [shape = 's32[]', space=sflag, size = 0x4, offset = 0, fixed_abs, tag = 'sflag constant byte address 0x0 - dummy sync flag']
  #allocation36 [shape = 's32[]', space=sflag, size = 0x4, offset = 0, fixed_abs, tag = 'sflag constant byte address 0x0 - dummy sync flag']
  #allocation37 [shape = 's32[]', space=sflag, size = 0x4, offset = 0, fixed_abs, tag = 'sflag constant byte address 0x0 - dummy sync flag']
  #allocation38 [shape = 's32[]', space=sflag, size = 0x4, offset = 0, fixed_abs, tag = 'sflag constant byte address 0x0 - dummy sync flag']
  #allocation39 [shape = 's32[]', space=sflag, size = 0x4, offset = 0, fixed_abs, tag = 'sflag constant byte address 0x0 - dummy sync flag']
  #allocation40 [shape = 's32[]', space=sflag, size = 0x4, offset = 0, fixed_abs, tag = 'sflag constant byte address 0x0 - dummy sync flag']
  #allocation41 [shape = 's32[]', space=sflag, size = 0x4, offset = 0, fixed_abs, tag = 'sflag constant byte address 0x0 - dummy sync flag']
  #allocation42 [shape = 's32[]', space=sflag, size = 0x4, offset = 0, fixed_abs, tag = 'sflag constant byte address 0x0 - dummy sync flag']
  #allocation43 [shape = 's32[]', space=sflag, size = 0x4, offset = 0, fixed_abs, tag = 'sflag constant byte address 0x0 - dummy sync flag']
  #allocation44 [shape = 's32[]', space=sflag, size = 0x4, offset = 0, fixed_abs, tag = 'sflag constant byte address 0x0 - dummy sync flag']
  #allocation45 [shape = 's32[]', space=sflag, size = 0x4, offset = 0, fixed_abs, tag = 'sflag constant byte address 0x0 - dummy sync flag']
  #allocation46 [shape = 's32[]', space=sflag, size = 0x4, offset = 0, fixed_abs, tag = 'sflag constant byte address 0x0 - dummy sync flag']
  #allocation47 [shape = 's32[]', space=sflag, size = 0x4, offset = 0, fixed_abs, tag = 'sflag constant byte address 0x0 - dummy sync flag']
  #allocation48 [shape = 's32[]', space=sflag, size = 0x4, offset = 0, fixed_abs, tag = 'sflag constant byte address 0x0 - dummy sync flag']
  #allocation49 [shape = 's32[]', space=sflag, size = 0x4, offset = 0, fixed_abs, tag = 'sflag constant byte address 0x0 - dummy sync flag']
  #allocation50 [shape = 's32[]', space=sflag, size = 0x4, offset = 0, fixed_abs, tag = 'sflag constant byte address 0x0 - dummy sync flag']
  #allocation51 [shape = 's32[]', space=sflag, size = 0x4, offset = 0, fixed_abs, tag = 'sflag constant byte address 0x0 - dummy sync flag']
  #allocation52 [shape = 's32[]', space=sflag, size = 0x4, offset = 0, fixed_abs, tag = 'sflag constant byte address 0x0 - dummy sync flag']
  #allocation53 [shape = 's32[]', space=sflag, size = 0x4, offset = 0, fixed_abs, tag = 'sflag constant byte address 0x0 - dummy sync flag']
  #allocation54 [shape = 's32[]', space=sflag, size = 0x4, offset = 0, fixed_abs, tag = 'sflag constant byte address 0x0 - dummy sync flag']
  #allocation55 [shape = 's32[]', space=sflag, size = 0x4, offset = 0, fixed_abs, tag = 'sflag constant byte address 0x0 - dummy sync flag']
  #allocation56 [shape = 's32[]', space=sflag, size = 0x4, offset = 0, fixed_abs, tag = 'sflag constant byte address 0x0 - dummy sync flag']
  #allocation57 [shape = 's32[]', space=sflag, size = 0x4, offset = 0, fixed_abs, tag = 'sflag constant byte address 0x0 - dummy sync flag']
  #allocation58 [shape = 's32[]', space=sflag, size = 0x4, offset = 0, fixed_abs, tag = 'sflag constant byte address 0x0 - dummy sync flag']
  #allocation59 [shape = 's32[]', space=sflag, size = 0x4, offset = 0, fixed_abs, tag = 'sflag constant byte address 0x0 - dummy sync flag']
  #allocation60 [shape = 's32[]', space=sflag, size = 0x4, offset = 0, fixed_abs, tag = 'sflag constant byte address 0x0 - dummy sync flag']
  #allocation61 [shape = 's32[]', space=sflag, size = 0x4, offset = 0, fixed_abs, tag = 'sflag constant byte address 0x0 - dummy sync flag']
  #allocation62 [shape = 's32[]', space=sflag, size = 0x4, offset = 0, fixed_abs, tag = 'sflag constant byte address 0x0 - dummy sync flag']
  #allocation63 [shape = 's32[]', space=sflag, size = 0x4, offset = 0, fixed_abs, tag = 'sflag constant byte address 0x0 - dummy sync flag']
  #allocation64 [shape = 's32[]', space=sflag, size = 0x4, offset = 0, fixed_abs, tag = 'sflag constant byte address 0x0 - dummy sync flag']
  #allocation65 [shape = 's32[]', space=sflag, size = 0x4, offset = 0, fixed_abs, tag = 'sflag constant byte address 0x0 - dummy sync flag']
  #allocation66 [shape = 's32[]', space=sflag, size = 0x4, offset = 0, fixed_abs, tag = 'sflag constant byte address 0x0 - dummy sync flag']
  #allocation67 [shape = 's32[]', space=sflag, size = 0x4, offset = 0, fixed_abs, tag = 'sflag constant byte address 0x0 - dummy sync flag']
  #allocation68 [shape = 's32[]', space=sflag, size = 0x4, offset = 0, fixed_abs, tag = 'sflag constant byte address 0x0 - dummy sync flag']
  #allocation69 [shape = 's32[]', space=sflag, size = 0x4, offset = 0, fixed_abs, tag = 'sflag constant byte address 0x0 - dummy sync flag']
  #allocation70 [shape = 's32[]', space=sflag, size = 0x4, offset = 0, fixed_abs, tag = 'sflag constant byte address 0x0 - dummy sync flag']
  #allocation71 [shape = 's32[]', space=sflag, size = 0x4, offset = 0, fixed_abs, tag = 'sflag constant byte address 0x0 - dummy sync flag']
  #allocation72 [shape = 's32[]', space=sflag, size = 0x4, offset = 0, fixed_abs, tag = 'sflag constant byte address 0x0 - dummy sync flag']
  #allocation73 [shape = 's32[]', space=sflag, size = 0x4, offset = 0, fixed_abs, tag = 'sflag constant byte address 0x0 - dummy sync flag']
  #allocation74 [shape = 's32[]', space=sflag, size = 0x4, offset = 0, fixed_abs, tag = 'sflag constant byte address 0x0 - dummy sync flag']
  #allocation75 [shape = 's32[]', space=sflag, size = 0x4, offset = 0, fixed_abs, tag = 'sflag constant byte address 0x0 - dummy sync flag']
  #allocation76 [shape = 's32[]', space=sflag, size = 0x4, offset = 0, fixed_abs, tag = 'sflag constant byte address 0x0 - dummy sync flag']
  #allocation77 [shape = 's32[]', space=sflag, size = 0x4, offset = 0, fixed_abs, tag = 'sflag constant byte address 0x0 - dummy sync flag']
  #allocation78 [shape = 's32[]', space=sflag, size = 0x4, offset = 0, fixed_abs, tag = 'sflag constant byte address 0x0 - dummy sync flag']
  #allocation79 [shape = 's32[]', space=sflag, size = 0x4, offset = 0, fixed_abs, tag = 'sflag constant byte address 0x0 - dummy sync flag']
  #allocation80 [shape = 's32[]', space=sflag, size = 0x4, offset = 0, fixed_abs, tag = 'sflag constant byte address 0x0 - dummy sync flag']
  #allocation81 [shape = 's32[]', space=sflag, size = 0x4, offset = 0, fixed_abs, tag = 'sflag constant byte address 0x0 - dummy sync flag']
  #allocation82 [shape = 's32[]', space=sflag, size = 0x4, offset = 0, fixed_abs, tag = 'sflag constant byte address 0x0 - dummy sync flag']
  #allocation83 [shape = 's32[]', space=sflag, size = 0x4, offset = 0, fixed_abs, tag = 'sflag constant byte address 0x0 - dummy sync flag']
  #allocation84 [shape = 's32[]', space=sflag, size = 0x4, offset = 0, fixed_abs, tag = 'sflag constant byte address 0x0 - dummy sync flag']
  #allocation85 [shape = 's32[]', space=sflag, size = 0x4, offset = 0, fixed_abs, tag = 'sflag constant byte address 0x0 - dummy sync flag']
  #allocation86 [shape = 's32[]', space=sflag, size = 0x4, offset = 0, fixed_abs, tag = 'sflag constant byte address 0x0 - dummy sync flag']
  #allocation87 [shape = 's32[]', space=sflag, size = 0x4, offset = 0, fixed_abs, tag = 'sflag constant byte address 0x0 - dummy sync flag']
  #allocation88 [shape = 's32[]', space=sflag, size = 0x4, offset = 0, fixed_abs, tag = 'sflag constant byte address 0x0 - dummy sync flag']
  #allocation89 [shape = 's32[]', space=sflag, size = 0x4, offset = 0, fixed_abs, tag = 'sflag constant byte address 0x0 - dummy sync flag']
  #allocation90 [shape = 's32[]', space=sflag, size = 0x4, offset = 0, fixed_abs, tag = 'sflag constant byte address 0x0 - dummy sync flag']
  #allocation91 [shape = 's32[]', space=sflag, size = 0x4, offset = 0, fixed_abs, tag = 'sflag constant byte address 0x0 - dummy sync flag']
  #allocation92 [shape = 's32[]', space=sflag, size = 0x4, offset = 0, fixed_abs, tag = 'sflag constant byte address 0x0 - dummy sync flag']
  #allocation93 [shape = 's32[]', space=sflag, size = 0x4, offset = 0, fixed_abs, tag = 'sflag constant byte address 0x0 - dummy sync flag']
  #allocation94 [shape = 's32[]', space=sflag, size = 0x4, offset = 0, fixed_abs, tag = 'sflag constant byte address 0x0 - dummy sync flag']
  #allocation95 [shape = 's32[]', space=sflag, size = 0x4, offset = 0, fixed_abs, tag = 'sflag constant byte address 0x0 - dummy sync flag']
  #allocation96 [shape = 's32[]', space=sflag, size = 0x4, offset = 0, fixed_abs, tag = 'sflag constant byte address 0x0 - dummy sync flag']
  #allocation97 [shape = 's32[]', space=sflag, size = 0x4, offset = 0, fixed_abs, tag = 'sflag constant byte address 0x0 - dummy sync flag']
  #allocation98 [shape = 's32[]', space=sflag, size = 0x4, offset = 0, fixed_abs, tag = 'sflag constant byte address 0x0 - dummy sync flag']
  #allocation99 [shape = 's32[]', space=sflag, size = 0x4, offset = 0, fixed_abs, tag = 'sflag constant byte address 0x0 - dummy sync flag']
  #allocation100 [shape = 's32[]', space=sflag, size = 0x4, offset = 0, fixed_abs, tag = 'sflag constant byte address 0x0 - dummy sync flag']
  #allocation101 [shape = 's32[]', space=sflag, size = 0x4, offset = 0, fixed_abs, tag = 'sflag constant byte address 0x0 - dummy sync flag']
  #allocation102 [shape = 's32[]', space=sflag, size = 0x4, offset = 0, fixed_abs, tag = 'sflag constant byte address 0x0 - dummy sync flag']
  #allocation103 [shape = 's32[]', space=sflag, size = 0x4, offset = 0, fixed_abs, tag = 'sflag constant byte address 0x0 - dummy sync flag']
  #allocation104 [shape = 's32[]', space=sflag, size = 0x4, offset = 0, fixed_abs, tag = 'sflag constant byte address 0x0 - dummy sync flag']
  #allocation105 [shape = 's32[]', space=sflag, size = 0x4, offset = 0, fixed_abs, tag = 'sflag constant byte address 0x0 - dummy sync flag']
  #allocation106 [shape = 's32[]', space=sflag, size = 0x4, offset = 0, fixed_abs, tag = 'sflag constant byte address 0x0 - dummy sync flag']
  #allocation107 [shape = 's32[]', space=sflag, size = 0x4, offset = 0, fixed_abs, tag = 'sflag constant byte address 0x0 - dummy sync flag']
  #allocation108 [shape = 's32[]', space=sflag, size = 0x4, offset = 0, fixed_abs, tag = 'sflag constant byte address 0x0 - dummy sync flag']
  #allocation109 [shape = 's32[]', space=sflag, size = 0x4, offset = 0, fixed_abs, tag = 'sflag constant byte address 0x0 - dummy sync flag']
  #allocation110 [shape = 's32[]', space=sflag, size = 0x4, offset = 0, fixed_abs, tag = 'sflag constant byte address 0x0 - dummy sync flag']
  #allocation111 [shape = 's32[]', space=sflag, size = 0x4, offset = 0, fixed_abs, tag = 'sflag constant byte address 0x0 - dummy sync flag']
  #allocation112 [shape = 's32[]', space=sflag, size = 0x4, offset = 0, fixed_abs, tag = 'sflag constant byte address 0x0 - dummy sync flag']
  #allocation113 [shape = 's32[]', space=sflag, size = 0x4, offset = 0, fixed_abs, tag = 'sflag constant byte address 0x0 - dummy sync flag']
  #allocation114 [shape = 's32[]', space=sflag, size = 0x4, offset = 0, fixed_abs, tag = 'sflag constant byte address 0x0 - dummy sync flag']
  #allocation115 [shape = 's32[]', space=sflag, size = 0x4, offset = 0, fixed_abs, tag = 'sflag constant byte address 0x0 - dummy sync flag']
  #allocation116 [shape = 's32[]', space=sflag, size = 0x4, offset = 0, fixed_abs, tag = 'sflag constant byte address 0x0 - dummy sync flag']
  #allocation117 [shape = 's32[]', space=sflag, size = 0x4, offset = 0, fixed_abs, tag = 'sflag constant byte address 0x0 - dummy sync flag']
  #allocation118 [shape = 's32[]', space=sflag, size = 0x4, offset = 0, fixed_abs, tag = 'sflag constant byte address 0x0 - dummy sync flag']
  #allocation119 [shape = 's32[]', space=sflag, size = 0x4, offset = 0, fixed_abs, tag = 'sflag constant byte address 0x0 - dummy sync flag']
  #allocation120 [shape = 's32[]', space=sflag, size = 0x4, offset = 0, fixed_abs, tag = 'sflag constant byte address 0x0 - dummy sync flag']
  #allocation121 [shape = 's32[]', space=sflag, size = 0x4, offset = 0, fixed_abs, tag = 'sflag constant byte address 0x0 - dummy sync flag']
  #allocation122 [shape = 's32[]', space=sflag, size = 0x4, offset = 0, fixed_abs, tag = 'sflag constant byte address 0x0 - dummy sync flag']
  #allocation123 [shape = 's32[]', space=sflag, size = 0x4, offset = 0, fixed_abs, tag = 'sflag constant byte address 0x0 - dummy sync flag']
  #allocation124 [shape = 's32[]', space=sflag, size = 0x4, offset = 0, fixed_abs, tag = 'sflag constant byte address 0x0 - dummy sync flag']
  #allocation125 [shape = 's32[]', space=sflag, size = 0x4, offset = 0, fixed_abs, tag = 'sflag constant byte address 0x0 - dummy sync flag']
  #allocation126 [shape = 's32[]', space=sflag, size = 0x4, offset = 0, fixed_abs, tag = 'sflag constant byte address 0x0 - dummy sync flag']
  #allocation127 [shape = 's32[]', space=sflag, size = 0x4, offset = 0, fixed_abs, tag = 'sflag constant byte address 0x0 - dummy sync flag']
  #allocation128 [shape = 's32[]', space=sflag, size = 0x4, offset = 0, fixed_abs, tag = 'sflag constant byte address 0x0 - dummy sync flag']
  #allocation129 [shape = 's32[]', space=sflag, size = 0x4, offset = 0, fixed_abs, tag = 'sflag constant byte address 0x0 - dummy sync flag']
  #allocation130 [shape = 's32[]', space=sflag, size = 0x4, offset = 0, fixed_abs, tag = 'sflag constant byte address 0x0 - dummy sync flag']
  #allocation131 [shape = 's32[]', space=sflag, size = 0x4, offset = 0, fixed_abs, tag = 'sflag constant byte address 0x0 - dummy sync flag']
  #allocation132 [shape = 's32[]', space=sflag, size = 0x4, offset = 0, fixed_abs, tag = 'sflag constant byte address 0x0 - dummy sync flag']
  #allocation133 [shape = 's32[]', space=sflag, size = 0x4, offset = 0, fixed_abs, tag = 'sflag constant byte address 0x0 - dummy sync flag']
  #allocation134 [shape = 's32[]', space=sflag, size = 0x4, offset = 0, fixed_abs, tag = 'sflag constant byte address 0x0 - dummy sync flag']
  #allocation135 [shape = 's32[]', space=sflag, size = 0x4, offset = 0, fixed_abs, tag = 'sflag constant byte address 0x0 - dummy sync flag']
  #allocation136 [shape = 's32[]', space=sflag, size = 0x4, offset = 0, fixed_abs, tag = 'sflag constant byte address 0x0 - dummy sync flag']
  #allocation137 [shape = 's32[]', space=sflag, size = 0x4, offset = 0, fixed_abs, tag = 'sflag constant byte address 0x0 - dummy sync flag']
  #allocation138 [shape = 's32[]', space=sflag, size = 0x4, offset = 0, fixed_abs, tag = 'sflag constant byte address 0x0 - dummy sync flag']
  #allocation139 [shape = 's32[]', space=sflag, size = 0x4, offset = 0, fixed_abs, tag = 'sflag constant byte address 0x0 - dummy sync flag']
  %s0 = inlined_call_operand.hbm [shape: s32[2,32], index: 0, kind: input, shape index: {}]
  %s1 = inlined_call_operand.hbm [shape: f32[1000,128], index: 1, kind: input, shape index: {}]
  %s2 = inlined_call_operand.hbm [shape: f32[64,128], index: 2, kind: input, shape index: {}]
  %s3 = inlined_call_operand.vmem [shape: f32[1,128], index: 3, kind: input, shape index: {}]
  %s4 = inlined_call_operand.vmem [shape: f32[1,128], index: 4, kind: input, shape index: {}]
  %s5 = inlined_call_operand.hbm [shape: f32[64,128], index: 5, kind: output, shape index: {}]
  %s6 = sld [smem:[#allocation0]]
  $region313: #{tpu_custom_call.1} parent=0
    _
  %s8 = ssub.s32 1, %s6
  %s9 = scalar_select 0, %s8, %s6
  %11 = dma.hbm_to_smem %s0, 32, [#allocation5], [#allocation4]
  %12 = dma.done [#allocation4], 32
  %13 = sfence
  $region1: #{tpu_custom_call.1} parent=0
    #allocation6 [shape = 'u8[16384]{0}', space=vmem, size = 0x4000, scoped, tag = 'input window, operand 2, single buffered']
    #allocation7 [shape = 's32[2]{0}', space=sflag, size = 0x8, scoped, tag = 'scoped memory for tpu_custom_call.1']
    #allocation8 [shape = 's32[2]{0}', space=sflag, size = 0x8, scoped, tag = 'scoped memory for tpu_custom_call.1']
    #allocation9 [shape = 'u8[32768]{0}', space=vmem, size = 0x8000, scoped, tag = 'output window, operand 0']
    %14 = vsyncpa [#allocation7], 0
    %15 = vsyncpa [#allocation8], 0
    %s16 = scalar_lea.sflag [#allocation8], 1
    %17 = vsyncpa %s16, 0
    loop: start=0, step=1, limit=4
    $region2: #{tpu_custom_call.1} parent=1 // loop_pre_header
      _
    $region3: #{tpu_custom_call.1} parent=1 // loop_header
      %s19 = sphi 0, %s23
      %p20 = scmp.ge.s32.totalorder %s19, 4
      %s26 = sphi 0, %s38
      %s27 = sphi 0, %s34
      %s28 = sphi 0, %s26
      %s29 = sphi 0, %s27
      %s30 = sphi 0, %s28
      %s31 = sphi 0, %s29
      %s41 = sphi 0, %s43
      %s44 = sphi 0, %s41
      %s45 = sphi 0, %s44
      %s61 = sphi 0, %s45
      %s65 = sphi 0, %s65
      %s67 = sphi 0, %s65
      %s68 = sphi 0, %s67
      %s82 = sphi 0, %s68
      %s86 = sphi 0, %s86
      %s88 = sphi 0, %s86
      %s89 = sphi 0, %s88
      %s103 = sphi 0, %s89
      %s111 = sphi 0, %s113
      %s114 = sphi 0, %s111
      %s115 = sphi 0, %s114
      %s131 = sphi 0, %s115
    $region4: #{tpu_custom_call.1} parent=1 // loop_header_branch
      %22 = sbr.rel (%p20) target = $region8
    $region5: #{tpu_custom_call.1} parent=1 // loop_body
      %s24 = ssub.s32 %s19, 1
      %s25 = ssub.s32 %s19, 2
      %s32 = sadd.s32 1, %s27
      %p33 = scmp.ge.s32.totalorder %s32, 2
      %s34 = scalar_select %p33, 0, %s32
      %s35 = sadd.s32 1, %s26
      %s36 = scalar_select %p33, %s35, %s26
      %p37 = scmp.ge.s32.totalorder %s36, 1
      %s38 = scalar_select %p37, 0, %s36
      %s39 = ssub.s32 %s26, %s38
      %p40 = scmp.eq.s32.totalorder %s39, 0
      %s42 = sadd.s32 %s41, 1
      %s43 = scalar_select %p40, %s41, %s42
      %p46 = pneg %p40
      %p47 = scmp.eq.s32.totalorder %s19, 1
      %p48 = por %p46, %p47
      %p49 = scmp.ne.s32.totalorder %s41, %s44
      %p50 = scmp.eq.s32.totalorder %s19, 0
      %p51 = por %p49, %p50
      %p52 = scmp.ne.s32.totalorder %s41, %s44
      %p53 = scmp.eq.s32.totalorder %s24, 1
      %p54 = por %p52, %p53
      %p55 = scmp.ne.s32.totalorder %s44, %s45
      %p56 = scmp.eq.s32.totalorder %s24, 0
      %p57 = por %p55, %p56
      %p58 = scmp.ne.s32.totalorder %s44, %s45
      %p59 = scmp.eq.s32.totalorder %s25, 1
      %p60 = por %p58, %p59
      %p62 = scmp.ne.s32.totalorder %s45, %s61
      %p63 = scmp.eq.s32.totalorder %s25, 0
      %p64 = por %p62, %p63
      %s66 = sadd.s32 %s65, 1
      %p69 = scmp.eq.s32.totalorder %s19, 1
      %p70 = scmp.ne.s32.totalorder %s65, %s67
      %p71 = scmp.eq.s32.totalorder %s19, 0
      %p72 = por %p70, %p71
      %p73 = scmp.ne.s32.totalorder %s65, %s67
      %p74 = scmp.eq.s32.totalorder %s24, 1
      %p75 = por %p73, %p74
      %p76 = scmp.ne.s32.totalorder %s67, %s68
      %p77 = scmp.eq.s32.totalorder %s24, 0
      %p78 = por %p76, %p77
      %p79 = scmp.ne.s32.totalorder %s67, %s68
      %p80 = scmp.eq.s32.totalorder %s25, 1
      %p81 = por %p79, %p80
      %p83 = scmp.ne.s32.totalorder %s68, %s82
      %p84 = scmp.eq.s32.totalorder %s25, 0
      %p85 = por %p83, %p84
      %s87 = sadd.s32 %s86, 1
      %p90 = scmp.eq.s32.totalorder %s19, 1
      %p91 = scmp.ne.s32.totalorder %s86, %s88
      %p92 = scmp.eq.s32.totalorder %s19, 0
      %p93 = por %p91, %p92
      %p94 = scmp.ne.s32.totalorder %s86, %s88
      %p95 = scmp.eq.s32.totalorder %s24, 1
      %p96 = por %p94, %p95
      %p97 = scmp.ne.s32.totalorder %s88, %s89
      %p98 = scmp.eq.s32.totalorder %s24, 0
      %p99 = por %p97, %p98
      %p100 = scmp.ne.s32.totalorder %s88, %s89
      %p101 = scmp.eq.s32.totalorder %s25, 1
      %p102 = por %p100, %p101
      %p104 = scmp.ne.s32.totalorder %s89, %s103
      %p105 = scmp.eq.s32.totalorder %s25, 0
      %p106 = por %p104, %p105
      %s107 = sadd.s32 %s27, %s26
      %s108 = sadd.s32 %s34, %s38
      %s109 = ssub.s32 %s107, %s108
      %p110 = scmp.eq.s32.totalorder %s109, 0
      %s112 = sadd.s32 %s111, 1
      %s113 = scalar_select %p110, %s111, %s112
      %p116 = pneg %p110
      %p117 = scmp.eq.s32.totalorder %s19, 1
      %p118 = por %p116, %p117
      %p119 = scmp.ne.s32.totalorder %s111, %s114
      %p120 = scmp.eq.s32.totalorder %s19, 0
      %p121 = por %p119, %p120
      %p122 = scmp.ne.s32.totalorder %s111, %s114
      %p123 = scmp.eq.s32.totalorder %s24, 1
      %p124 = por %p122, %p123
      %p125 = scmp.ne.s32.totalorder %s114, %s115
      %p126 = scmp.eq.s32.totalorder %s24, 0
      %p127 = por %p125, %p126
      %p128 = scmp.ne.s32.totalorder %s114, %s115
      %p129 = scmp.eq.s32.totalorder %s25, 1
      %p130 = por %p128, %p129
      %p132 = scmp.ne.s32.totalorder %s115, %s131
      %p133 = scmp.eq.s32.totalorder %s25, 0
      %p134 = por %p132, %p133
      %p135 = scmp.le.s32.totalorder 1, %s19
      %p136 = scmp.lt.s32.totalorder %s19, 3
      %p137 = pnand %p135, %p136
      %p138 = pneg %p137
      // Predicated region
      $region9: #{tpu_custom_call.1} parent=5 // pred_check
        _
      $region10: #{tpu_custom_call.1} parent=5 // pred_check_branch
        %140 = sbr.rel (%p137) target = $region12
      $region11: #{tpu_custom_call.1} parent=5 // pred_region
        %s141 = ssub.s32 %s19, 1
        // Predicated region
        $region13: #{tpu_custom_call.1} parent=11 // pred_check
          %p142 = pneg %p57
        $region14: #{tpu_custom_call.1} parent=11 // pred_check_branch
          %144 = sbr.rel (%p142) target = $region16
        $region15: #{tpu_custom_call.1} parent=11 // pred_region
          %s145 = smul.u32 4, %s28
          %s147 = ssub.s32 512, 512
          %148 = vsyncadd [#allocation7], %s147
          %s149 = smul.addr %s145, 128
          %s150 = scalar_lea.hbm %s2, %s149
          %s151 = sshll.u32 [#allocation6], 4
          %s152 = int_to_ptr.vmem [resolvable:$true] %s151
          %157 = dma.hbm_to_vmem [thread:$0]  %s150, 512, %s152, [#allocation7], 128, 128, 8
        $region16: #{tpu_custom_call.1} parent=11 // pred_fallthru
          _
        // Predicated region
        $region17: #{tpu_custom_call.1} parent=11 // pred_check
          %p158 = pneg %p78
        $region18: #{tpu_custom_call.1} parent=11 // pred_check_branch
          %160 = sbr.rel (%p158) target = $region20
        $region19: #{tpu_custom_call.1} parent=11 // pred_region
          _
        $region20: #{tpu_custom_call.1} parent=11 // pred_fallthru
          _
        // Predicated region
        $region21: #{tpu_custom_call.1} parent=11 // pred_check
          %p161 = pneg %p99
        $region22: #{tpu_custom_call.1} parent=11 // pred_check_branch
          %163 = sbr.rel (%p161) target = $region24
        $region23: #{tpu_custom_call.1} parent=11 // pred_region
          _
        $region24: #{tpu_custom_call.1} parent=11 // pred_fallthru
          _
      $region12: #{tpu_custom_call.1} parent=5 // pred_fallthru
        _
      %p164 = scmp.lt.s32.totalorder %s19, 2
      // Predicated region
      $region25: #{tpu_custom_call.1} parent=5 // pred_check
        %p165 = pneg %p164
      $region26: #{tpu_custom_call.1} parent=5 // pred_check_branch
        %167 = sbr.rel (%p165) target = $region28
      $region27: #{tpu_custom_call.1} parent=5 // pred_region
        _
      $region28: #{tpu_custom_call.1} parent=5 // pred_fallthru
        _
      %p168 = scmp.le.s32.totalorder 1, %s19
      %p169 = scmp.lt.s32.totalorder %s19, 3
      %p170 = pnand %p168, %p169
      %p171 = pneg %p170
      // Predicated region
      $region29: #{tpu_custom_call.1} parent=5 // pred_check
        _
      $region30: #{tpu_custom_call.1} parent=5 // pred_check_branch
        %173 = sbr.rel (%p170) target = $region32
      $region31: #{tpu_custom_call.1} parent=5 // pred_region
        %s174 = ssub.s32 %s19, 1
        // Predicated region
        $region33: #{tpu_custom_call.1} parent=31 // pred_check
          %p175 = pneg %p57
        $region34: #{tpu_custom_call.1} parent=31 // pred_check_branch
          %177 = sbr.rel (%p175) target = $region36
        $region35: #{tpu_custom_call.1} parent=31 // pred_region
          %178 = dma.done [#allocation7], 512
        $region36: #{tpu_custom_call.1} parent=31 // pred_fallthru
          _
        %p179 = pneg %p57
        %p180 = pneg %p54
        %p181 = pneg %p78
        %p182 = pneg %p75
        %p183 = pneg %p99
        %p184 = pneg %p96
        %p185 = pneg %p127
        %p186 = pneg %p124
        %s187 = sand.u32 %s114, 1
        %s188 = scalar_lea.sflag [#allocation8], %s187
        %s189 = sand.u32 %s114, 1
        %s190 = smul.addr %s189, 32
        %s191 = scalar_lea.vmem [#allocation9], %s190
        %s192 = smul.u32 4, %s28
        %s193 = sadd.s32 %s29, %s28
        %s194 = smul.u32 4, %s193
        %s195 = smul.u32 %s28, 32
        %s196 = sand.u32 %s29, 1
        %p197 = scmp.eq.s32.totalorder %s29, 0
        // Predicated region
        $region37: #{tpu_custom_call.1} parent=31 // pred_check
          %p198 = pneg %p197
        $region38: #{tpu_custom_call.1} parent=31 // pred_check_branch
          %200 = sbr.rel (%p198) target = $region40
        $region39: #{tpu_custom_call.1} parent=31 // pred_region
          %s201 = sld [smem:[#allocation5 + %s195]]
          %s202 = smul.addr %s201, 16
          %s203 = scalar_lea.hbm %s1, %s202
          // Predicated region
          $region41: #{tpu_custom_call.1} parent=39 // pred_check
            _
          $region42: #{tpu_custom_call.1} parent=39 // pred_check_branch
            %205 = sbr.rel target = $region44
          $region43: #{tpu_custom_call.1} parent=39 // pred_region
            %206 = sst [smem:[#allocation12]] [#allocation11]
            %207 = sst [smem:[#allocation13]] [#allocation10]
          $region44: #{tpu_custom_call.1} parent=39 // pred_fallthru
            _
          %209 = shalt.err (0)
          %s211 = sshll.u32 [#allocation2], 4
          %s212 = int_to_ptr.vmem [resolvable:$true] %s211
          %214 = dma.hbm_to_vmem [thread:$0]  %s203, 16, %s212, [#allocation3]
          %s215 = sadd.s32 %s195, 1
          %s216 = sld [smem:[#allocation5 + %s215]]
          %s217 = smul.addr %s216, 16
          %s218 = scalar_lea.hbm %s1, %s217
          %s219 = scalar_lea.vmem [#allocation2], 1
          // Predicated region
          $region45: #{tpu_custom_call.1} parent=39 // pred_check
            _
          $region46: #{tpu_custom_call.1} parent=39 // pred_check_branch
            %221 = sbr.rel target = $region48
          $region47: #{tpu_custom_call.1} parent=39 // pred_region
            %222 = sst [smem:[#allocation12]] [#allocation15]
            %223 = sst [smem:[#allocation13]] [#allocation14]
          $region48: #{tpu_custom_call.1} parent=39 // pred_fallthru
            _
          %225 = shalt.err (0)
          %s227 = sshll.u32 %s219, 4
          %s228 = int_to_ptr.vmem [resolvable:$true] %s227
          %230 = dma.hbm_to_vmem [thread:$0]  %s218, 16, %s228, [#allocation3]
          %s231 = sadd.s32 %s195, 2
          %s232 = sld [smem:[#allocation5 + %s231]]
          %s233 = smul.addr %s232, 16
          %s234 = scalar_lea.hbm %s1, %s233
          %s235 = scalar_lea.vmem [#allocation2], 2
          // Predicated region
          $region49: #{tpu_custom_call.1} parent=39 // pred_check
            _
          $region50: #{tpu_custom_call.1} parent=39 // pred_check_branch
            %237 = sbr.rel target = $region52
          $region51: #{tpu_custom_call.1} parent=39 // pred_region
            %238 = sst [smem:[#allocation12]] [#allocation17]
            %239 = sst [smem:[#allocation13]] [#allocation16]
          $region52: #{tpu_custom_call.1} parent=39 // pred_fallthru
            _
          %241 = shalt.err (0)
          %s243 = sshll.u32 %s235, 4
          %s244 = int_to_ptr.vmem [resolvable:$true] %s243
          %246 = dma.hbm_to_vmem [thread:$0]  %s234, 16, %s244, [#allocation3]
          %s247 = sadd.s32 %s195, 3
          %s248 = sld [smem:[#allocation5 + %s247]]
          %s249 = smul.addr %s248, 16
          %s250 = scalar_lea.hbm %s1, %s249
          %s251 = scalar_lea.vmem [#allocation2], 3
          // Predicated region
          $region53: #{tpu_custom_call.1} parent=39 // pred_check
            _
          $region54: #{tpu_custom_call.1} parent=39 // pred_check_branch
            %253 = sbr.rel target = $region56
          $region55: #{tpu_custom_call.1} parent=39 // pred_region
            %254 = sst [smem:[#allocation12]] [#allocation19]
            %255 = sst [smem:[#allocation13]] [#allocation18]
          $region56: #{tpu_custom_call.1} parent=39 // pred_fallthru
            _
          %257 = shalt.err (0)
          %s259 = sshll.u32 %s251, 4
          %s260 = int_to_ptr.vmem [resolvable:$true] %s259
          %262 = dma.hbm_to_vmem [thread:$0]  %s250, 16, %s260, [#allocation3]
          %s263 = sadd.s32 %s195, 4
          %s264 = sld [smem:[#allocation5 + %s263]]
          %s265 = smul.addr %s264, 16
          %s266 = scalar_lea.hbm %s1, %s265
          %s267 = scalar_lea.vmem [#allocation2], 4
          // Predicated region
          $region57: #{tpu_custom_call.1} parent=39 // pred_check
            _
          $region58: #{tpu_custom_call.1} parent=39 // pred_check_branch
            %269 = sbr.rel target = $region60
          $region59: #{tpu_custom_call.1} parent=39 // pred_region
            %270 = sst [smem:[#allocation12]] [#allocation21]
            %271 = sst [smem:[#allocation13]] [#allocation20]
          $region60: #{tpu_custom_call.1} parent=39 // pred_fallthru
            _
          %273 = shalt.err (0)
          %s275 = sshll.u32 %s267, 4
          %s276 = int_to_ptr.vmem [resolvable:$true] %s275
          %278 = dma.hbm_to_vmem [thread:$0]  %s266, 16, %s276, [#allocation3]
          %s279 = sadd.s32 %s195, 5
          %s280 = sld [smem:[#allocation5 + %s279]]
          %s281 = smul.addr %s280, 16
          %s282 = scalar_lea.hbm %s1, %s281
          %s283 = scalar_lea.vmem [#allocation2], 5
          // Predicated region
          $region61: #{tpu_custom_call.1} parent=39 // pred_check
            _
          $region62: #{tpu_custom_call.1} parent=39 // pred_check_branch
            %285 = sbr.rel target = $region64
          $region63: #{tpu_custom_call.1} parent=39 // pred_region
            %286 = sst [smem:[#allocation12]] [#allocation23]
            %287 = sst [smem:[#allocation13]] [#allocation22]
          $region64: #{tpu_custom_call.1} parent=39 // pred_fallthru
            _
          %289 = shalt.err (0)
          %s291 = sshll.u32 %s283, 4
          %s292 = int_to_ptr.vmem [resolvable:$true] %s291
          %294 = dma.hbm_to_vmem [thread:$0]  %s282, 16, %s292, [#allocation3]
          %s295 = sadd.s32 %s195, 6
          %s296 = sld [smem:[#allocation5 + %s295]]
          %s297 = smul.addr %s296, 16
          %s298 = scalar_lea.hbm %s1, %s297
          %s299 = scalar_lea.vmem [#allocation2], 6
          // Predicated region
          $region65: #{tpu_custom_call.1} parent=39 // pred_check
            _
          $region66: #{tpu_custom_call.1} parent=39 // pred_check_branch
            %301 = sbr.rel target = $region68
          $region67: #{tpu_custom_call.1} parent=39 // pred_region
            %302 = sst [smem:[#allocation12]] [#allocation25]
            %303 = sst [smem:[#allocation13]] [#allocation24]
          $region68: #{tpu_custom_call.1} parent=39 // pred_fallthru
            _
          %305 = shalt.err (0)
          %s307 = sshll.u32 %s299, 4
          %s308 = int_to_ptr.vmem [resolvable:$true] %s307
          %310 = dma.hbm_to_vmem [thread:$0]  %s298, 16, %s308, [#allocation3]
          %s311 = sadd.s32 %s195, 7
          %s312 = sld [smem:[#allocation5 + %s311]]
          %s313 = smul.addr %s312, 16
          %s314 = scalar_lea.hbm %s1, %s313
          %s315 = scalar_lea.vmem [#allocation2], 7
          // Predicated region
          $region69: #{tpu_custom_call.1} parent=39 // pred_check
            _
          $region70: #{tpu_custom_call.1} parent=39 // pred_check_branch
            %317 = sbr.rel target = $region72
          $region71: #{tpu_custom_call.1} parent=39 // pred_region
            %318 = sst [smem:[#allocation12]] [#allocation27]
            %319 = sst [smem:[#allocation13]] [#allocation26]
          $region72: #{tpu_custom_call.1} parent=39 // pred_fallthru
            _
          %321 = shalt.err (0)
          %s323 = sshll.u32 %s315, 4
          %s324 = int_to_ptr.vmem [resolvable:$true] %s323
          %326 = dma.hbm_to_vmem [thread:$0]  %s314, 16, %s324, [#allocation3]
          %s327 = sadd.s32 %s195, 8
          %s328 = sld [smem:[#allocation5 + %s327]]
          %s329 = smul.addr %s328, 16
          %s330 = scalar_lea.hbm %s1, %s329
          %s331 = scalar_lea.vmem [#allocation2], 8
          // Predicated region
          $region73: #{tpu_custom_call.1} parent=39 // pred_check
            _
          $region74: #{tpu_custom_call.1} parent=39 // pred_check_branch
            %333 = sbr.rel target = $region76
          $region75: #{tpu_custom_call.1} parent=39 // pred_region
            %334 = sst [smem:[#allocation12]] [#allocation29]
            %335 = sst [smem:[#allocation13]] [#allocation28]
          $region76: #{tpu_custom_call.1} parent=39 // pred_fallthru
            _
          %337 = shalt.err (0)
          %s339 = sshll.u32 %s331, 4
          %s340 = int_to_ptr.vmem [resolvable:$true] %s339
          %342 = dma.hbm_to_vmem [thread:$0]  %s330, 16, %s340, [#allocation3]
          %s343 = sadd.s32 %s195, 9
          %s344 = sld [smem:[#allocation5 + %s343]]
          %s345 = smul.addr %s344, 16
          %s346 = scalar_lea.hbm %s1, %s345
          %s347 = scalar_lea.vmem [#allocation2], 9
          // Predicated region
          $region77: #{tpu_custom_call.1} parent=39 // pred_check
            _
          $region78: #{tpu_custom_call.1} parent=39 // pred_check_branch
            %349 = sbr.rel target = $region80
          $region79: #{tpu_custom_call.1} parent=39 // pred_region
            %350 = sst [smem:[#allocation12]] [#allocation31]
            %351 = sst [smem:[#allocation13]] [#allocation30]
          $region80: #{tpu_custom_call.1} parent=39 // pred_fallthru
            _
          %353 = shalt.err (0)
          %s355 = sshll.u32 %s347, 4
          %s356 = int_to_ptr.vmem [resolvable:$true] %s355
          %358 = dma.hbm_to_vmem [thread:$0]  %s346, 16, %s356, [#allocation3]
          %s359 = sadd.s32 %s195, 10
          %s360 = sld [smem:[#allocation5 + %s359]]
          %s361 = smul.addr %s360, 16
          %s362 = scalar_lea.hbm %s1, %s361
          %s363 = scalar_lea.vmem [#allocation2], 10
          // Predicated region
          $region81: #{tpu_custom_call.1} parent=39 // pred_check
            _
          $region82: #{tpu_custom_call.1} parent=39 // pred_check_branch
            %365 = sbr.rel target = $region84
          $region83: #{tpu_custom_call.1} parent=39 // pred_region
            %366 = sst [smem:[#allocation12]] [#allocation33]
            %367 = sst [smem:[#allocation13]] [#allocation32]
          $region84: #{tpu_custom_call.1} parent=39 // pred_fallthru
            _
          %369 = shalt.err (0)
          %s371 = sshll.u32 %s363, 4
          %s372 = int_to_ptr.vmem [resolvable:$true] %s371
          %374 = dma.hbm_to_vmem [thread:$0]  %s362, 16, %s372, [#allocation3]
          %s375 = sadd.s32 %s195, 11
          %s376 = sld [smem:[#allocation5 + %s375]]
          %s377 = smul.addr %s376, 16
          %s378 = scalar_lea.hbm %s1, %s377
          %s379 = scalar_lea.vmem [#allocation2], 11
          // Predicated region
          $region85: #{tpu_custom_call.1} parent=39 // pred_check
            _
          $region86: #{tpu_custom_call.1} parent=39 // pred_check_branch
            %381 = sbr.rel target = $region88
          $region87: #{tpu_custom_call.1} parent=39 // pred_region
            %382 = sst [smem:[#allocation12]] [#allocation35]
            %383 = sst [smem:[#allocation13]] [#allocation34]
          $region88: #{tpu_custom_call.1} parent=39 // pred_fallthru
            _
          %385 = shalt.err (0)
          %s387 = sshll.u32 %s379, 4
          %s388 = int_to_ptr.vmem [resolvable:$true] %s387
          %390 = dma.hbm_to_vmem [thread:$0]  %s378, 16, %s388, [#allocation3]
          %s391 = sadd.s32 %s195, 12
          %s392 = sld [smem:[#allocation5 + %s391]]
          %s393 = smul.addr %s392, 16
          %s394 = scalar_lea.hbm %s1, %s393
          %s395 = scalar_lea.vmem [#allocation2], 12
          // Predicated region
          $region89: #{tpu_custom_call.1} parent=39 // pred_check
            _
          $region90: #{tpu_custom_call.1} parent=39 // pred_check_branch
            %397 = sbr.rel target = $region92
          $region91: #{tpu_custom_call.1} parent=39 // pred_region
            %398 = sst [smem:[#allocation12]] [#allocation37]
            %399 = sst [smem:[#allocation13]] [#allocation36]
          $region92: #{tpu_custom_call.1} parent=39 // pred_fallthru
            _
          %401 = shalt.err (0)
          %s403 = sshll.u32 %s395, 4
          %s404 = int_to_ptr.vmem [resolvable:$true] %s403
          %406 = dma.hbm_to_vmem [thread:$0]  %s394, 16, %s404, [#allocation3]
          %s407 = sadd.s32 %s195, 13
          %s408 = sld [smem:[#allocation5 + %s407]]
          %s409 = smul.addr %s408, 16
          %s410 = scalar_lea.hbm %s1, %s409
          %s411 = scalar_lea.vmem [#allocation2], 13
          // Predicated region
          $region93: #{tpu_custom_call.1} parent=39 // pred_check
            _
          $region94: #{tpu_custom_call.1} parent=39 // pred_check_branch
            %413 = sbr.rel target = $region96
          $region95: #{tpu_custom_call.1} parent=39 // pred_region
            %414 = sst [smem:[#allocation12]] [#allocation39]
            %415 = sst [smem:[#allocation13]] [#allocation38]
          $region96: #{tpu_custom_call.1} parent=39 // pred_fallthru
            _
          %417 = shalt.err (0)
          %s419 = sshll.u32 %s411, 4
          %s420 = int_to_ptr.vmem [resolvable:$true] %s419
          %422 = dma.hbm_to_vmem [thread:$0]  %s410, 16, %s420, [#allocation3]
          %s423 = sadd.s32 %s195, 14
          %s424 = sld [smem:[#allocation5 + %s423]]
          %s425 = smul.addr %s424, 16
          %s426 = scalar_lea.hbm %s1, %s425
          %s427 = scalar_lea.vmem [#allocation2], 14
          // Predicated region
          $region97: #{tpu_custom_call.1} parent=39 // pred_check
            _
          $region98: #{tpu_custom_call.1} parent=39 // pred_check_branch
            %429 = sbr.rel target = $region100
          $region99: #{tpu_custom_call.1} parent=39 // pred_region
            %430 = sst [smem:[#allocation12]] [#allocation41]
            %431 = sst [smem:[#allocation13]] [#allocation40]
          $region100: #{tpu_custom_call.1} parent=39 // pred_fallthru
            _
          %433 = shalt.err (0)
          %s435 = sshll.u32 %s427, 4
          %s436 = int_to_ptr.vmem [resolvable:$true] %s435
          %438 = dma.hbm_to_vmem [thread:$0]  %s426, 16, %s436, [#allocation3]
          %s439 = sadd.s32 %s195, 15
          %s440 = sld [smem:[#allocation5 + %s439]]
          %s441 = smul.addr %s440, 16
          %s442 = scalar_lea.hbm %s1, %s441
          %s443 = scalar_lea.vmem [#allocation2], 15
          // Predicated region
          $region101: #{tpu_custom_call.1} parent=39 // pred_check
            _
          $region102: #{tpu_custom_call.1} parent=39 // pred_check_branch
            %445 = sbr.rel target = $region104
          $region103: #{tpu_custom_call.1} parent=39 // pred_region
            %446 = sst [smem:[#allocation12]] [#allocation43]
            %447 = sst [smem:[#allocation13]] [#allocation42]
          $region104: #{tpu_custom_call.1} parent=39 // pred_fallthru
            _
          %449 = shalt.err (0)
          %s451 = sshll.u32 %s443, 4
          %s452 = int_to_ptr.vmem [resolvable:$true] %s451
          %454 = dma.hbm_to_vmem [thread:$0]  %s442, 16, %s452, [#allocation3]
          %s455 = sadd.s32 %s195, 16
          %s456 = sld [smem:[#allocation5 + %s455]]
          %s457 = smul.addr %s456, 16
          %s458 = scalar_lea.hbm %s1, %s457
          %s459 = scalar_lea.vmem [#allocation2], 16
          // Predicated region
          $region105: #{tpu_custom_call.1} parent=39 // pred_check
            _
          $region106: #{tpu_custom_call.1} parent=39 // pred_check_branch
            %461 = sbr.rel target = $region108
          $region107: #{tpu_custom_call.1} parent=39 // pred_region
            %462 = sst [smem:[#allocation12]] [#allocation45]
            %463 = sst [smem:[#allocation13]] [#allocation44]
          $region108: #{tpu_custom_call.1} parent=39 // pred_fallthru
            _
          %465 = shalt.err (0)
          %s467 = sshll.u32 %s459, 4
          %s468 = int_to_ptr.vmem [resolvable:$true] %s467
          %470 = dma.hbm_to_vmem [thread:$0]  %s458, 16, %s468, [#allocation3]
          %s471 = sadd.s32 %s195, 17
          %s472 = sld [smem:[#allocation5 + %s471]]
          %s473 = smul.addr %s472, 16
          %s474 = scalar_lea.hbm %s1, %s473
          %s475 = scalar_lea.vmem [#allocation2], 17
          // Predicated region
          $region109: #{tpu_custom_call.1} parent=39 // pred_check
            _
          $region110: #{tpu_custom_call.1} parent=39 // pred_check_branch
            %477 = sbr.rel target = $region112
          $region111: #{tpu_custom_call.1} parent=39 // pred_region
            %478 = sst [smem:[#allocation12]] [#allocation47]
            %479 = sst [smem:[#allocation13]] [#allocation46]
          $region112: #{tpu_custom_call.1} parent=39 // pred_fallthru
            _
          %481 = shalt.err (0)
          %s483 = sshll.u32 %s475, 4
          %s484 = int_to_ptr.vmem [resolvable:$true] %s483
          %486 = dma.hbm_to_vmem [thread:$0]  %s474, 16, %s484, [#allocation3]
          %s487 = sadd.s32 %s195, 18
          %s488 = sld [smem:[#allocation5 + %s487]]
          %s489 = smul.addr %s488, 16
          %s490 = scalar_lea.hbm %s1, %s489
          %s491 = scalar_lea.vmem [#allocation2], 18
          // Predicated region
          $region113: #{tpu_custom_call.1} parent=39 // pred_check
            _
          $region114: #{tpu_custom_call.1} parent=39 // pred_check_branch
            %493 = sbr.rel target = $region116
          $region115: #{tpu_custom_call.1} parent=39 // pred_region
            %494 = sst [smem:[#allocation12]] [#allocation49]
            %495 = sst [smem:[#allocation13]] [#allocation48]
          $region116: #{tpu_custom_call.1} parent=39 // pred_fallthru
            _
          %497 = shalt.err (0)
          %s499 = sshll.u32 %s491, 4
          %s500 = int_to_ptr.vmem [resolvable:$true] %s499
          %502 = dma.hbm_to_vmem [thread:$0]  %s490, 16, %s500, [#allocation3]
          %s503 = sadd.s32 %s195, 19
          %s504 = sld [smem:[#allocation5 + %s503]]
          %s505 = smul.addr %s504, 16
          %s506 = scalar_lea.hbm %s1, %s505
          %s507 = scalar_lea.vmem [#allocation2], 19
          // Predicated region
          $region117: #{tpu_custom_call.1} parent=39 // pred_check
            _
          $region118: #{tpu_custom_call.1} parent=39 // pred_check_branch
            %509 = sbr.rel target = $region120
          $region119: #{tpu_custom_call.1} parent=39 // pred_region
            %510 = sst [smem:[#allocation12]] [#allocation51]
            %511 = sst [smem:[#allocation13]] [#allocation50]
          $region120: #{tpu_custom_call.1} parent=39 // pred_fallthru
            _
          %513 = shalt.err (0)
          %s515 = sshll.u32 %s507, 4
          %s516 = int_to_ptr.vmem [resolvable:$true] %s515
          %518 = dma.hbm_to_vmem [thread:$0]  %s506, 16, %s516, [#allocation3]
          %s519 = sadd.s32 %s195, 20
          %s520 = sld [smem:[#allocation5 + %s519]]
          %s521 = smul.addr %s520, 16
          %s522 = scalar_lea.hbm %s1, %s521
          %s523 = scalar_lea.vmem [#allocation2], 20
          // Predicated region
          $region121: #{tpu_custom_call.1} parent=39 // pred_check
            _
          $region122: #{tpu_custom_call.1} parent=39 // pred_check_branch
            %525 = sbr.rel target = $region124
          $region123: #{tpu_custom_call.1} parent=39 // pred_region
            %526 = sst [smem:[#allocation12]] [#allocation53]
            %527 = sst [smem:[#allocation13]] [#allocation52]
          $region124: #{tpu_custom_call.1} parent=39 // pred_fallthru
            _
          %529 = shalt.err (0)
          %s531 = sshll.u32 %s523, 4
          %s532 = int_to_ptr.vmem [resolvable:$true] %s531
          %534 = dma.hbm_to_vmem [thread:$0]  %s522, 16, %s532, [#allocation3]
          %s535 = sadd.s32 %s195, 21
          %s536 = sld [smem:[#allocation5 + %s535]]
          %s537 = smul.addr %s536, 16
          %s538 = scalar_lea.hbm %s1, %s537
          %s539 = scalar_lea.vmem [#allocation2], 21
          // Predicated region
          $region125: #{tpu_custom_call.1} parent=39 // pred_check
            _
          $region126: #{tpu_custom_call.1} parent=39 // pred_check_branch
            %541 = sbr.rel target = $region128
          $region127: #{tpu_custom_call.1} parent=39 // pred_region
            %542 = sst [smem:[#allocation12]] [#allocation55]
            %543 = sst [smem:[#allocation13]] [#allocation54]
          $region128: #{tpu_custom_call.1} parent=39 // pred_fallthru
            _
          %545 = shalt.err (0)
          %s547 = sshll.u32 %s539, 4
          %s548 = int_to_ptr.vmem [resolvable:$true] %s547
          %550 = dma.hbm_to_vmem [thread:$0]  %s538, 16, %s548, [#allocation3]
          %s551 = sadd.s32 %s195, 22
          %s552 = sld [smem:[#allocation5 + %s551]]
          %s553 = smul.addr %s552, 16
          %s554 = scalar_lea.hbm %s1, %s553
          %s555 = scalar_lea.vmem [#allocation2], 22
          // Predicated region
          $region129: #{tpu_custom_call.1} parent=39 // pred_check
            _
          $region130: #{tpu_custom_call.1} parent=39 // pred_check_branch
            %557 = sbr.rel target = $region132
          $region131: #{tpu_custom_call.1} parent=39 // pred_region
            %558 = sst [smem:[#allocation12]] [#allocation57]
            %559 = sst [smem:[#allocation13]] [#allocation56]
          $region132: #{tpu_custom_call.1} parent=39 // pred_fallthru
            _
          %561 = shalt.err (0)
          %s563 = sshll.u32 %s555, 4
          %s564 = int_to_ptr.vmem [resolvable:$true] %s563
          %566 = dma.hbm_to_vmem [thread:$0]  %s554, 16, %s564, [#allocation3]
          %s567 = sadd.s32 %s195, 23
          %s568 = sld [smem:[#allocation5 + %s567]]
          %s569 = smul.addr %s568, 16
          %s570 = scalar_lea.hbm %s1, %s569
          %s571 = scalar_lea.vmem [#allocation2], 23
          // Predicated region
          $region133: #{tpu_custom_call.1} parent=39 // pred_check
            _
          $region134: #{tpu_custom_call.1} parent=39 // pred_check_branch
            %573 = sbr.rel target = $region136
          $region135: #{tpu_custom_call.1} parent=39 // pred_region
            %574 = sst [smem:[#allocation12]] [#allocation59]
            %575 = sst [smem:[#allocation13]] [#allocation58]
          $region136: #{tpu_custom_call.1} parent=39 // pred_fallthru
            _
          %577 = shalt.err (0)
          %s579 = sshll.u32 %s571, 4
          %s580 = int_to_ptr.vmem [resolvable:$true] %s579
          %582 = dma.hbm_to_vmem [thread:$0]  %s570, 16, %s580, [#allocation3]
          %s583 = sadd.s32 %s195, 24
          %s584 = sld [smem:[#allocation5 + %s583]]
          %s585 = smul.addr %s584, 16
          %s586 = scalar_lea.hbm %s1, %s585
          %s587 = scalar_lea.vmem [#allocation2], 24
          // Predicated region
          $region137: #{tpu_custom_call.1} parent=39 // pred_check
            _
          $region138: #{tpu_custom_call.1} parent=39 // pred_check_branch
            %589 = sbr.rel target = $region140
          $region139: #{tpu_custom_call.1} parent=39 // pred_region
            %590 = sst [smem:[#allocation12]] [#allocation61]
            %591 = sst [smem:[#allocation13]] [#allocation60]
          $region140: #{tpu_custom_call.1} parent=39 // pred_fallthru
            _
          %593 = shalt.err (0)
          %s595 = sshll.u32 %s587, 4
          %s596 = int_to_ptr.vmem [resolvable:$true] %s595
          %598 = dma.hbm_to_vmem [thread:$0]  %s586, 16, %s596, [#allocation3]
          %s599 = sadd.s32 %s195, 25
          %s600 = sld [smem:[#allocation5 + %s599]]
          %s601 = smul.addr %s600, 16
          %s602 = scalar_lea.hbm %s1, %s601
          %s603 = scalar_lea.vmem [#allocation2], 25
          // Predicated region
          $region141: #{tpu_custom_call.1} parent=39 // pred_check
            _
          $region142: #{tpu_custom_call.1} parent=39 // pred_check_branch
            %605 = sbr.rel target = $region144
          $region143: #{tpu_custom_call.1} parent=39 // pred_region
            %606 = sst [smem:[#allocation12]] [#allocation63]
            %607 = sst [smem:[#allocation13]] [#allocation62]
          $region144: #{tpu_custom_call.1} parent=39 // pred_fallthru
            _
          %609 = shalt.err (0)
          %s611 = sshll.u32 %s603, 4
          %s612 = int_to_ptr.vmem [resolvable:$true] %s611
          %614 = dma.hbm_to_vmem [thread:$0]  %s602, 16, %s612, [#allocation3]
          %s615 = sadd.s32 %s195, 26
          %s616 = sld [smem:[#allocation5 + %s615]]
          %s617 = smul.addr %s616, 16
          %s618 = scalar_lea.hbm %s1, %s617
          %s619 = scalar_lea.vmem [#allocation2], 26
          // Predicated region
          $region145: #{tpu_custom_call.1} parent=39 // pred_check
            _
          $region146: #{tpu_custom_call.1} parent=39 // pred_check_branch
            %621 = sbr.rel target = $region148
          $region147: #{tpu_custom_call.1} parent=39 // pred_region
            %622 = sst [smem:[#allocation12]] [#allocation65]
            %623 = sst [smem:[#allocation13]] [#allocation64]
          $region148: #{tpu_custom_call.1} parent=39 // pred_fallthru
            _
          %625 = shalt.err (0)
          %s627 = sshll.u32 %s619, 4
          %s628 = int_to_ptr.vmem [resolvable:$true] %s627
          %630 = dma.hbm_to_vmem [thread:$0]  %s618, 16, %s628, [#allocation3]
          %s631 = sadd.s32 %s195, 27
          %s632 = sld [smem:[#allocation5 + %s631]]
          %s633 = smul.addr %s632, 16
          %s634 = scalar_lea.hbm %s1, %s633
          %s635 = scalar_lea.vmem [#allocation2], 27
          // Predicated region
          $region149: #{tpu_custom_call.1} parent=39 // pred_check
            _
          $region150: #{tpu_custom_call.1} parent=39 // pred_check_branch
            %637 = sbr.rel target = $region152
          $region151: #{tpu_custom_call.1} parent=39 // pred_region
            %638 = sst [smem:[#allocation12]] [#allocation67]
            %639 = sst [smem:[#allocation13]] [#allocation66]
          $region152: #{tpu_custom_call.1} parent=39 // pred_fallthru
            _
          %641 = shalt.err (0)
          %s643 = sshll.u32 %s635, 4
          %s644 = int_to_ptr.vmem [resolvable:$true] %s643
          %646 = dma.hbm_to_vmem [thread:$0]  %s634, 16, %s644, [#allocation3]
          %s647 = sadd.s32 %s195, 28
          %s648 = sld [smem:[#allocation5 + %s647]]
          %s649 = smul.addr %s648, 16
          %s650 = scalar_lea.hbm %s1, %s649
          %s651 = scalar_lea.vmem [#allocation2], 28
          // Predicated region
          $region153: #{tpu_custom_call.1} parent=39 // pred_check
            _
          $region154: #{tpu_custom_call.1} parent=39 // pred_check_branch
            %653 = sbr.rel target = $region156
          $region155: #{tpu_custom_call.1} parent=39 // pred_region
            %654 = sst [smem:[#allocation12]] [#allocation69]
            %655 = sst [smem:[#allocation13]] [#allocation68]
          $region156: #{tpu_custom_call.1} parent=39 // pred_fallthru
            _
          %657 = shalt.err (0)
          %s659 = sshll.u32 %s651, 4
          %s660 = int_to_ptr.vmem [resolvable:$true] %s659
          %662 = dma.hbm_to_vmem [thread:$0]  %s650, 16, %s660, [#allocation3]
          %s663 = sadd.s32 %s195, 29
          %s664 = sld [smem:[#allocation5 + %s663]]
          %s665 = smul.addr %s664, 16
          %s666 = scalar_lea.hbm %s1, %s665
          %s667 = scalar_lea.vmem [#allocation2], 29
          // Predicated region
          $region157: #{tpu_custom_call.1} parent=39 // pred_check
            _
          $region158: #{tpu_custom_call.1} parent=39 // pred_check_branch
            %669 = sbr.rel target = $region160
          $region159: #{tpu_custom_call.1} parent=39 // pred_region
            %670 = sst [smem:[#allocation12]] [#allocation71]
            %671 = sst [smem:[#allocation13]] [#allocation70]
          $region160: #{tpu_custom_call.1} parent=39 // pred_fallthru
            _
          %673 = shalt.err (0)
          %s675 = sshll.u32 %s667, 4
          %s676 = int_to_ptr.vmem [resolvable:$true] %s675
          %678 = dma.hbm_to_vmem [thread:$0]  %s666, 16, %s676, [#allocation3]
          %s679 = sadd.s32 %s195, 30
          %s680 = sld [smem:[#allocation5 + %s679]]
          %s681 = smul.addr %s680, 16
          %s682 = scalar_lea.hbm %s1, %s681
          %s683 = scalar_lea.vmem [#allocation2], 30
          // Predicated region
          $region161: #{tpu_custom_call.1} parent=39 // pred_check
            _
          $region162: #{tpu_custom_call.1} parent=39 // pred_check_branch
            %685 = sbr.rel target = $region164
          $region163: #{tpu_custom_call.1} parent=39 // pred_region
            %686 = sst [smem:[#allocation12]] [#allocation73]
            %687 = sst [smem:[#allocation13]] [#allocation72]
          $region164: #{tpu_custom_call.1} parent=39 // pred_fallthru
            _
          %689 = shalt.err (0)
          %s691 = sshll.u32 %s683, 4
          %s692 = int_to_ptr.vmem [resolvable:$true] %s691
          %694 = dma.hbm_to_vmem [thread:$0]  %s682, 16, %s692, [#allocation3]
          %s695 = sadd.s32 %s195, 31
          %s696 = sld [smem:[#allocation5 + %s695]]
          %s697 = smul.addr %s696, 16
          %s698 = scalar_lea.hbm %s1, %s697
          %s699 = scalar_lea.vmem [#allocation2], 31
          // Predicated region
          $region165: #{tpu_custom_call.1} parent=39 // pred_check
            _
          $region166: #{tpu_custom_call.1} parent=39 // pred_check_branch
            %701 = sbr.rel target = $region168
          $region167: #{tpu_custom_call.1} parent=39 // pred_region
            %702 = sst [smem:[#allocation12]] [#allocation75]
            %703 = sst [smem:[#allocation13]] [#allocation74]
          $region168: #{tpu_custom_call.1} parent=39 // pred_fallthru
            _
          %705 = shalt.err (0)
          %s707 = sshll.u32 %s699, 4
          %s708 = int_to_ptr.vmem [resolvable:$true] %s707
          %710 = dma.hbm_to_vmem [thread:$0]  %s698, 16, %s708, [#allocation3]
        $region40: #{tpu_custom_call.1} parent=31 // pred_fallthru
          _
        %s711 = sadd.s32 %s29, 1
        %p712 = scmp.lt.s32.totalorder %s711, 2
        // Predicated region
        $region169: #{tpu_custom_call.1} parent=31 // pred_check
          %p713 = pneg %p712
        $region170: #{tpu_custom_call.1} parent=31 // pred_check_branch
          %715 = sbr.rel (%p713) target = $region172
        $region171: #{tpu_custom_call.1} parent=31 // pred_region
          %s716 = ssub.s32 1, %s196
          %s717 = sshra.s32 %s195, 7
          %s718 = sand.u32 %s195, 127
          %s719 = sadd.s32 %s717, %s711
          %s720 = smul.u32 %s719, 128
          %s721 = sshra.s32 %s195, 7
          %s722 = sand.u32 %s195, 127
          %s723 = sadd.s32 %s720, %s722
          %s724 = sld [smem:[#allocation5 + %s723]]
          %s725 = smul.addr %s724, 16
          %s726 = scalar_lea.hbm %s1, %s725
          %s727 = smul.u32 %s716, 32
          %s728 = scalar_lea.vmem [#allocation2], %s727
          %s729 = scalar_lea.sflag [#allocation3], %s716
          // Predicated region
          $region173: #{tpu_custom_call.1} parent=171 // pred_check
            _
          $region174: #{tpu_custom_call.1} parent=171 // pred_check_branch
            %731 = sbr.rel target = $region176
          $region175: #{tpu_custom_call.1} parent=171 // pred_region
            %732 = sst [smem:[#allocation12]] [#allocation77]
            %733 = sst [smem:[#allocation13]] [#allocation76]
          $region176: #{tpu_custom_call.1} parent=171 // pred_fallthru
            _
          %735 = shalt.err (0)
          %s737 = sshll.u32 %s728, 4
          %s738 = int_to_ptr.vmem [resolvable:$true] %s737
          %740 = dma.hbm_to_vmem [thread:$0]  %s726, 16, %s738, %s729
          %s741 = sadd.s32 %s195, 1
          %s742 = sshra.s32 %s741, 7
          %s743 = sand.u32 %s741, 127
          %s744 = sadd.s32 %s742, %s711
          %s745 = smul.u32 %s744, 128
          %s746 = sshra.s32 %s741, 7
          %s747 = sand.u32 %s741, 127
          %s748 = sadd.s32 %s745, %s747
          %s749 = sld [smem:[#allocation5 + %s748]]
          %s750 = smul.addr %s749, 16
          %s751 = scalar_lea.hbm %s1, %s750
          %s752 = sadd.s32 1, %s727
          %s753 = scalar_lea.vmem [#allocation2], %s752
          // Predicated region
          $region177: #{tpu_custom_call.1} parent=171 // pred_check
            _
          $region178: #{tpu_custom_call.1} parent=171 // pred_check_branch
            %755 = sbr.rel target = $region180
          $region179: #{tpu_custom_call.1} parent=171 // pred_region
            %756 = sst [smem:[#allocation12]] [#allocation79]
            %757 = sst [smem:[#allocation13]] [#allocation78]
          $region180: #{tpu_custom_call.1} parent=171 // pred_fallthru
            _
          %759 = shalt.err (0)
          %s761 = sshll.u32 %s753, 4
          %s762 = int_to_ptr.vmem [resolvable:$true] %s761
          %764 = dma.hbm_to_vmem [thread:$0]  %s751, 16, %s762, %s729
          %s765 = sadd.s32 %s195, 2
          %s766 = sshra.s32 %s765, 7
          %s767 = sand.u32 %s765, 127
          %s768 = sadd.s32 %s766, %s711
          %s769 = smul.u32 %s768, 128
          %s770 = sshra.s32 %s765, 7
          %s771 = sand.u32 %s765, 127
          %s772 = sadd.s32 %s769, %s771
          %s773 = sld [smem:[#allocation5 + %s772]]
          %s774 = smul.addr %s773, 16
          %s775 = scalar_lea.hbm %s1, %s774
          %s776 = sadd.s32 2, %s727
          %s777 = scalar_lea.vmem [#allocation2], %s776
          // Predicated region
          $region181: #{tpu_custom_call.1} parent=171 // pred_check
            _
          $region182: #{tpu_custom_call.1} parent=171 // pred_check_branch
            %779 = sbr.rel target = $region184
          $region183: #{tpu_custom_call.1} parent=171 // pred_region
            %780 = sst [smem:[#allocation12]] [#allocation81]
            %781 = sst [smem:[#allocation13]] [#allocation80]
          $region184: #{tpu_custom_call.1} parent=171 // pred_fallthru
            _
          %783 = shalt.err (0)
          %s785 = sshll.u32 %s777, 4
          %s786 = int_to_ptr.vmem [resolvable:$true] %s785
          %788 = dma.hbm_to_vmem [thread:$0]  %s775, 16, %s786, %s729
          %s789 = sadd.s32 %s195, 3
          %s790 = sshra.s32 %s789, 7
          %s791 = sand.u32 %s789, 127
          %s792 = sadd.s32 %s790, %s711
          %s793 = smul.u32 %s792, 128
          %s794 = sshra.s32 %s789, 7
          %s795 = sand.u32 %s789, 127
          %s796 = sadd.s32 %s793, %s795
          %s797 = sld [smem:[#allocation5 + %s796]]
          %s798 = smul.addr %s797, 16
          %s799 = scalar_lea.hbm %s1, %s798
          %s800 = sadd.s32 3, %s727
          %s801 = scalar_lea.vmem [#allocation2], %s800
          // Predicated region
          $region185: #{tpu_custom_call.1} parent=171 // pred_check
            _
          $region186: #{tpu_custom_call.1} parent=171 // pred_check_branch
            %803 = sbr.rel target = $region188
          $region187: #{tpu_custom_call.1} parent=171 // pred_region
            %804 = sst [smem:[#allocation12]] [#allocation83]
            %805 = sst [smem:[#allocation13]] [#allocation82]
          $region188: #{tpu_custom_call.1} parent=171 // pred_fallthru
            _
          %807 = shalt.err (0)
          %s809 = sshll.u32 %s801, 4
          %s810 = int_to_ptr.vmem [resolvable:$true] %s809
          %812 = dma.hbm_to_vmem [thread:$0]  %s799, 16, %s810, %s729
          %s813 = sadd.s32 %s195, 4
          %s814 = sshra.s32 %s813, 7
          %s815 = sand.u32 %s813, 127
          %s816 = sadd.s32 %s814, %s711
          %s817 = smul.u32 %s816, 128
          %s818 = sshra.s32 %s813, 7
          %s819 = sand.u32 %s813, 127
          %s820 = sadd.s32 %s817, %s819
          %s821 = sld [smem:[#allocation5 + %s820]]
          %s822 = smul.addr %s821, 16
          %s823 = scalar_lea.hbm %s1, %s822
          %s824 = sadd.s32 4, %s727
          %s825 = scalar_lea.vmem [#allocation2], %s824
          // Predicated region
          $region189: #{tpu_custom_call.1} parent=171 // pred_check
            _
          $region190: #{tpu_custom_call.1} parent=171 // pred_check_branch
            %827 = sbr.rel target = $region192
          $region191: #{tpu_custom_call.1} parent=171 // pred_region
            %828 = sst [smem:[#allocation12]] [#allocation85]
            %829 = sst [smem:[#allocation13]] [#allocation84]
          $region192: #{tpu_custom_call.1} parent=171 // pred_fallthru
            _
          %831 = shalt.err (0)
          %s833 = sshll.u32 %s825, 4
          %s834 = int_to_ptr.vmem [resolvable:$true] %s833
          %836 = dma.hbm_to_vmem [thread:$0]  %s823, 16, %s834, %s729
          %s837 = sadd.s32 %s195, 5
          %s838 = sshra.s32 %s837, 7
          %s839 = sand.u32 %s837, 127
          %s840 = sadd.s32 %s838, %s711
          %s841 = smul.u32 %s840, 128
          %s842 = sshra.s32 %s837, 7
          %s843 = sand.u32 %s837, 127
          %s844 = sadd.s32 %s841, %s843
          %s845 = sld [smem:[#allocation5 + %s844]]
          %s846 = smul.addr %s845, 16
          %s847 = scalar_lea.hbm %s1, %s846
          %s848 = sadd.s32 5, %s727
          %s849 = scalar_lea.vmem [#allocation2], %s848
          // Predicated region
          $region193: #{tpu_custom_call.1} parent=171 // pred_check
            _
          $region194: #{tpu_custom_call.1} parent=171 // pred_check_branch
            %851 = sbr.rel target = $region196
          $region195: #{tpu_custom_call.1} parent=171 // pred_region
            %852 = sst [smem:[#allocation12]] [#allocation87]
            %853 = sst [smem:[#allocation13]] [#allocation86]
          $region196: #{tpu_custom_call.1} parent=171 // pred_fallthru
            _
          %855 = shalt.err (0)
          %s857 = sshll.u32 %s849, 4
          %s858 = int_to_ptr.vmem [resolvable:$true] %s857
          %860 = dma.hbm_to_vmem [thread:$0]  %s847, 16, %s858, %s729
          %s861 = sadd.s32 %s195, 6
          %s862 = sshra.s32 %s861, 7
          %s863 = sand.u32 %s861, 127
          %s864 = sadd.s32 %s862, %s711
          %s865 = smul.u32 %s864, 128
          %s866 = sshra.s32 %s861, 7
          %s867 = sand.u32 %s861, 127
          %s868 = sadd.s32 %s865, %s867
          %s869 = sld [smem:[#allocation5 + %s868]]
          %s870 = smul.addr %s869, 16
          %s871 = scalar_lea.hbm %s1, %s870
          %s872 = sadd.s32 6, %s727
          %s873 = scalar_lea.vmem [#allocation2], %s872
          // Predicated region
          $region197: #{tpu_custom_call.1} parent=171 // pred_check
            _
          $region198: #{tpu_custom_call.1} parent=171 // pred_check_branch
            %875 = sbr.rel target = $region200
          $region199: #{tpu_custom_call.1} parent=171 // pred_region
            %876 = sst [smem:[#allocation12]] [#allocation89]
            %877 = sst [smem:[#allocation13]] [#allocation88]
          $region200: #{tpu_custom_call.1} parent=171 // pred_fallthru
            _
          %879 = shalt.err (0)
          %s881 = sshll.u32 %s873, 4
          %s882 = int_to_ptr.vmem [resolvable:$true] %s881
          %884 = dma.hbm_to_vmem [thread:$0]  %s871, 16, %s882, %s729
          %s885 = sadd.s32 %s195, 7
          %s886 = sshra.s32 %s885, 7
          %s887 = sand.u32 %s885, 127
          %s888 = sadd.s32 %s886, %s711
          %s889 = smul.u32 %s888, 128
          %s890 = sshra.s32 %s885, 7
          %s891 = sand.u32 %s885, 127
          %s892 = sadd.s32 %s889, %s891
          %s893 = sld [smem:[#allocation5 + %s892]]
          %s894 = smul.addr %s893, 16
          %s895 = scalar_lea.hbm %s1, %s894
          %s896 = sadd.s32 7, %s727
          %s897 = scalar_lea.vmem [#allocation2], %s896
          // Predicated region
          $region201: #{tpu_custom_call.1} parent=171 // pred_check
            _
          $region202: #{tpu_custom_call.1} parent=171 // pred_check_branch
            %899 = sbr.rel target = $region204
          $region203: #{tpu_custom_call.1} parent=171 // pred_region
            %900 = sst [smem:[#allocation12]] [#allocation91]
            %901 = sst [smem:[#allocation13]] [#allocation90]
          $region204: #{tpu_custom_call.1} parent=171 // pred_fallthru
            _
          %903 = shalt.err (0)
          %s905 = sshll.u32 %s897, 4
          %s906 = int_to_ptr.vmem [resolvable:$true] %s905
          %908 = dma.hbm_to_vmem [thread:$0]  %s895, 16, %s906, %s729
          %s909 = sadd.s32 %s195, 8
          %s910 = sshra.s32 %s909, 7
          %s911 = sand.u32 %s909, 127
          %s912 = sadd.s32 %s910, %s711
          %s913 = smul.u32 %s912, 128
          %s914 = sshra.s32 %s909, 7
          %s915 = sand.u32 %s909, 127
          %s916 = sadd.s32 %s913, %s915
          %s917 = sld [smem:[#allocation5 + %s916]]
          %s918 = smul.addr %s917, 16
          %s919 = scalar_lea.hbm %s1, %s918
          %s920 = sadd.s32 8, %s727
          %s921 = scalar_lea.vmem [#allocation2], %s920
          // Predicated region
          $region205: #{tpu_custom_call.1} parent=171 // pred_check
            _
          $region206: #{tpu_custom_call.1} parent=171 // pred_check_branch
            %923 = sbr.rel target = $region208
          $region207: #{tpu_custom_call.1} parent=171 // pred_region
            %924 = sst [smem:[#allocation12]] [#allocation93]
            %925 = sst [smem:[#allocation13]] [#allocation92]
          $region208: #{tpu_custom_call.1} parent=171 // pred_fallthru
            _
          %927 = shalt.err (0)
          %s929 = sshll.u32 %s921, 4
          %s930 = int_to_ptr.vmem [resolvable:$true] %s929
          %932 = dma.hbm_to_vmem [thread:$0]  %s919, 16, %s930, %s729
          %s933 = sadd.s32 %s195, 9
          %s934 = sshra.s32 %s933, 7
          %s935 = sand.u32 %s933, 127
          %s936 = sadd.s32 %s934, %s711
          %s937 = smul.u32 %s936, 128
          %s938 = sshra.s32 %s933, 7
          %s939 = sand.u32 %s933, 127
          %s940 = sadd.s32 %s937, %s939
          %s941 = sld [smem:[#allocation5 + %s940]]
          %s942 = smul.addr %s941, 16
          %s943 = scalar_lea.hbm %s1, %s942
          %s944 = sadd.s32 9, %s727
          %s945 = scalar_lea.vmem [#allocation2], %s944
          // Predicated region
          $region209: #{tpu_custom_call.1} parent=171 // pred_check
            _
          $region210: #{tpu_custom_call.1} parent=171 // pred_check_branch
            %947 = sbr.rel target = $region212
          $region211: #{tpu_custom_call.1} parent=171 // pred_region
            %948 = sst [smem:[#allocation12]] [#allocation95]
            %949 = sst [smem:[#allocation13]] [#allocation94]
          $region212: #{tpu_custom_call.1} parent=171 // pred_fallthru
            _
          %951 = shalt.err (0)
          %s953 = sshll.u32 %s945, 4
          %s954 = int_to_ptr.vmem [resolvable:$true] %s953
          %956 = dma.hbm_to_vmem [thread:$0]  %s943, 16, %s954, %s729
          %s957 = sadd.s32 %s195, 10
          %s958 = sshra.s32 %s957, 7
          %s959 = sand.u32 %s957, 127
          %s960 = sadd.s32 %s958, %s711
          %s961 = smul.u32 %s960, 128
          %s962 = sshra.s32 %s957, 7
          %s963 = sand.u32 %s957, 127
          %s964 = sadd.s32 %s961, %s963
          %s965 = sld [smem:[#allocation5 + %s964]]
          %s966 = smul.addr %s965, 16
          %s967 = scalar_lea.hbm %s1, %s966
          %s968 = sadd.s32 10, %s727
          %s969 = scalar_lea.vmem [#allocation2], %s968
          // Predicated region
          $region213: #{tpu_custom_call.1} parent=171 // pred_check
            _
          $region214: #{tpu_custom_call.1} parent=171 // pred_check_branch
            %971 = sbr.rel target = $region216
          $region215: #{tpu_custom_call.1} parent=171 // pred_region
            %972 = sst [smem:[#allocation12]] [#allocation97]
            %973 = sst [smem:[#allocation13]] [#allocation96]
          $region216: #{tpu_custom_call.1} parent=171 // pred_fallthru
            _
          %975 = shalt.err (0)
          %s977 = sshll.u32 %s969, 4
          %s978 = int_to_ptr.vmem [resolvable:$true] %s977
          %980 = dma.hbm_to_vmem [thread:$0]  %s967, 16, %s978, %s729
          %s981 = sadd.s32 %s195, 11
          %s982 = sshra.s32 %s981, 7
          %s983 = sand.u32 %s981, 127
          %s984 = sadd.s32 %s982, %s711
          %s985 = smul.u32 %s984, 128
          %s986 = sshra.s32 %s981, 7
          %s987 = sand.u32 %s981, 127
          %s988 = sadd.s32 %s985, %s987
          %s989 = sld [smem:[#allocation5 + %s988]]
          %s990 = smul.addr %s989, 16
          %s991 = scalar_lea.hbm %s1, %s990
          %s992 = sadd.s32 11, %s727
          %s993 = scalar_lea.vmem [#allocation2], %s992
          // Predicated region
          $region217: #{tpu_custom_call.1} parent=171 // pred_check
            _
          $region218: #{tpu_custom_call.1} parent=171 // pred_check_branch
            %995 = sbr.rel target = $region220
          $region219: #{tpu_custom_call.1} parent=171 // pred_region
            %996 = sst [smem:[#allocation12]] [#allocation99]
            %997 = sst [smem:[#allocation13]] [#allocation98]
          $region220: #{tpu_custom_call.1} parent=171 // pred_fallthru
            _
          %999 = shalt.err (0)
          %s1001 = sshll.u32 %s993, 4
          %s1002 = int_to_ptr.vmem [resolvable:$true] %s1001
          %1004 = dma.hbm_to_vmem [thread:$0]  %s991, 16, %s1002, %s729
          %s1005 = sadd.s32 %s195, 12
          %s1006 = sshra.s32 %s1005, 7
          %s1007 = sand.u32 %s1005, 127
          %s1008 = sadd.s32 %s1006, %s711
          %s1009 = smul.u32 %s1008, 128
          %s1010 = sshra.s32 %s1005, 7
          %s1011 = sand.u32 %s1005, 127
          %s1012 = sadd.s32 %s1009, %s1011
          %s1013 = sld [smem:[#allocation5 + %s1012]]
          %s1014 = smul.addr %s1013, 16
          %s1015 = scalar_lea.hbm %s1, %s1014
          %s1016 = sadd.s32 12, %s727
          %s1017 = scalar_lea.vmem [#allocation2], %s1016
          // Predicated region
          $region221: #{tpu_custom_call.1} parent=171 // pred_check
            _
          $region222: #{tpu_custom_call.1} parent=171 // pred_check_branch
            %1019 = sbr.rel target = $region224
          $region223: #{tpu_custom_call.1} parent=171 // pred_region
            %1020 = sst [smem:[#allocation12]] [#allocation101]
            %1021 = sst [smem:[#allocation13]] [#allocation100]
          $region224: #{tpu_custom_call.1} parent=171 // pred_fallthru
            _
          %1023 = shalt.err (0)
          %s1025 = sshll.u32 %s1017, 4
          %s1026 = int_to_ptr.vmem [resolvable:$true] %s1025
          %1028 = dma.hbm_to_vmem [thread:$0]  %s1015, 16, %s1026, %s729
          %s1029 = sadd.s32 %s195, 13
          %s1030 = sshra.s32 %s1029, 7
          %s1031 = sand.u32 %s1029, 127
          %s1032 = sadd.s32 %s1030, %s711
          %s1033 = smul.u32 %s1032, 128
          %s1034 = sshra.s32 %s1029, 7
          %s1035 = sand.u32 %s1029, 127
          %s1036 = sadd.s32 %s1033, %s1035
          %s1037 = sld [smem:[#allocation5 + %s1036]]
          %s1038 = smul.addr %s1037, 16
          %s1039 = scalar_lea.hbm %s1, %s1038
          %s1040 = sadd.s32 13, %s727
          %s1041 = scalar_lea.vmem [#allocation2], %s1040
          // Predicated region
          $region225: #{tpu_custom_call.1} parent=171 // pred_check
            _
          $region226: #{tpu_custom_call.1} parent=171 // pred_check_branch
            %1043 = sbr.rel target = $region228
          $region227: #{tpu_custom_call.1} parent=171 // pred_region
            %1044 = sst [smem:[#allocation12]] [#allocation103]
            %1045 = sst [smem:[#allocation13]] [#allocation102]
          $region228: #{tpu_custom_call.1} parent=171 // pred_fallthru
            _
          %1047 = shalt.err (0)
          %s1049 = sshll.u32 %s1041, 4
          %s1050 = int_to_ptr.vmem [resolvable:$true] %s1049
          %1052 = dma.hbm_to_vmem [thread:$0]  %s1039, 16, %s1050, %s729
          %s1053 = sadd.s32 %s195, 14
          %s1054 = sshra.s32 %s1053, 7
          %s1055 = sand.u32 %s1053, 127
          %s1056 = sadd.s32 %s1054, %s711
          %s1057 = smul.u32 %s1056, 128
          %s1058 = sshra.s32 %s1053, 7
          %s1059 = sand.u32 %s1053, 127
          %s1060 = sadd.s32 %s1057, %s1059
          %s1061 = sld [smem:[#allocation5 + %s1060]]
          %s1062 = smul.addr %s1061, 16
          %s1063 = scalar_lea.hbm %s1, %s1062
          %s1064 = sadd.s32 14, %s727
          %s1065 = scalar_lea.vmem [#allocation2], %s1064
          // Predicated region
          $region229: #{tpu_custom_call.1} parent=171 // pred_check
            _
          $region230: #{tpu_custom_call.1} parent=171 // pred_check_branch
            %1067 = sbr.rel target = $region232
          $region231: #{tpu_custom_call.1} parent=171 // pred_region
            %1068 = sst [smem:[#allocation12]] [#allocation105]
            %1069 = sst [smem:[#allocation13]] [#allocation104]
          $region232: #{tpu_custom_call.1} parent=171 // pred_fallthru
            _
          %1071 = shalt.err (0)
          %s1073 = sshll.u32 %s1065, 4
          %s1074 = int_to_ptr.vmem [resolvable:$true] %s1073
          %1076 = dma.hbm_to_vmem [thread:$0]  %s1063, 16, %s1074, %s729
          %s1077 = sadd.s32 %s195, 15
          %s1078 = sshra.s32 %s1077, 7
          %s1079 = sand.u32 %s1077, 127
          %s1080 = sadd.s32 %s1078, %s711
          %s1081 = smul.u32 %s1080, 128
          %s1082 = sshra.s32 %s1077, 7
          %s1083 = sand.u32 %s1077, 127
          %s1084 = sadd.s32 %s1081, %s1083
          %s1085 = sld [smem:[#allocation5 + %s1084]]
          %s1086 = smul.addr %s1085, 16
          %s1087 = scalar_lea.hbm %s1, %s1086
          %s1088 = sadd.s32 15, %s727
          %s1089 = scalar_lea.vmem [#allocation2], %s1088
          // Predicated region
          $region233: #{tpu_custom_call.1} parent=171 // pred_check
            _
          $region234: #{tpu_custom_call.1} parent=171 // pred_check_branch
            %1091 = sbr.rel target = $region236
          $region235: #{tpu_custom_call.1} parent=171 // pred_region
            %1092 = sst [smem:[#allocation12]] [#allocation107]
            %1093 = sst [smem:[#allocation13]] [#allocation106]
          $region236: #{tpu_custom_call.1} parent=171 // pred_fallthru
            _
          %1095 = shalt.err (0)
          %s1097 = sshll.u32 %s1089, 4
          %s1098 = int_to_ptr.vmem [resolvable:$true] %s1097
          %1100 = dma.hbm_to_vmem [thread:$0]  %s1087, 16, %s1098, %s729
          %s1101 = sadd.s32 %s195, 16
          %s1102 = sshra.s32 %s1101, 7
          %s1103 = sand.u32 %s1101, 127
          %s1104 = sadd.s32 %s1102, %s711
          %s1105 = smul.u32 %s1104, 128
          %s1106 = sshra.s32 %s1101, 7
          %s1107 = sand.u32 %s1101, 127
          %s1108 = sadd.s32 %s1105, %s1107
          %s1109 = sld [smem:[#allocation5 + %s1108]]
          %s1110 = smul.addr %s1109, 16
          %s1111 = scalar_lea.hbm %s1, %s1110
          %s1112 = sadd.s32 16, %s727
          %s1113 = scalar_lea.vmem [#allocation2], %s1112
          // Predicated region
          $region237: #{tpu_custom_call.1} parent=171 // pred_check
            _
          $region238: #{tpu_custom_call.1} parent=171 // pred_check_branch
            %1115 = sbr.rel target = $region240
          $region239: #{tpu_custom_call.1} parent=171 // pred_region
            %1116 = sst [smem:[#allocation12]] [#allocation109]
            %1117 = sst [smem:[#allocation13]] [#allocation108]
          $region240: #{tpu_custom_call.1} parent=171 // pred_fallthru
            _
          %1119 = shalt.err (0)
          %s1121 = sshll.u32 %s1113, 4
          %s1122 = int_to_ptr.vmem [resolvable:$true] %s1121
          %1124 = dma.hbm_to_vmem [thread:$0]  %s1111, 16, %s1122, %s729
          %s1125 = sadd.s32 %s195, 17
          %s1126 = sshra.s32 %s1125, 7
          %s1127 = sand.u32 %s1125, 127
          %s1128 = sadd.s32 %s1126, %s711
          %s1129 = smul.u32 %s1128, 128
          %s1130 = sshra.s32 %s1125, 7
          %s1131 = sand.u32 %s1125, 127
          %s1132 = sadd.s32 %s1129, %s1131
          %s1133 = sld [smem:[#allocation5 + %s1132]]
          %s1134 = smul.addr %s1133, 16
          %s1135 = scalar_lea.hbm %s1, %s1134
          %s1136 = sadd.s32 17, %s727
          %s1137 = scalar_lea.vmem [#allocation2], %s1136
          // Predicated region
          $region241: #{tpu_custom_call.1} parent=171 // pred_check
            _
          $region242: #{tpu_custom_call.1} parent=171 // pred_check_branch
            %1139 = sbr.rel target = $region244
          $region243: #{tpu_custom_call.1} parent=171 // pred_region
            %1140 = sst [smem:[#allocation12]] [#allocation111]
            %1141 = sst [smem:[#allocation13]] [#allocation110]
          $region244: #{tpu_custom_call.1} parent=171 // pred_fallthru
            _
          %1143 = shalt.err (0)
          %s1145 = sshll.u32 %s1137, 4
          %s1146 = int_to_ptr.vmem [resolvable:$true] %s1145
          %1148 = dma.hbm_to_vmem [thread:$0]  %s1135, 16, %s1146, %s729
          %s1149 = sadd.s32 %s195, 18
          %s1150 = sshra.s32 %s1149, 7
          %s1151 = sand.u32 %s1149, 127
          %s1152 = sadd.s32 %s1150, %s711
          %s1153 = smul.u32 %s1152, 128
          %s1154 = sshra.s32 %s1149, 7
          %s1155 = sand.u32 %s1149, 127
          %s1156 = sadd.s32 %s1153, %s1155
          %s1157 = sld [smem:[#allocation5 + %s1156]]
          %s1158 = smul.addr %s1157, 16
          %s1159 = scalar_lea.hbm %s1, %s1158
          %s1160 = sadd.s32 18, %s727
          %s1161 = scalar_lea.vmem [#allocation2], %s1160
          // Predicated region
          $region245: #{tpu_custom_call.1} parent=171 // pred_check
            _
          $region246: #{tpu_custom_call.1} parent=171 // pred_check_branch
            %1163 = sbr.rel target = $region248
          $region247: #{tpu_custom_call.1} parent=171 // pred_region
            %1164 = sst [smem:[#allocation12]] [#allocation113]
            %1165 = sst [smem:[#allocation13]] [#allocation112]
          $region248: #{tpu_custom_call.1} parent=171 // pred_fallthru
            _
          %1167 = shalt.err (0)
          %s1169 = sshll.u32 %s1161, 4
          %s1170 = int_to_ptr.vmem [resolvable:$true] %s1169
          %1172 = dma.hbm_to_vmem [thread:$0]  %s1159, 16, %s1170, %s729
          %s1173 = sadd.s32 %s195, 19
          %s1174 = sshra.s32 %s1173, 7
          %s1175 = sand.u32 %s1173, 127
          %s1176 = sadd.s32 %s1174, %s711
          %s1177 = smul.u32 %s1176, 128
          %s1178 = sshra.s32 %s1173, 7
          %s1179 = sand.u32 %s1173, 127
          %s1180 = sadd.s32 %s1177, %s1179
          %s1181 = sld [smem:[#allocation5 + %s1180]]
          %s1182 = smul.addr %s1181, 16
          %s1183 = scalar_lea.hbm %s1, %s1182
          %s1184 = sadd.s32 19, %s727
          %s1185 = scalar_lea.vmem [#allocation2], %s1184
          // Predicated region
          $region249: #{tpu_custom_call.1} parent=171 // pred_check
            _
          $region250: #{tpu_custom_call.1} parent=171 // pred_check_branch
            %1187 = sbr.rel target = $region252
          $region251: #{tpu_custom_call.1} parent=171 // pred_region
            %1188 = sst [smem:[#allocation12]] [#allocation115]
            %1189 = sst [smem:[#allocation13]] [#allocation114]
          $region252: #{tpu_custom_call.1} parent=171 // pred_fallthru
            _
          %1191 = shalt.err (0)
          %s1193 = sshll.u32 %s1185, 4
          %s1194 = int_to_ptr.vmem [resolvable:$true] %s1193
          %1196 = dma.hbm_to_vmem [thread:$0]  %s1183, 16, %s1194, %s729
          %s1197 = sadd.s32 %s195, 20
          %s1198 = sshra.s32 %s1197, 7
          %s1199 = sand.u32 %s1197, 127
          %s1200 = sadd.s32 %s1198, %s711
          %s1201 = smul.u32 %s1200, 128
          %s1202 = sshra.s32 %s1197, 7
          %s1203 = sand.u32 %s1197, 127
          %s1204 = sadd.s32 %s1201, %s1203
          %s1205 = sld [smem:[#allocation5 + %s1204]]
          %s1206 = smul.addr %s1205, 16
          %s1207 = scalar_lea.hbm %s1, %s1206
          %s1208 = sadd.s32 20, %s727
          %s1209 = scalar_lea.vmem [#allocation2], %s1208
          // Predicated region
          $region253: #{tpu_custom_call.1} parent=171 // pred_check
            _
          $region254: #{tpu_custom_call.1} parent=171 // pred_check_branch
            %1211 = sbr.rel target = $region256
          $region255: #{tpu_custom_call.1} parent=171 // pred_region
            %1212 = sst [smem:[#allocation12]] [#allocation117]
            %1213 = sst [smem:[#allocation13]] [#allocation116]
          $region256: #{tpu_custom_call.1} parent=171 // pred_fallthru
            _
          %1215 = shalt.err (0)
          %s1217 = sshll.u32 %s1209, 4
          %s1218 = int_to_ptr.vmem [resolvable:$true] %s1217
          %1220 = dma.hbm_to_vmem [thread:$0]  %s1207, 16, %s1218, %s729
          %s1221 = sadd.s32 %s195, 21
          %s1222 = sshra.s32 %s1221, 7
          %s1223 = sand.u32 %s1221, 127
          %s1224 = sadd.s32 %s1222, %s711
          %s1225 = smul.u32 %s1224, 128
          %s1226 = sshra.s32 %s1221, 7
          %s1227 = sand.u32 %s1221, 127
          %s1228 = sadd.s32 %s1225, %s1227
          %s1229 = sld [smem:[#allocation5 + %s1228]]
          %s1230 = smul.addr %s1229, 16
          %s1231 = scalar_lea.hbm %s1, %s1230
          %s1232 = sadd.s32 21, %s727
          %s1233 = scalar_lea.vmem [#allocation2], %s1232
          // Predicated region
          $region257: #{tpu_custom_call.1} parent=171 // pred_check
            _
          $region258: #{tpu_custom_call.1} parent=171 // pred_check_branch
            %1235 = sbr.rel target = $region260
          $region259: #{tpu_custom_call.1} parent=171 // pred_region
            %1236 = sst [smem:[#allocation12]] [#allocation119]
            %1237 = sst [smem:[#allocation13]] [#allocation118]
          $region260: #{tpu_custom_call.1} parent=171 // pred_fallthru
            _
          %1239 = shalt.err (0)
          %s1241 = sshll.u32 %s1233, 4
          %s1242 = int_to_ptr.vmem [resolvable:$true] %s1241
          %1244 = dma.hbm_to_vmem [thread:$0]  %s1231, 16, %s1242, %s729
          %s1245 = sadd.s32 %s195, 22
          %s1246 = sshra.s32 %s1245, 7
          %s1247 = sand.u32 %s1245, 127
          %s1248 = sadd.s32 %s1246, %s711
          %s1249 = smul.u32 %s1248, 128
          %s1250 = sshra.s32 %s1245, 7
          %s1251 = sand.u32 %s1245, 127
          %s1252 = sadd.s32 %s1249, %s1251
          %s1253 = sld [smem:[#allocation5 + %s1252]]
          %s1254 = smul.addr %s1253, 16
          %s1255 = scalar_lea.hbm %s1, %s1254
          %s1256 = sadd.s32 22, %s727
          %s1257 = scalar_lea.vmem [#allocation2], %s1256
          // Predicated region
          $region261: #{tpu_custom_call.1} parent=171 // pred_check
            _
          $region262: #{tpu_custom_call.1} parent=171 // pred_check_branch
            %1259 = sbr.rel target = $region264
          $region263: #{tpu_custom_call.1} parent=171 // pred_region
            %1260 = sst [smem:[#allocation12]] [#allocation121]
            %1261 = sst [smem:[#allocation13]] [#allocation120]
          $region264: #{tpu_custom_call.1} parent=171 // pred_fallthru
            _
          %1263 = shalt.err (0)
          %s1265 = sshll.u32 %s1257, 4
          %s1266 = int_to_ptr.vmem [resolvable:$true] %s1265
          %1268 = dma.hbm_to_vmem [thread:$0]  %s1255, 16, %s1266, %s729
          %s1269 = sadd.s32 %s195, 23
          %s1270 = sshra.s32 %s1269, 7
          %s1271 = sand.u32 %s1269, 127
          %s1272 = sadd.s32 %s1270, %s711
          %s1273 = smul.u32 %s1272, 128
          %s1274 = sshra.s32 %s1269, 7
          %s1275 = sand.u32 %s1269, 127
          %s1276 = sadd.s32 %s1273, %s1275
          %s1277 = sld [smem:[#allocation5 + %s1276]]
          %s1278 = smul.addr %s1277, 16
          %s1279 = scalar_lea.hbm %s1, %s1278
          %s1280 = sadd.s32 23, %s727
          %s1281 = scalar_lea.vmem [#allocation2], %s1280
          // Predicated region
          $region265: #{tpu_custom_call.1} parent=171 // pred_check
            _
          $region266: #{tpu_custom_call.1} parent=171 // pred_check_branch
            %1283 = sbr.rel target = $region268
          $region267: #{tpu_custom_call.1} parent=171 // pred_region
            %1284 = sst [smem:[#allocation12]] [#allocation123]
            %1285 = sst [smem:[#allocation13]] [#allocation122]
          $region268: #{tpu_custom_call.1} parent=171 // pred_fallthru
            _
          %1287 = shalt.err (0)
          %s1289 = sshll.u32 %s1281, 4
          %s1290 = int_to_ptr.vmem [resolvable:$true] %s1289
          %1292 = dma.hbm_to_vmem [thread:$0]  %s1279, 16, %s1290, %s729
          %s1293 = sadd.s32 %s195, 24
          %s1294 = sshra.s32 %s1293, 7
          %s1295 = sand.u32 %s1293, 127
          %s1296 = sadd.s32 %s1294, %s711
          %s1297 = smul.u32 %s1296, 128
          %s1298 = sshra.s32 %s1293, 7
          %s1299 = sand.u32 %s1293, 127
          %s1300 = sadd.s32 %s1297, %s1299
          %s1301 = sld [smem:[#allocation5 + %s1300]]
          %s1302 = smul.addr %s1301, 16
          %s1303 = scalar_lea.hbm %s1, %s1302
          %s1304 = sadd.s32 24, %s727
          %s1305 = scalar_lea.vmem [#allocation2], %s1304
          // Predicated region
          $region269: #{tpu_custom_call.1} parent=171 // pred_check
            _
          $region270: #{tpu_custom_call.1} parent=171 // pred_check_branch
            %1307 = sbr.rel target = $region272
          $region271: #{tpu_custom_call.1} parent=171 // pred_region
            %1308 = sst [smem:[#allocation12]] [#allocation125]
            %1309 = sst [smem:[#allocation13]] [#allocation124]
          $region272: #{tpu_custom_call.1} parent=171 // pred_fallthru
            _
          %1311 = shalt.err (0)
          %s1313 = sshll.u32 %s1305, 4
          %s1314 = int_to_ptr.vmem [resolvable:$true] %s1313
          %1316 = dma.hbm_to_vmem [thread:$0]  %s1303, 16, %s1314, %s729
          %s1317 = sadd.s32 %s195, 25
          %s1318 = sshra.s32 %s1317, 7
          %s1319 = sand.u32 %s1317, 127
          %s1320 = sadd.s32 %s1318, %s711
          %s1321 = smul.u32 %s1320, 128
          %s1322 = sshra.s32 %s1317, 7
          %s1323 = sand.u32 %s1317, 127
          %s1324 = sadd.s32 %s1321, %s1323
          %s1325 = sld [smem:[#allocation5 + %s1324]]
          %s1326 = smul.addr %s1325, 16
          %s1327 = scalar_lea.hbm %s1, %s1326
          %s1328 = sadd.s32 25, %s727
          %s1329 = scalar_lea.vmem [#allocation2], %s1328
          // Predicated region
          $region273: #{tpu_custom_call.1} parent=171 // pred_check
            _
          $region274: #{tpu_custom_call.1} parent=171 // pred_check_branch
            %1331 = sbr.rel target = $region276
          $region275: #{tpu_custom_call.1} parent=171 // pred_region
            %1332 = sst [smem:[#allocation12]] [#allocation127]
            %1333 = sst [smem:[#allocation13]] [#allocation126]
          $region276: #{tpu_custom_call.1} parent=171 // pred_fallthru
            _
          %1335 = shalt.err (0)
          %s1337 = sshll.u32 %s1329, 4
          %s1338 = int_to_ptr.vmem [resolvable:$true] %s1337
          %1340 = dma.hbm_to_vmem [thread:$0]  %s1327, 16, %s1338, %s729
          %s1341 = sadd.s32 %s195, 26
          %s1342 = sshra.s32 %s1341, 7
          %s1343 = sand.u32 %s1341, 127
          %s1344 = sadd.s32 %s1342, %s711
          %s1345 = smul.u32 %s1344, 128
          %s1346 = sshra.s32 %s1341, 7
          %s1347 = sand.u32 %s1341, 127
          %s1348 = sadd.s32 %s1345, %s1347
          %s1349 = sld [smem:[#allocation5 + %s1348]]
          %s1350 = smul.addr %s1349, 16
          %s1351 = scalar_lea.hbm %s1, %s1350
          %s1352 = sadd.s32 26, %s727
          %s1353 = scalar_lea.vmem [#allocation2], %s1352
          // Predicated region
          $region277: #{tpu_custom_call.1} parent=171 // pred_check
            _
          $region278: #{tpu_custom_call.1} parent=171 // pred_check_branch
            %1355 = sbr.rel target = $region280
          $region279: #{tpu_custom_call.1} parent=171 // pred_region
            %1356 = sst [smem:[#allocation12]] [#allocation129]
            %1357 = sst [smem:[#allocation13]] [#allocation128]
          $region280: #{tpu_custom_call.1} parent=171 // pred_fallthru
            _
          %1359 = shalt.err (0)
          %s1361 = sshll.u32 %s1353, 4
          %s1362 = int_to_ptr.vmem [resolvable:$true] %s1361
          %1364 = dma.hbm_to_vmem [thread:$0]  %s1351, 16, %s1362, %s729
          %s1365 = sadd.s32 %s195, 27
          %s1366 = sshra.s32 %s1365, 7
          %s1367 = sand.u32 %s1365, 127
          %s1368 = sadd.s32 %s1366, %s711
          %s1369 = smul.u32 %s1368, 128
          %s1370 = sshra.s32 %s1365, 7
          %s1371 = sand.u32 %s1365, 127
          %s1372 = sadd.s32 %s1369, %s1371
          %s1373 = sld [smem:[#allocation5 + %s1372]]
          %s1374 = smul.addr %s1373, 16
          %s1375 = scalar_lea.hbm %s1, %s1374
          %s1376 = sadd.s32 27, %s727
          %s1377 = scalar_lea.vmem [#allocation2], %s1376
          // Predicated region
          $region281: #{tpu_custom_call.1} parent=171 // pred_check
            _
          $region282: #{tpu_custom_call.1} parent=171 // pred_check_branch
            %1379 = sbr.rel target = $region284
          $region283: #{tpu_custom_call.1} parent=171 // pred_region
            %1380 = sst [smem:[#allocation12]] [#allocation131]
            %1381 = sst [smem:[#allocation13]] [#allocation130]
          $region284: #{tpu_custom_call.1} parent=171 // pred_fallthru
            _
          %1383 = shalt.err (0)
          %s1385 = sshll.u32 %s1377, 4
          %s1386 = int_to_ptr.vmem [resolvable:$true] %s1385
          %1388 = dma.hbm_to_vmem [thread:$0]  %s1375, 16, %s1386, %s729
          %s1389 = sadd.s32 %s195, 28
          %s1390 = sshra.s32 %s1389, 7
          %s1391 = sand.u32 %s1389, 127
          %s1392 = sadd.s32 %s1390, %s711
          %s1393 = smul.u32 %s1392, 128
          %s1394 = sshra.s32 %s1389, 7
          %s1395 = sand.u32 %s1389, 127
          %s1396 = sadd.s32 %s1393, %s1395
          %s1397 = sld [smem:[#allocation5 + %s1396]]
          %s1398 = smul.addr %s1397, 16
          %s1399 = scalar_lea.hbm %s1, %s1398
          %s1400 = sadd.s32 28, %s727
          %s1401 = scalar_lea.vmem [#allocation2], %s1400
          // Predicated region
          $region285: #{tpu_custom_call.1} parent=171 // pred_check
            _
          $region286: #{tpu_custom_call.1} parent=171 // pred_check_branch
            %1403 = sbr.rel target = $region288
          $region287: #{tpu_custom_call.1} parent=171 // pred_region
            %1404 = sst [smem:[#allocation12]] [#allocation133]
            %1405 = sst [smem:[#allocation13]] [#allocation132]
          $region288: #{tpu_custom_call.1} parent=171 // pred_fallthru
            _
          %1407 = shalt.err (0)
          %s1409 = sshll.u32 %s1401, 4
          %s1410 = int_to_ptr.vmem [resolvable:$true] %s1409
          %1412 = dma.hbm_to_vmem [thread:$0]  %s1399, 16, %s1410, %s729
          %s1413 = sadd.s32 %s195, 29
          %s1414 = sshra.s32 %s1413, 7
          %s1415 = sand.u32 %s1413, 127
          %s1416 = sadd.s32 %s1414, %s711
          %s1417 = smul.u32 %s1416, 128
          %s1418 = sshra.s32 %s1413, 7
          %s1419 = sand.u32 %s1413, 127
          %s1420 = sadd.s32 %s1417, %s1419
          %s1421 = sld [smem:[#allocation5 + %s1420]]
          %s1422 = smul.addr %s1421, 16
          %s1423 = scalar_lea.hbm %s1, %s1422
          %s1424 = sadd.s32 29, %s727
          %s1425 = scalar_lea.vmem [#allocation2], %s1424
          // Predicated region
          $region289: #{tpu_custom_call.1} parent=171 // pred_check
            _
          $region290: #{tpu_custom_call.1} parent=171 // pred_check_branch
            %1427 = sbr.rel target = $region292
          $region291: #{tpu_custom_call.1} parent=171 // pred_region
            %1428 = sst [smem:[#allocation12]] [#allocation135]
            %1429 = sst [smem:[#allocation13]] [#allocation134]
          $region292: #{tpu_custom_call.1} parent=171 // pred_fallthru
            _
          %1431 = shalt.err (0)
          %s1433 = sshll.u32 %s1425, 4
          %s1434 = int_to_ptr.vmem [resolvable:$true] %s1433
          %1436 = dma.hbm_to_vmem [thread:$0]  %s1423, 16, %s1434, %s729
          %s1437 = sadd.s32 %s195, 30
          %s1438 = sshra.s32 %s1437, 7
          %s1439 = sand.u32 %s1437, 127
          %s1440 = sadd.s32 %s1438, %s711
          %s1441 = smul.u32 %s1440, 128
          %s1442 = sshra.s32 %s1437, 7
          %s1443 = sand.u32 %s1437, 127
          %s1444 = sadd.s32 %s1441, %s1443
          %s1445 = sld [smem:[#allocation5 + %s1444]]
          %s1446 = smul.addr %s1445, 16
          %s1447 = scalar_lea.hbm %s1, %s1446
          %s1448 = sadd.s32 30, %s727
          %s1449 = scalar_lea.vmem [#allocation2], %s1448
          // Predicated region
          $region293: #{tpu_custom_call.1} parent=171 // pred_check
            _
          $region294: #{tpu_custom_call.1} parent=171 // pred_check_branch
            %1451 = sbr.rel target = $region296
          $region295: #{tpu_custom_call.1} parent=171 // pred_region
            %1452 = sst [smem:[#allocation12]] [#allocation137]
            %1453 = sst [smem:[#allocation13]] [#allocation136]
          $region296: #{tpu_custom_call.1} parent=171 // pred_fallthru
            _
          %1455 = shalt.err (0)
          %s1457 = sshll.u32 %s1449, 4
          %s1458 = int_to_ptr.vmem [resolvable:$true] %s1457
          %1460 = dma.hbm_to_vmem [thread:$0]  %s1447, 16, %s1458, %s729
          %s1461 = sadd.s32 %s195, 31
          %s1462 = sshra.s32 %s1461, 7
          %s1463 = sand.u32 %s1461, 127
          %s1464 = sadd.s32 %s1462, %s711
          %s1465 = smul.u32 %s1464, 128
          %s1466 = sshra.s32 %s1461, 7
          %s1467 = sand.u32 %s1461, 127
          %s1468 = sadd.s32 %s1465, %s1467
          %s1469 = sld [smem:[#allocation5 + %s1468]]
          %s1470 = smul.addr %s1469, 16
          %s1471 = scalar_lea.hbm %s1, %s1470
          %s1472 = sadd.s32 31, %s727
          %s1473 = scalar_lea.vmem [#allocation2], %s1472
          // Predicated region
          $region297: #{tpu_custom_call.1} parent=171 // pred_check
            _
          $region298: #{tpu_custom_call.1} parent=171 // pred_check_branch
            %1475 = sbr.rel target = $region300
          $region299: #{tpu_custom_call.1} parent=171 // pred_region
            %1476 = sst [smem:[#allocation12]] [#allocation139]
            %1477 = sst [smem:[#allocation13]] [#allocation138]
          $region300: #{tpu_custom_call.1} parent=171 // pred_fallthru
            _
          %1479 = shalt.err (0)
          %s1481 = sshll.u32 %s1473, 4
          %s1482 = int_to_ptr.vmem [resolvable:$true] %s1481
          %1484 = dma.hbm_to_vmem [thread:$0]  %s1471, 16, %s1482, %s729
        $region172: #{tpu_custom_call.1} parent=31 // pred_fallthru
          _
        %s1485 = sshra.s32 %s195, 7
        %s1486 = sand.u32 %s195, 127
        %s1487 = sadd.s32 %s1485, %s29
        %s1488 = smul.u32 %s1487, 128
        %s1489 = sshra.s32 %s195, 7
        %s1490 = sand.u32 %s195, 127
        %s1491 = sadd.s32 %s1488, %s1490
        %s1492 = sld [smem:[#allocation5 + %s1491]]
        %s1493 = sadd.s32 %s195, 1
        %s1494 = sshra.s32 %s1493, 7
        %s1495 = sand.u32 %s1493, 127
        %s1496 = sadd.s32 %s1494, %s29
        %s1497 = smul.u32 %s1496, 128
        %s1498 = sshra.s32 %s1493, 7
        %s1499 = sand.u32 %s1493, 127
        %s1500 = sadd.s32 %s1497, %s1499
        %s1501 = sld [smem:[#allocation5 + %s1500]]
        %s1502 = sadd.s32 %s195, 2
        %s1503 = sshra.s32 %s1502, 7
        %s1504 = sand.u32 %s1502, 127
        %s1505 = sadd.s32 %s1503, %s29
        %s1506 = smul.u32 %s1505, 128
        %s1507 = sshra.s32 %s1502, 7
        %s1508 = sand.u32 %s1502, 127
        %s1509 = sadd.s32 %s1506, %s1508
        %s1510 = sld [smem:[#allocation5 + %s1509]]
        %s1511 = sadd.s32 %s195, 3
        %s1512 = sshra.s32 %s1511, 7
        %s1513 = sand.u32 %s1511, 127
        %s1514 = sadd.s32 %s1512, %s29
        %s1515 = smul.u32 %s1514, 128
        %s1516 = sshra.s32 %s1511, 7
        %s1517 = sand.u32 %s1511, 127
        %s1518 = sadd.s32 %s1515, %s1517
        %s1519 = sld [smem:[#allocation5 + %s1518]]
        %s1520 = sadd.s32 %s195, 4
        %s1521 = sshra.s32 %s1520, 7
        %s1522 = sand.u32 %s1520, 127
        %s1523 = sadd.s32 %s1521, %s29
        %s1524 = smul.u32 %s1523, 128
        %s1525 = sshra.s32 %s1520, 7
        %s1526 = sand.u32 %s1520, 127
        %s1527 = sadd.s32 %s1524, %s1526
        %s1528 = sld [smem:[#allocation5 + %s1527]]
        %s1529 = sadd.s32 %s195, 5
        %s1530 = sshra.s32 %s1529, 7
        %s1531 = sand.u32 %s1529, 127
        %s1532 = sadd.s32 %s1530, %s29
        %s1533 = smul.u32 %s1532, 128
        %s1534 = sshra.s32 %s1529, 7
        %s1535 = sand.u32 %s1529, 127
        %s1536 = sadd.s32 %s1533, %s1535
        %s1537 = sld [smem:[#allocation5 + %s1536]]
        %s1538 = sadd.s32 %s195, 6
        %s1539 = sshra.s32 %s1538, 7
        %s1540 = sand.u32 %s1538, 127
        %s1541 = sadd.s32 %s1539, %s29
        %s1542 = smul.u32 %s1541, 128
        %s1543 = sshra.s32 %s1538, 7
        %s1544 = sand.u32 %s1538, 127
        %s1545 = sadd.s32 %s1542, %s1544
        %s1546 = sld [smem:[#allocation5 + %s1545]]
        %s1547 = sadd.s32 %s195, 7
        %s1548 = sshra.s32 %s1547, 7
        %s1549 = sand.u32 %s1547, 127
        %s1550 = sadd.s32 %s1548, %s29
        %s1551 = smul.u32 %s1550, 128
        %s1552 = sshra.s32 %s1547, 7
        %s1553 = sand.u32 %s1547, 127
        %s1554 = sadd.s32 %s1551, %s1553
        %s1555 = sld [smem:[#allocation5 + %s1554]]
        %s1556 = sadd.s32 %s195, 8
        %s1557 = sshra.s32 %s1556, 7
        %s1558 = sand.u32 %s1556, 127
        %s1559 = sadd.s32 %s1557, %s29
        %s1560 = smul.u32 %s1559, 128
        %s1561 = sshra.s32 %s1556, 7
        %s1562 = sand.u32 %s1556, 127
        %s1563 = sadd.s32 %s1560, %s1562
        %s1564 = sld [smem:[#allocation5 + %s1563]]
        %s1565 = sadd.s32 %s195, 9
        %s1566 = sshra.s32 %s1565, 7
        %s1567 = sand.u32 %s1565, 127
        %s1568 = sadd.s32 %s1566, %s29
        %s1569 = smul.u32 %s1568, 128
        %s1570 = sshra.s32 %s1565, 7
        %s1571 = sand.u32 %s1565, 127
        %s1572 = sadd.s32 %s1569, %s1571
        %s1573 = sld [smem:[#allocation5 + %s1572]]
        %s1574 = sadd.s32 %s195, 10
        %s1575 = sshra.s32 %s1574, 7
        %s1576 = sand.u32 %s1574, 127
        %s1577 = sadd.s32 %s1575, %s29
        %s1578 = smul.u32 %s1577, 128
        %s1579 = sshra.s32 %s1574, 7
        %s1580 = sand.u32 %s1574, 127
        %s1581 = sadd.s32 %s1578, %s1580
        %s1582 = sld [smem:[#allocation5 + %s1581]]
        %s1583 = sadd.s32 %s195, 11
        %s1584 = sshra.s32 %s1583, 7
        %s1585 = sand.u32 %s1583, 127
        %s1586 = sadd.s32 %s1584, %s29
        %s1587 = smul.u32 %s1586, 128
        %s1588 = sshra.s32 %s1583, 7
        %s1589 = sand.u32 %s1583, 127
        %s1590 = sadd.s32 %s1587, %s1589
        %s1591 = sld [smem:[#allocation5 + %s1590]]
        %s1592 = sadd.s32 %s195, 12
        %s1593 = sshra.s32 %s1592, 7
        %s1594 = sand.u32 %s1592, 127
        %s1595 = sadd.s32 %s1593, %s29
        %s1596 = smul.u32 %s1595, 128
        %s1597 = sshra.s32 %s1592, 7
        %s1598 = sand.u32 %s1592, 127
        %s1599 = sadd.s32 %s1596, %s1598
        %s1600 = sld [smem:[#allocation5 + %s1599]]
        %s1601 = sadd.s32 %s195, 13
        %s1602 = sshra.s32 %s1601, 7
        %s1603 = sand.u32 %s1601, 127
        %s1604 = sadd.s32 %s1602, %s29
        %s1605 = smul.u32 %s1604, 128
        %s1606 = sshra.s32 %s1601, 7
        %s1607 = sand.u32 %s1601, 127
        %s1608 = sadd.s32 %s1605, %s1607
        %s1609 = sld [smem:[#allocation5 + %s1608]]
        %s1610 = sadd.s32 %s195, 14
        %s1611 = sshra.s32 %s1610, 7
        %s1612 = sand.u32 %s1610, 127
        %s1613 = sadd.s32 %s1611, %s29
        %s1614 = smul.u32 %s1613, 128
        %s1615 = sshra.s32 %s1610, 7
        %s1616 = sand.u32 %s1610, 127
        %s1617 = sadd.s32 %s1614, %s1616
        %s1618 = sld [smem:[#allocation5 + %s1617]]
        %s1619 = sadd.s32 %s195, 15
        %s1620 = sshra.s32 %s1619, 7
        %s1621 = sand.u32 %s1619, 127
        %s1622 = sadd.s32 %s1620, %s29
        %s1623 = smul.u32 %s1622, 128
        %s1624 = sshra.s32 %s1619, 7
        %s1625 = sand.u32 %s1619, 127
        %s1626 = sadd.s32 %s1623, %s1625
        %s1627 = sld [smem:[#allocation5 + %s1626]]
        %s1628 = sadd.s32 %s195, 16
        %s1629 = sshra.s32 %s1628, 7
        %s1630 = sand.u32 %s1628, 127
        %s1631 = sadd.s32 %s1629, %s29
        %s1632 = smul.u32 %s1631, 128
        %s1633 = sshra.s32 %s1628, 7
        %s1634 = sand.u32 %s1628, 127
        %s1635 = sadd.s32 %s1632, %s1634
        %s1636 = sld [smem:[#allocation5 + %s1635]]
        %s1637 = sadd.s32 %s195, 17
        %s1638 = sshra.s32 %s1637, 7
        %s1639 = sand.u32 %s1637, 127
        %s1640 = sadd.s32 %s1638, %s29
        %s1641 = smul.u32 %s1640, 128
        %s1642 = sshra.s32 %s1637, 7
        %s1643 = sand.u32 %s1637, 127
        %s1644 = sadd.s32 %s1641, %s1643
        %s1645 = sld [smem:[#allocation5 + %s1644]]
        %s1646 = sadd.s32 %s195, 18
        %s1647 = sshra.s32 %s1646, 7
        %s1648 = sand.u32 %s1646, 127
        %s1649 = sadd.s32 %s1647, %s29
        %s1650 = smul.u32 %s1649, 128
        %s1651 = sshra.s32 %s1646, 7
        %s1652 = sand.u32 %s1646, 127
        %s1653 = sadd.s32 %s1650, %s1652
        %s1654 = sld [smem:[#allocation5 + %s1653]]
        %s1655 = sadd.s32 %s195, 19
        %s1656 = sshra.s32 %s1655, 7
        %s1657 = sand.u32 %s1655, 127
        %s1658 = sadd.s32 %s1656, %s29
        %s1659 = smul.u32 %s1658, 128
        %s1660 = sshra.s32 %s1655, 7
        %s1661 = sand.u32 %s1655, 127
        %s1662 = sadd.s32 %s1659, %s1661
        %s1663 = sld [smem:[#allocation5 + %s1662]]
        %s1664 = sadd.s32 %s195, 20
        %s1665 = sshra.s32 %s1664, 7
        %s1666 = sand.u32 %s1664, 127
        %s1667 = sadd.s32 %s1665, %s29
        %s1668 = smul.u32 %s1667, 128
        %s1669 = sshra.s32 %s1664, 7
        %s1670 = sand.u32 %s1664, 127
        %s1671 = sadd.s32 %s1668, %s1670
        %s1672 = sld [smem:[#allocation5 + %s1671]]
        %s1673 = sadd.s32 %s195, 21
        %s1674 = sshra.s32 %s1673, 7
        %s1675 = sand.u32 %s1673, 127
        %s1676 = sadd.s32 %s1674, %s29
        %s1677 = smul.u32 %s1676, 128
        %s1678 = sshra.s32 %s1673, 7
        %s1679 = sand.u32 %s1673, 127
        %s1680 = sadd.s32 %s1677, %s1679
        %s1681 = sld [smem:[#allocation5 + %s1680]]
        %s1682 = sadd.s32 %s195, 22
        %s1683 = sshra.s32 %s1682, 7
        %s1684 = sand.u32 %s1682, 127
        %s1685 = sadd.s32 %s1683, %s29
        %s1686 = smul.u32 %s1685, 128
        %s1687 = sshra.s32 %s1682, 7
        %s1688 = sand.u32 %s1682, 127
        %s1689 = sadd.s32 %s1686, %s1688
        %s1690 = sld [smem:[#allocation5 + %s1689]]
        %s1691 = sadd.s32 %s195, 23
        %s1692 = sshra.s32 %s1691, 7
        %s1693 = sand.u32 %s1691, 127
        %s1694 = sadd.s32 %s1692, %s29
        %s1695 = smul.u32 %s1694, 128
        %s1696 = sshra.s32 %s1691, 7
        %s1697 = sand.u32 %s1691, 127
        %s1698 = sadd.s32 %s1695, %s1697
        %s1699 = sld [smem:[#allocation5 + %s1698]]
        %s1700 = sadd.s32 %s195, 24
        %s1701 = sshra.s32 %s1700, 7
        %s1702 = sand.u32 %s1700, 127
        %s1703 = sadd.s32 %s1701, %s29
        %s1704 = smul.u32 %s1703, 128
        %s1705 = sshra.s32 %s1700, 7
        %s1706 = sand.u32 %s1700, 127
        %s1707 = sadd.s32 %s1704, %s1706
        %s1708 = sld [smem:[#allocation5 + %s1707]]
        %s1709 = sadd.s32 %s195, 25
        %s1710 = sshra.s32 %s1709, 7
        %s1711 = sand.u32 %s1709, 127
        %s1712 = sadd.s32 %s1710, %s29
        %s1713 = smul.u32 %s1712, 128
        %s1714 = sshra.s32 %s1709, 7
        %s1715 = sand.u32 %s1709, 127
        %s1716 = sadd.s32 %s1713, %s1715
        %s1717 = sld [smem:[#allocation5 + %s1716]]
        %s1718 = sadd.s32 %s195, 26
        %s1719 = sshra.s32 %s1718, 7
        %s1720 = sand.u32 %s1718, 127
        %s1721 = sadd.s32 %s1719, %s29
        %s1722 = smul.u32 %s1721, 128
        %s1723 = sshra.s32 %s1718, 7
        %s1724 = sand.u32 %s1718, 127
        %s1725 = sadd.s32 %s1722, %s1724
        %s1726 = sld [smem:[#allocation5 + %s1725]]
        %s1727 = sadd.s32 %s195, 27
        %s1728 = sshra.s32 %s1727, 7
        %s1729 = sand.u32 %s1727, 127
        %s1730 = sadd.s32 %s1728, %s29
        %s1731 = smul.u32 %s1730, 128
        %s1732 = sshra.s32 %s1727, 7
        %s1733 = sand.u32 %s1727, 127
        %s1734 = sadd.s32 %s1731, %s1733
        %s1735 = sld [smem:[#allocation5 + %s1734]]
        %s1736 = sadd.s32 %s195, 28
        %s1737 = sshra.s32 %s1736, 7
        %s1738 = sand.u32 %s1736, 127
        %s1739 = sadd.s32 %s1737, %s29
        %s1740 = smul.u32 %s1739, 128
        %s1741 = sshra.s32 %s1736, 7
        %s1742 = sand.u32 %s1736, 127
        %s1743 = sadd.s32 %s1740, %s1742
        %s1744 = sld [smem:[#allocation5 + %s1743]]
        %s1745 = sadd.s32 %s195, 29
        %s1746 = sshra.s32 %s1745, 7
        %s1747 = sand.u32 %s1745, 127
        %s1748 = sadd.s32 %s1746, %s29
        %s1749 = smul.u32 %s1748, 128
        %s1750 = sshra.s32 %s1745, 7
        %s1751 = sand.u32 %s1745, 127
        %s1752 = sadd.s32 %s1749, %s1751
        %s1753 = sld [smem:[#allocation5 + %s1752]]
        %s1754 = sadd.s32 %s195, 30
        %s1755 = sshra.s32 %s1754, 7
        %s1756 = sand.u32 %s1754, 127
        %s1757 = sadd.s32 %s1755, %s29
        %s1758 = smul.u32 %s1757, 128
        %s1759 = sshra.s32 %s1754, 7
        %s1760 = sand.u32 %s1754, 127
        %s1761 = sadd.s32 %s1758, %s1760
        %s1762 = sld [smem:[#allocation5 + %s1761]]
        %s1763 = sadd.s32 %s195, 31
        %s1764 = sshra.s32 %s1763, 7
        %s1765 = sand.u32 %s1763, 127
        %s1766 = sadd.s32 %s1764, %s29
        %s1767 = smul.u32 %s1766, 128
        %s1768 = sshra.s32 %s1763, 7
        %s1769 = sand.u32 %s1763, 127
        %s1770 = sadd.s32 %s1767, %s1769
        %s1771 = sld [smem:[#allocation5 + %s1770]]
        %s1772 = scalar_lea.sflag [#allocation3], %s196
        %s1773 = smul.u32 1, 1
        %s1774 = sshll.u32 %s1773, 4
        %1775 = dma.done %s1772, %s1774
        %s1776 = sshll.u32 %s1773, 4
        %1777 = dma.done %s1772, %s1776
        %s1778 = sshll.u32 %s1773, 4
        %1779 = dma.done %s1772, %s1778
        %s1780 = sshll.u32 %s1773, 4
        %1781 = dma.done %s1772, %s1780
        %s1782 = sshll.u32 %s1773, 4
        %1783 = dma.done %s1772, %s1782
        %s1784 = sshll.u32 %s1773, 4
        %1785 = dma.done %s1772, %s1784
        %s1786 = sshll.u32 %s1773, 4
        %1787 = dma.done %s1772, %s1786
        %s1788 = sshll.u32 %s1773, 4
        %1789 = dma.done %s1772, %s1788
        %s1790 = sshll.u32 %s1773, 4
        %1791 = dma.done %s1772, %s1790
        %s1792 = sshll.u32 %s1773, 4
        %1793 = dma.done %s1772, %s1792
        %s1794 = sshll.u32 %s1773, 4
        %1795 = dma.done %s1772, %s1794
        %s1796 = sshll.u32 %s1773, 4
        %1797 = dma.done %s1772, %s1796
        %s1798 = sshll.u32 %s1773, 4
        %1799 = dma.done %s1772, %s1798
        %s1800 = sshll.u32 %s1773, 4
        %1801 = dma.done %s1772, %s1800
        %s1802 = sshll.u32 %s1773, 4
        %1803 = dma.done %s1772, %s1802
        %s1804 = sshll.u32 %s1773, 4
        %1805 = dma.done %s1772, %s1804
        %s1806 = sshll.u32 %s1773, 4
        %1807 = dma.done %s1772, %s1806
        %s1808 = sshll.u32 %s1773, 4
        %1809 = dma.done %s1772, %s1808
        %s1810 = sshll.u32 %s1773, 4
        %1811 = dma.done %s1772, %s1810
        %s1812 = sshll.u32 %s1773, 4
        %1813 = dma.done %s1772, %s1812
        %s1814 = sshll.u32 %s1773, 4
        %1815 = dma.done %s1772, %s1814
        %s1816 = sshll.u32 %s1773, 4
        %1817 = dma.done %s1772, %s1816
        %s1818 = sshll.u32 %s1773, 4
        %1819 = dma.done %s1772, %s1818
        %s1820 = sshll.u32 %s1773, 4
        %1821 = dma.done %s1772, %s1820
        %s1822 = sshll.u32 %s1773, 4
        %1823 = dma.done %s1772, %s1822
        %s1824 = sshll.u32 %s1773, 4
        %1825 = dma.done %s1772, %s1824
        %s1826 = sshll.u32 %s1773, 4
        %1827 = dma.done %s1772, %s1826
        %s1828 = sshll.u32 %s1773, 4
        %1829 = dma.done %s1772, %s1828
        %s1830 = sshll.u32 %s1773, 4
        %1831 = dma.done %s1772, %s1830
        %s1832 = sshll.u32 %s1773, 4
        %1833 = dma.done %s1772, %s1832
        %s1834 = sshll.u32 %s1773, 4
        %1835 = dma.done %s1772, %s1834
        %s1836 = sshll.u32 %s1773, 4
        %1837 = dma.done %s1772, %s1836
        %s1838 = smul.u32 %s196, 32
        %s1839 = scalar_lea.vmem [#allocation2], %s1838
        %v1840 = vld [vmem:[%s1839] sm:$0xff]
        %v1841 = vld [vmem:[%s1839 + $0x8] sm:$0xff]
        %v1842 = vld [vmem:[%s1839 + $0x10] sm:$0xff]
        %v1843 = vld [vmem:[%s1839 + $0x18] sm:$0xff]
        %v1844 = vld [vmem:[#allocation6] sm:$0xff]
        %v1845 = vld [vmem:[#allocation6 + $0x8] sm:$0xff]
        %v1846 = vld [vmem:[#allocation6 + $0x10] sm:$0xff]
        %v1847 = vld [vmem:[#allocation6 + $0x18] sm:$0xff]
        %v1848 = vadd.f32 %v1840, %v1844
        %v1849 = vadd.f32 %v1841, %v1845
        %v1850 = vadd.f32 %v1842, %v1846
        %v1851 = vadd.f32 %v1843, %v1847
        %1852 = vadd.xlane.f32.xlu0 %v1848
        %v1853 = vpop.xlane.xlu0 %1852
        %1854 = vadd.xlane.f32.xlu0 %v1849
        %v1855 = vpop.xlane.xlu0 %1854
        %1856 = vadd.xlane.f32.xlu0 %v1850
        %v1857 = vpop.xlane.xlu0 %1856
        %1858 = vadd.xlane.f32.xlu0 %v1851
        %v1859 = vpop.xlane.xlu0 %1858
        %v1860 = vrcp.pop 128.0
        %v1861 = vmul.f32 %v1853, %v1860
        %v1862 = vmul.f32 %v1855, %v1860
        %v1863 = vmul.f32 %v1857, %v1860
        %v1864 = vmul.f32 %v1859, %v1860
        %v1865 = vsub.f32 %v1848, %v1861
        %v1866 = vsub.f32 %v1849, %v1862
        %v1867 = vsub.f32 %v1850, %v1863
        %v1868 = vsub.f32 %v1851, %v1864
        %v1869 = vmul.f32 %v1865, %v1865
        %v1870 = vmul.f32 %v1866, %v1866
        %v1871 = vmul.f32 %v1867, %v1867
        %v1872 = vmul.f32 %v1868, %v1868
        %1873 = vadd.xlane.f32.xlu0 %v1869
        %v1874 = vpop.xlane.xlu0 %1873
        %1875 = vadd.xlane.f32.xlu0 %v1870
        %v1876 = vpop.xlane.xlu0 %1875
        %1877 = vadd.xlane.f32.xlu0 %v1871
        %v1878 = vpop.xlane.xlu0 %1877
        %1879 = vadd.xlane.f32.xlu0 %v1872
        %v1880 = vpop.xlane.xlu0 %1879
        %v1881 = vmul.f32 %v1874, %v1860
        %v1882 = vmul.f32 %v1876, %v1860
        %v1883 = vmul.f32 %v1878, %v1860
        %v1884 = vmul.f32 %v1880, %v1860
        %v1885 = vadd.f32 %v1881, 1e-12
        %v1886 = vadd.f32 %v1882, 1e-12
        %v1887 = vadd.f32 %v1883, 1e-12
        %v1888 = vadd.f32 %v1884, 1e-12
        %v1889 = vrsqrt.pop %v1885
        %v1890 = vrsqrt.pop %v1886
        %v1891 = vrsqrt.pop %v1887
        %v1892 = vrsqrt.pop %v1888
        %v1893 = vmul.f32 %v1865, %v1889
        %v1894 = vmul.f32 %v1866, %v1890
        %v1895 = vmul.f32 %v1867, %v1891
        %v1896 = vmul.f32 %v1868, %v1892
        %v1897 = vld [vmem:[%s3] sm:$0x1]
        %v1899 = vlaneseq
        %v1900 = vshrl.u32 %v1899, 7
        %v1901 = vsub.s32 0, %v1900
        %v1902 = vrot.slane %v1897, %v1901
        %v1904 = vmul.f32 %v1902, %v1893
        %v1905 = vmul.f32 %v1902, %v1894
        %v1906 = vmul.f32 %v1902, %v1895
        %v1907 = vmul.f32 %v1902, %v1896
        %v1908 = vld [vmem:[%s4] sm:$0x1]
        %v1910 = vlaneseq
        %v1911 = vshrl.u32 %v1910, 7
        %v1912 = vsub.s32 0, %v1911
        %v1913 = vrot.slane %v1908, %v1912
        %v1915 = vadd.f32 %v1904, %v1913
        %v1916 = vadd.f32 %v1905, %v1913
        %v1917 = vadd.f32 %v1906, %v1913
        %v1918 = vadd.f32 %v1907, %v1913
        %1919 = vst [vmem:[%s191] sm:$0xff] %v1915
        %1920 = vst [vmem:[%s191 + $0x8] sm:$0xff] %v1916
        %1921 = vst [vmem:[%s191 + $0x10] sm:$0xff] %v1917
        %1922 = vst [vmem:[%s191 + $0x18] sm:$0xff] %v1918
        %s1923 = sand.u32 %s114, 1
        %s1924 = scalar_lea.sflag [#allocation8], %s1923
        %s1925 = sand.u32 %s114, 1
        %s1926 = smul.addr %s1925, 32
        %s1927 = scalar_lea.vmem [#allocation9], %s1926
        // Predicated region
        $region301: #{tpu_custom_call.1} parent=31 // pred_check
          %p1928 = pneg %p124
        $region302: #{tpu_custom_call.1} parent=31 // pred_check_branch
          %1930 = sbr.rel (%p1928) target = $region304
        $region303: #{tpu_custom_call.1} parent=31 // pred_region
          %s1931 = sadd.s32 %s29, %s28
          %s1932 = smul.u32 4, %s1931
          %s1934 = ssub.s32 512, 512
          %1935 = vsyncadd %s1924, %s1934
          %s1936 = smul.addr %s1932, 128
          %s1937 = scalar_lea.hbm %s5, %s1936
          %s1938 = sshll.u32 %s1927, 4
          %s1939 = int_to_ptr.vmem [resolvable:$true] %s1938
          %1944 = dma.vmem_to_hbm [thread:$0]  %s1939, 512, %s1937, %s1924, 128, 128, 8
        $region304: #{tpu_custom_call.1} parent=31 // pred_fallthru
          _
      $region32: #{tpu_custom_call.1} parent=5 // pred_fallthru
        _
      %p1945 = scmp.le.s32.totalorder 2, %s19
      // Predicated region
      $region305: #{tpu_custom_call.1} parent=5 // pred_check
        %p1946 = pneg %p1945
      $region306: #{tpu_custom_call.1} parent=5 // pred_check_branch
        %1948 = sbr.rel (%p1946) target = $region308
      $region307: #{tpu_custom_call.1} parent=5 // pred_region
        %s1949 = ssub.s32 %s19, 2
        // Predicated region
        $region309: #{tpu_custom_call.1} parent=307 // pred_check
          %p1950 = pneg %p130
        $region310: #{tpu_custom_call.1} parent=307 // pred_check_branch
          %1952 = sbr.rel (%p1950) target = $region312
        $region311: #{tpu_custom_call.1} parent=307 // pred_region
          %s1953 = sand.u32 %s115, 1
          %s1954 = scalar_lea.sflag [#allocation8], %s1953
          %s1955 = sand.u32 %s115, 1
          %s1956 = smul.addr %s1955, 32
          %s1957 = scalar_lea.vmem [#allocation9], %s1956
          %1958 = dma.done %s1954, 512
        $region312: #{tpu_custom_call.1} parent=307 // pred_fallthru
          _
      $region308: #{tpu_custom_call.1} parent=5 // pred_fallthru
        _
    $region6: #{tpu_custom_call.1} parent=1 // loop_footer
      %s23 = sadd.s32 1, %s19
    $region7: #{tpu_custom_call.1} parent=1 // loop_footer_branch
      %18 = sbr.rel target = $region3
    $region8: #{tpu_custom_call.1} parent=1 // loop_exit
      _
    %1959 = vsyncpa [#allocation7], 1
    %s1960 = scalar_lea.sflag [#allocation7], 1
    %1961 = vsyncpa %s1960, 1
    %1962 = vsyncpa [#allocation8], 1
    %s1963 = scalar_lea.sflag [#allocation8], 1
    %1964 = vsyncpa %s1963, 1
  %1965 = vsyncmov [#allocation3]
  %s1966 = vpop.sfrf %1965
  %p1967 = scmp.eq.s32.totalorder %s1966, 0
  %p1968 = pneg %p1967
  %1970 = shalt.err (%p1968)
  %s1971 = scalar_lea.sflag [#allocation3], 1
  %1972 = vsyncmov %s1971
  %s1973 = vpop.sfrf %1972
  %p1974 = scmp.eq.s32.totalorder %s1973, 0
  %p1975 = pneg %p1974
  %1977 = shalt.err (%p1975)

</llo_original>
